<compile_context>
chip_gen: v6e
topology: v6e:2x2x1
jax: 0.10.0
libtpu: 0.0.40
codegen_flags: <defaults>
</compile_context>

<pallas_src>
import functools

import jax
import jax.numpy as jnp
from jax import lax
from jax.experimental import pallas as pl
from jax.experimental.pallas import tpu as pltpu

GRID_SIDE = 16  # stage-4 feature map is 16x16 (as in Transformer(dim, dim, 16, 16))


# -----------------------------------------------------------------------------
# align_corners=True separable bilinear interpolation matrix [out_size, in_size]
# -----------------------------------------------------------------------------
def _bilinear_matrix(out_size, in_size):
    if in_size == 1:
        return jnp.ones((out_size, 1), jnp.float32)
    if out_size == 1:
        src = jnp.zeros((1,), jnp.float32)
    else:
        src = jnp.arange(out_size, dtype=jnp.float32) * (
            (in_size - 1) / (out_size - 1))
    lo = jnp.clip(jnp.floor(src).astype(jnp.int32), 0, in_size - 2)
    frac = src - lo.astype(jnp.float32)
    rows = jnp.arange(out_size)
    m = jnp.zeros((out_size, in_size), jnp.float32)
    m = m.at[rows, lo].add(1.0 - frac)
    m = m.at[rows, lo + 1].add(frac)
    return m


def _pick_hw_tile(hw, max_tile=2048):
    """Lane tile for the upsample output (multiple of 128 dividing hw)."""
    if hw <= max_tile:
        return hw
    for t in range(max_tile, 127, -128):
        if hw % t == 0:
            return t
    return hw


# -----------------------------------------------------------------------------
# Fused kernel. grid = (B, n_hw_tiles): the heavy per-pair math runs only at
# j == 0 (head rows cached in VMEM scratch); every j does one kron-tile matmul.
# -----------------------------------------------------------------------------
def _fused_kernel(xp_ref, projw_ref, projb_ref, attnw_ref, c4w_ref, c4b_ref,
                  neckw_ref, neckb_ref, headw_ref, headb_ref, kron_ref,
                  out_ref, h3_ref, *, n_tok):
    f32 = jnp.float32
    bf16 = jnp.bfloat16

    @pl.when(pl.program_id(1) == 0)
    def _():
        xp = xp_ref[0].astype(bf16)                       # [Cin, 2N] tokens (img a | img b)

        # --- backbone / backbone2 stage-4 projections (stubs) ----------------
        # TODO(synk): build_sam_vit_t / moat_4 not provided; patch-embed 1x1 + ReLU.
        f1 = jnp.maximum(
            jnp.dot(projw_ref[0], xp, preferred_element_type=f32) + projb_ref[0], 0.0)
        f2 = jnp.maximum(
            jnp.dot(projw_ref[1], xp, preferred_element_type=f32) + projb_ref[1], 0.0)
        f1b = f1.astype(bf16)                             # [C4, 2N]
        f2b = f2.astype(bf16)

        # --- fusion4 Q/K/V for both images at once (scale folded into Wq) ----
        q_all = jnp.dot(attnw_ref[0], f1b, preferred_element_type=f32)
        k_all = jnp.dot(attnw_ref[1], f2b, preferred_element_type=f32)
        v_all = jnp.dot(attnw_ref[2], f2b, preferred_element_type=f32)

        attn = []
        for img in range(2):                              # image a, image b of the pair
            lo, hi = img * n_tok, (img + 1) * n_tok
            # TODO(synk): exact Transformer(dim, dim, 16, 16) source not provided;
            # single-head cross-attention (Q from stream 1, K/V from stream 2).
            qT = q_all[:, lo:hi].T.astype(bf16)           # [N, C4]
            k = k_all[:, lo:hi].astype(bf16)              # [C4, N]
            v = v_all[:, lo:hi].astype(bf16)              # [C4, N]
            s = jnp.dot(qT, k, preferred_element_type=f32)          # [Nq, Nk]
            s = s - jnp.max(s, axis=-1, keepdims=True)
            p = jnp.exp(s)
            p = p * pl.reciprocal(jnp.sum(p, axis=-1, keepdims=True), approx=True)
            # attn[c, i] = sum_j v[c, j] * p[i, j]   (A @ B^T form)
            attn.append(lax.dot_general(v, p.astype(bf16), (((1,), (1,)), ((), ())),
                                        preferred_element_type=f32))
        attn_all = jnp.concatenate(attn, axis=1).astype(bf16)       # [C4, 2N]

        # --- output proj + conv4(cat([identity, fused])) + ReLU, both images --
        fused = jnp.dot(attnw_ref[3], attn_all, preferred_element_type=f32)
        g = jnp.maximum(
            jnp.dot(c4w_ref[0], f1b, preferred_element_type=f32)
            + jnp.dot(c4w_ref[1], fused.astype(bf16), preferred_element_type=f32)
            + c4b_ref[...], 0.0)                          # [C4, 2N]

        # --- neck + semantic neck (stand-ins), fused into one matmul ----------
        # TODO(synk): FPNNeck / AFPN not provided; |diff| + 1x1 conv + ReLU.
        diff = jnp.abs(g[:, :n_tok] - g[:, n_tok:]).astype(bf16)    # [C4, N]
        cc = jnp.maximum(
            jnp.dot(neckw_ref[...], diff, preferred_element_type=f32)
            + neckb_ref[...], 0.0)                        # [2P, N] = change | change_s1
        # change_s2 == change_s1 (senmantic_neck applied twice on the same feats).

        # --- heads fused (TODO(synk): FCNHead / CotSR not provided; CotSR=id) -
        h3 = (jnp.dot(headw_ref[...], cc.astype(bf16), preferred_element_type=f32)
              + headb_ref[...])                           # [3, N]: out | out1 | out2
        h3_ref[...] = h3.astype(bf16)

    # --- bilinear upsample (align_corners=True): one [3,N]@[N,t_hw] per tile --
    out_ref[0] = jnp.dot(h3_ref[...], kron_ref[...], preferred_element_type=f32)


# -----------------------------------------------------------------------------
# Parameters (same logical parameterization as the original module stand-in).
# -----------------------------------------------------------------------------
def init_params(key, inplanes=4, in_ch=3):
    c4 = inplanes * 8
    ks = jax.random.split(key, 12)

    def dense(k, fan_in, fan_out):
        return (jax.random.normal(k, (fan_in, fan_out), jnp.float32)
                * (2.0 / fan_in) ** 0.5)

    p = {}
    p["bb_w"], p["bb_b"] = dense(ks[0], in_ch, c4), jnp.zeros((c4,), jnp.float32)
    p["bb2_w"], p["bb2_b"] = dense(ks[1], in_ch, c4), jnp.zeros((c4,), jnp.float32)
    p["wq"] = dense(ks[2], c4, c4)
    p["wk"] = dense(ks[3], c4, c4)
    p["wv"] = dense(ks[4], c4, c4)
    p["wo"] = dense(ks[5], c4, c4)
    p["conv4_w"] = dense(ks[6], 2 * c4, c4)
    p["conv4_b"] = jnp.zeros((c4,), jnp.float32)
    p["neck_w"] = dense(ks[7], c4, inplanes)
    p["neck_b"] = jnp.zeros((inplanes,), jnp.float32)
    p["sneck_w"] = dense(ks[8], c4, inplanes)
    p["sneck_b"] = jnp.zeros((inplanes,), jnp.float32)
    p["head_w"] = dense(ks[9], inplanes, 1)
    p["head_b"] = jnp.zeros((1,), jnp.float32)
    p["head1_w"] = dense(ks[10], inplanes, 1)
    p["head1_b"] = jnp.zeros((1,), jnp.float32)
    p["head2_w"] = dense(ks[11], inplanes, 1)
    p["head2_b"] = jnp.zeros((1,), jnp.float32)
    return p


# -----------------------------------------------------------------------------
# One-time packing: transposed (feature-major) bf16 weight stacks + Kron matrix.
# -----------------------------------------------------------------------------
def prepare_params(p, H, W):
    bf16 = jnp.bfloat16
    c4 = p["bb_w"].shape[1]
    inpl = p["neck_w"].shape[1]
    N = GRID_SIDE * GRID_SIDE
    scale = 1.0 / (c4 ** 0.5)

    proj_wt = jnp.stack([p["bb_w"].T, p["bb2_w"].T]).astype(bf16)           # [2, C4, Cin]
    proj_b = jnp.stack([p["bb_b"], p["bb2_b"]])[:, :, None]                 # [2, C4, 1]
    attn_wt = jnp.stack([(p["wq"] * scale).T, p["wk"].T,
                         p["wv"].T, p["wo"].T]).astype(bf16)                # [4, C4, C4]
    c4_wt = jnp.stack([p["conv4_w"][:c4].T, p["conv4_w"][c4:].T]).astype(bf16)  # [2, C4, C4]
    c4_b = p["conv4_b"][:, None]                                            # [C4, 1]
    neck_wt = jnp.concatenate([p["neck_w"].T, p["sneck_w"].T], axis=0).astype(bf16)  # [2P, C4]
    neck_b = jnp.concatenate([p["neck_b"], p["sneck_b"]])[:, None]          # [2P, 1]
    head_wt = jnp.zeros((3, 2 * inpl), jnp.float32)
    head_wt = head_wt.at[0, :inpl].set(p["head_w"][:, 0])                   # out    <- change
    head_wt = head_wt.at[1, inpl:].set(p["head1_w"][:, 0])                  # out1   <- change_s1
    head_wt = head_wt.at[2, inpl:].set(p["head2_w"][:, 0])                  # out2   <- change_s2
    head_wt = head_wt.astype(bf16)                                          # [3, 2P]
    head_b = jnp.stack([p["head_b"], p["head1_b"], p["head2_b"]])           # [3, 1]

    uh = _bilinear_matrix(H, GRID_SIDE)                                     # [H, 16]
    uw = _bilinear_matrix(W, GRID_SIDE)                                     # [W, 16]
    kron = jnp.einsum("ab,cd->bdac", uh, uw).reshape(N, H * W).astype(bf16)  # [N, HW]

    return dict(proj_wt=proj_wt, proj_b=proj_b, attn_wt=attn_wt, c4_wt=c4_wt,
                c4_b=c4_b, neck_wt=neck_wt, neck_b=neck_b, head_wt=head_wt,
                head_b=head_b, kron=kron)


# -----------------------------------------------------------------------------
# Forward: mirrors ChangeDetection.forward. Inputs NCHW; outputs 3x [B,1,H,W].
# -----------------------------------------------------------------------------
def change_detection_forward(xa, xb, packed):
    assert xa.shape == xb.shape, "The two images are not the same size."
    B, Cin, H, W = xa.shape
    assert H % GRID_SIDE == 0 and W % GRID_SIDE == 0
    N = GRID_SIDE * GRID_SIDE
    HW = H * W
    c4 = packed["proj_wt"].shape[1]
    p2 = packed["neck_wt"].shape[0]          # 2 * inplanes
    t_hw = _pick_hw_tile(HW)
    n_hw = HW // t_hw

    # --- stage-4 tokens: 16x16 average pool, feature-major [B, Cin, 2N] ------
    def pool_tokens(x):
        ph, pw = H // GRID_SIDE, W // GRID_SIDE
        x = x.reshape(B, Cin, GRID_SIDE, ph, GRID_SIDE, pw).mean(axis=(3, 5))
        return x.reshape(B, Cin, N)

    xp = jnp.concatenate([pool_tokens(xa), pool_tokens(xb)], axis=2)

    kernel = functools.partial(_fused_kernel, n_tok=N)

    flops = 2 * B * (2 * Cin * c4 * 2 * N + 3 * c4 * c4 * 2 * N
                     + 2 * 2 * N * N * c4 + 3 * c4 * c4 * 2 * N
                     + p2 * c4 * N + 3 * p2 * N + 3 * N * HW)
    bytes_accessed = (xp.size * 4 + B * 3 * HW * 4
                      + sum(int(v.size) * v.dtype.itemsize for v in packed.values()))

    maps = pl.pallas_call(
        kernel,
        out_shape=jax.ShapeDtypeStruct((B, 3, HW), jnp.float32),
        grid=(B, n_hw),
        in_specs=[
            pl.BlockSpec((1, Cin, 2 * N), lambda b, j: (b, 0, 0)),    # xp tokens
            pl.BlockSpec((2, c4, Cin), lambda b, j: (0, 0, 0)),       # proj_wt
            pl.BlockSpec((2, c4, 1), lambda b, j: (0, 0, 0)),         # proj_b
            pl.BlockSpec((4, c4, c4), lambda b, j: (0, 0, 0)),        # attn_wt
            pl.BlockSpec((2, c4, c4), lambda b, j: (0, 0, 0)),        # c4_wt
            pl.BlockSpec((c4, 1), lambda b, j: (0, 0)),               # c4_b
            pl.BlockSpec((p2, c4), lambda b, j: (0, 0)),              # neck_wt
            pl.BlockSpec((p2, 1), lambda b, j: (0, 0)),               # neck_b
            pl.BlockSpec((3, p2), lambda b, j: (0, 0)),               # head_wt
            pl.BlockSpec((3, 1), lambda b, j: (0, 0)),                # head_b
            pl.BlockSpec((N, t_hw), lambda b, j: (0, j)),             # kron tile
        ],
        out_specs=pl.BlockSpec((1, 3, t_hw), lambda b, j: (b, 0, j)),
        scratch_shapes=[pltpu.VMEM((3, N), jnp.bfloat16)],            # cached head rows
        compiler_params=pltpu.CompilerParams(
            dimension_semantics=("parallel", "arbitrary")),
        cost_estimate=pl.CostEstimate(
            flops=int(flops), transcendentals=int(B * 2 * N * N),
            bytes_accessed=int(bytes_accessed)),
    )(xp, packed["proj_wt"], packed["proj_b"], packed["attn_wt"],
      packed["c4_wt"], packed["c4_b"], packed["neck_wt"], packed["neck_b"],
      packed["head_wt"], packed["head_b"], packed["kron"])

    maps = maps.reshape(B, 3, H, W)
    out, out1, out2 = maps[:, 0:1], maps[:, 1:2], maps[:, 2:3]
    # torch forward returns (out1, out2, out)
    return out1, out2, out


if __name__ == "__main__":
    key = jax.random.PRNGKey(0)
    k_a, k_b, k_p = jax.random.split(key, 3)

    B, Cin, H, W = 2, 3, 64, 64          # stage-4 grid = 16x16
    inplanes = 4                          # C4 = inplanes*8 = 32
    xa = jax.random.normal(k_a, (B, Cin, H, W), jnp.float32)
    xb = jax.random.normal(k_b, (B, Cin, H, W), jnp.float32)
    params = init_params(k_p, inplanes=inplanes, in_ch=Cin)
    packed = prepare_params(params, H, W)   # packed weights + kron built ONCE

    fwd = jax.jit(change_detection_forward)
    out1, out2, out = fwd(xa, xb, packed)
    jax.block_until_ready((out1, out2, out))

    assert out1.shape == (B, 1, H, W)
    assert out2.shape == (B, 1, H, W)
    assert out.shape == (B, 1, H, W)
    assert bool(jnp.all(jnp.isfinite(out1)))
    assert bool(jnp.all(jnp.isfinite(out2)))
    assert bool(jnp.all(jnp.isfinite(out)))
    print("KERNEL_OK")
</pallas_src>

<mosaic_0001>
module attributes {stable_mosaic.version = 11 : i64} {
  func.func @_fused_kernel(%arg0: i32, %arg1: i32, %arg2: memref<1x3x512xf32, #tpu.memory_space<vmem>>, %arg3: memref<2x32x3xbf16, #tpu.memory_space<vmem>>, %arg4: memref<2x32x1xf32, #tpu.memory_space<vmem>>, %arg5: memref<4x32x32xbf16, #tpu.memory_space<vmem>>, %arg6: memref<2x32x32xbf16, #tpu.memory_space<vmem>>, %arg7: memref<32x1xf32, #tpu.memory_space<vmem>>, %arg8: memref<8x32xbf16, #tpu.memory_space<vmem>>, %arg9: memref<8x1xf32, #tpu.memory_space<vmem>>, %arg10: memref<3x8xbf16, #tpu.memory_space<vmem>>, %arg11: memref<3x1xf32, #tpu.memory_space<vmem>>, %arg12: memref<256x2048xbf16, #tpu.memory_space<vmem>>, %arg13: memref<1x3x2048xf32, #tpu.memory_space<vmem>>, %arg14: memref<3x256xbf16, #tpu.memory_space<vmem>>) attributes {dimension_semantics = [#tpu.dimension_semantics<parallel>, #tpu.dimension_semantics<arbitrary>], iteration_bounds = array<i64: 2, 2>, scalar_prefetch = 0 : i64, scratch_operands = 1 : i64, tpu.core_type = #tpu.core_type<tc>, window_params = [{transform_indices = @transform_0, window_bounds = array<i64: 1, 3, 512>}, {pipeline_mode = #tpu.pipeline_mode<synchronous>, transform_indices = @transform_1, window_bounds = array<i64: 2, 32, 3>}, {pipeline_mode = #tpu.pipeline_mode<synchronous>, transform_indices = @transform_2, window_bounds = array<i64: 2, 32, 1>}, {pipeline_mode = #tpu.pipeline_mode<synchronous>, transform_indices = @transform_3, window_bounds = array<i64: 4, 32, 32>}, {pipeline_mode = #tpu.pipeline_mode<synchronous>, transform_indices = @transform_4, window_bounds = array<i64: 2, 32, 32>}, {pipeline_mode = #tpu.pipeline_mode<synchronous>, transform_indices = @transform_5, window_bounds = array<i64: 32, 1>}, {pipeline_mode = #tpu.pipeline_mode<synchronous>, transform_indices = @transform_6, window_bounds = array<i64: 8, 32>}, {pipeline_mode = #tpu.pipeline_mode<synchronous>, transform_indices = @transform_7, window_bounds = array<i64: 8, 1>}, {pipeline_mode = #tpu.pipeline_mode<synchronous>, transform_indices = @transform_8, window_bounds = array<i64: 3, 8>}, {pipeline_mode = #tpu.pipeline_mode<synchronous>, transform_indices = @transform_9, window_bounds = array<i64: 3, 1>}, {transform_indices = @transform_10, window_bounds = array<i64: 256, 2048>}, {transform_indices = @transform_11, window_bounds = array<i64: 1, 3, 2048>}]} {
    %c0_i32 = arith.constant 0 : i32
    %0 = arith.cmpi eq, %arg1, %c0_i32 : i32
    %1 = arith.extui %0 : i1 to i32
    %c0_i32_0 = arith.constant 0 : i32
    %2 = arith.cmpi ne, %1, %c0_i32_0 : i32
    scf.if %2 {
      %c0_7 = arith.constant 0 : index
      %c0_8 = arith.constant 0 : index
      %c0_9 = arith.constant 0 : index
      %9 = vector.load %arg2[%c0_7, %c0_8, %c0_9] : memref<1x3x512xf32, #tpu.memory_space<vmem>>, vector<1x3x512xf32>
      %10 = vector.shape_cast %9 : vector<1x3x512xf32> to vector<3x512xf32>
      %11 = arith.truncf %10 : vector<3x512xf32> to vector<3x512xbf16>
      %c0_10 = arith.constant 0 : index
      %c0_11 = arith.constant 0 : index
      %c0_12 = arith.constant 0 : index
      %12 = vector.load %arg3[%c0_10, %c0_11, %c0_12] : memref<2x32x3xbf16, #tpu.memory_space<vmem>>, vector<1x32x3xbf16>
      %13 = vector.shape_cast %12 : vector<1x32x3xbf16> to vector<32x3xbf16>
      %cst_13 = arith.constant dense<0.000000e+00> : vector<32x512xf32>
      %14 = tpu.matmul %13, %11, %cst_13 {dimension_numbers = #tpu.dot_dimension_numbers<[1], [0], [0], [1], [0, 0, 1, 1], [], []>} : vector<32x3xbf16>, vector<3x512xbf16>, vector<32x512xf32> -> vector<32x512xf32>
      %c0_14 = arith.constant 0 : index
      %c0_15 = arith.constant 0 : index
      %c0_16 = arith.constant 0 : index
      %15 = vector.load %arg4[%c0_14, %c0_15, %c0_16] : memref<2x32x1xf32, #tpu.memory_space<vmem>>, vector<1x32x1xf32>
      %16 = vector.shape_cast %15 : vector<1x32x1xf32> to vector<32x1xf32>
      %17 = vector.broadcast %16 : vector<32x1xf32> to vector<32x512xf32>
      %18 = arith.addf %14, %17 : vector<32x512xf32>
      %cst_17 = arith.constant 0.000000e+00 : f32
      %19 = vector.broadcast %cst_17 : f32 to vector<32x512xf32>
      %20 = arith.maximumf %18, %19 : vector<32x512xf32>
      %c1 = arith.constant 1 : index
      %c0_18 = arith.constant 0 : index
      %c0_19 = arith.constant 0 : index
      %21 = vector.load %arg3[%c1, %c0_18, %c0_19] : memref<2x32x3xbf16, #tpu.memory_space<vmem>>, vector<1x32x3xbf16>
      %22 = vector.shape_cast %21 : vector<1x32x3xbf16> to vector<32x3xbf16>
      %cst_20 = arith.constant dense<0.000000e+00> : vector<32x512xf32>
      %23 = tpu.matmul %22, %11, %cst_20 {dimension_numbers = #tpu.dot_dimension_numbers<[1], [0], [0], [1], [0, 0, 1, 1], [], []>} : vector<32x3xbf16>, vector<3x512xbf16>, vector<32x512xf32> -> vector<32x512xf32>
      %c1_21 = arith.constant 1 : index
      %c0_22 = arith.constant 0 : index
      %c0_23 = arith.constant 0 : index
      %24 = vector.load %arg4[%c1_21, %c0_22, %c0_23] : memref<2x32x1xf32, #tpu.memory_space<vmem>>, vector<1x32x1xf32>
      %25 = vector.shape_cast %24 : vector<1x32x1xf32> to vector<32x1xf32>
      %26 = vector.broadcast %25 : vector<32x1xf32> to vector<32x512xf32>
      %27 = arith.addf %23, %26 : vector<32x512xf32>
      %cst_24 = arith.constant 0.000000e+00 : f32
      %28 = vector.broadcast %cst_24 : f32 to vector<32x512xf32>
      %29 = arith.maximumf %27, %28 : vector<32x512xf32>
      %30 = arith.truncf %20 : vector<32x512xf32> to vector<32x512xbf16>
      %31 = arith.truncf %29 : vector<32x512xf32> to vector<32x512xbf16>
      %c0_25 = arith.constant 0 : index
      %c0_26 = arith.constant 0 : index
      %c0_27 = arith.constant 0 : index
      %32 = vector.load %arg5[%c0_25, %c0_26, %c0_27] : memref<4x32x32xbf16, #tpu.memory_space<vmem>>, vector<1x32x32xbf16>
      %33 = vector.shape_cast %32 : vector<1x32x32xbf16> to vector<32x32xbf16>
      %cst_28 = arith.constant dense<0.000000e+00> : vector<32x512xf32>
      %34 = tpu.matmul %33, %30, %cst_28 {dimension_numbers = #tpu.dot_dimension_numbers<[1], [0], [0], [1], [0, 0, 1, 1], [], []>} : vector<32x32xbf16>, vector<32x512xbf16>, vector<32x512xf32> -> vector<32x512xf32>
      %c1_29 = arith.constant 1 : index
      %c0_30 = arith.constant 0 : index
      %c0_31 = arith.constant 0 : index
      %35 = vector.load %arg5[%c1_29, %c0_30, %c0_31] : memref<4x32x32xbf16, #tpu.memory_space<vmem>>, vector<1x32x32xbf16>
      %36 = vector.shape_cast %35 : vector<1x32x32xbf16> to vector<32x32xbf16>
      %cst_32 = arith.constant dense<0.000000e+00> : vector<32x512xf32>
      %37 = tpu.matmul %36, %31, %cst_32 {dimension_numbers = #tpu.dot_dimension_numbers<[1], [0], [0], [1], [0, 0, 1, 1], [], []>} : vector<32x32xbf16>, vector<32x512xbf16>, vector<32x512xf32> -> vector<32x512xf32>
      %c2 = arith.constant 2 : index
      %c0_33 = arith.constant 0 : index
      %c0_34 = arith.constant 0 : index
      %38 = vector.load %arg5[%c2, %c0_33, %c0_34] : memref<4x32x32xbf16, #tpu.memory_space<vmem>>, vector<1x32x32xbf16>
      %39 = vector.shape_cast %38 : vector<1x32x32xbf16> to vector<32x32xbf16>
      %cst_35 = arith.constant dense<0.000000e+00> : vector<32x512xf32>
      %40 = tpu.matmul %39, %31, %cst_35 {dimension_numbers = #tpu.dot_dimension_numbers<[1], [0], [0], [1], [0, 0, 1, 1], [], []>} : vector<32x32xbf16>, vector<32x512xbf16>, vector<32x512xf32> -> vector<32x512xf32>
      %41 = vector.extract_strided_slice %34 {offsets = [0, 0], sizes = [32, 256], strides = [1, 1]} : vector<32x512xf32> to vector<32x256xf32>
      %42 = tpu.transpose %41, [1, 0] : vector<32x256xf32> -> vector<256x32xf32>
      %43 = arith.truncf %42 : vector<256x32xf32> to vector<256x32xbf16>
      %44 = vector.extract_strided_slice %37 {offsets = [0, 0], sizes = [32, 256], strides = [1, 1]} : vector<32x512xf32> to vector<32x256xf32>
      %45 = arith.truncf %44 : vector<32x256xf32> to vector<32x256xbf16>
      %46 = vector.extract_strided_slice %40 {offsets = [0, 0], sizes = [32, 256], strides = [1, 1]} : vector<32x512xf32> to vector<32x256xf32>
      %47 = arith.truncf %46 : vector<32x256xf32> to vector<32x256xbf16>
      %cst_36 = arith.constant dense<0.000000e+00> : vector<256x256xf32>
      %48 = tpu.matmul %43, %45, %cst_36 {dimension_numbers = #tpu.dot_dimension_numbers<[1], [0], [0], [1], [0, 0, 1, 1], [], []>} : vector<256x32xbf16>, vector<32x256xbf16>, vector<256x256xf32> -> vector<256x256xf32>
      %cst_37 = arith.constant dense<0xFF800000> : vector<256xf32>
      %49 = vector.multi_reduction <maximumf>, %48, %cst_37 [1] : vector<256x256xf32> to vector<256xf32>
      %50 = vector.shape_cast %49 : vector<256xf32> to vector<256x1xf32>
      %51 = vector.broadcast %50 : vector<256x1xf32> to vector<256x256xf32>
      %52 = arith.subf %48, %51 : vector<256x256xf32>
      %53 = math.exp %52 : vector<256x256xf32>
      %cst_38 = arith.constant dense<0.000000e+00> : vector<256xf32>
      %54 = vector.multi_reduction <add>, %53, %cst_38 [1] : vector<256x256xf32> to vector<256xf32>
      %55 = vector.shape_cast %54 : vector<256xf32> to vector<256x1xf32>
      %56 = tpu.reciprocal %55 {approx = true} : vector<256x1xf32> -> vector<256x1xf32>
      %57 = vector.broadcast %56 : vector<256x1xf32> to vector<256x256xf32>
      %58 = arith.mulf %53, %57 : vector<256x256xf32>
      %59 = arith.truncf %58 : vector<256x256xf32> to vector<256x256xbf16>
      %cst_39 = arith.constant dense<0.000000e+00> : vector<32x256xf32>
      %60 = tpu.matmul %47, %59, %cst_39 {dimension_numbers = #tpu.dot_dimension_numbers<[1], [1], [0], [0], [0, 0, 1, 0], [], []>} : vector<32x256xbf16>, vector<256x256xbf16>, vector<32x256xf32> -> vector<32x256xf32>
      %61 = vector.extract_strided_slice %34 {offsets = [0, 256], sizes = [32, 256], strides = [1, 1]} : vector<32x512xf32> to vector<32x256xf32>
      %62 = tpu.transpose %61, [1, 0] : vector<32x256xf32> -> vector<256x32xf32>
      %63 = arith.truncf %62 : vector<256x32xf32> to vector<256x32xbf16>
      %64 = vector.extract_strided_slice %37 {offsets = [0, 256], sizes = [32, 256], strides = [1, 1]} : vector<32x512xf32> to vector<32x256xf32>
      %65 = arith.truncf %64 : vector<32x256xf32> to vector<32x256xbf16>
      %66 = vector.extract_strided_slice %40 {offsets = [0, 256], sizes = [32, 256], strides = [1, 1]} : vector<32x512xf32> to vector<32x256xf32>
      %67 = arith.truncf %66 : vector<32x256xf32> to vector<32x256xbf16>
      %cst_40 = arith.constant dense<0.000000e+00> : vector<256x256xf32>
      %68 = tpu.matmul %63, %65, %cst_40 {dimension_numbers = #tpu.dot_dimension_numbers<[1], [0], [0], [1], [0, 0, 1, 1], [], []>} : vector<256x32xbf16>, vector<32x256xbf16>, vector<256x256xf32> -> vector<256x256xf32>
      %cst_41 = arith.constant dense<0xFF800000> : vector<256xf32>
      %69 = vector.multi_reduction <maximumf>, %68, %cst_41 [1] : vector<256x256xf32> to vector<256xf32>
      %70 = vector.shape_cast %69 : vector<256xf32> to vector<256x1xf32>
      %71 = vector.broadcast %70 : vector<256x1xf32> to vector<256x256xf32>
      %72 = arith.subf %68, %71 : vector<256x256xf32>
      %73 = math.exp %72 : vector<256x256xf32>
      %cst_42 = arith.constant dense<0.000000e+00> : vector<256xf32>
      %74 = vector.multi_reduction <add>, %73, %cst_42 [1] : vector<256x256xf32> to vector<256xf32>
      %75 = vector.shape_cast %74 : vector<256xf32> to vector<256x1xf32>
      %76 = tpu.reciprocal %75 {approx = true} : vector<256x1xf32> -> vector<256x1xf32>
      %77 = vector.broadcast %76 : vector<256x1xf32> to vector<256x256xf32>
      %78 = arith.mulf %73, %77 : vector<256x256xf32>
      %79 = arith.truncf %78 : vector<256x256xf32> to vector<256x256xbf16>
      %cst_43 = arith.constant dense<0.000000e+00> : vector<32x256xf32>
      %80 = tpu.matmul %67, %79, %cst_43 {dimension_numbers = #tpu.dot_dimension_numbers<[1], [1], [0], [0], [0, 0, 1, 0], [], []>} : vector<32x256xbf16>, vector<256x256xbf16>, vector<32x256xf32> -> vector<32x256xf32>
      %81 = tpu.concatenate %60, %80 in 1 : vector<32x256xf32>, vector<32x256xf32> -> vector<32x512xf32>
      %82 = arith.truncf %81 : vector<32x512xf32> to vector<32x512xbf16>
      %c3 = arith.constant 3 : index
      %c0_44 = arith.constant 0 : index
      %c0_45 = arith.constant 0 : index
      %83 = vector.load %arg5[%c3, %c0_44, %c0_45] : memref<4x32x32xbf16, #tpu.memory_space<vmem>>, vector<1x32x32xbf16>
      %84 = vector.shape_cast %83 : vector<1x32x32xbf16> to vector<32x32xbf16>
      %cst_46 = arith.constant dense<0.000000e+00> : vector<32x512xf32>
      %85 = tpu.matmul %84, %82, %cst_46 {dimension_numbers = #tpu.dot_dimension_numbers<[1], [0], [0], [1], [0, 0, 1, 1], [], []>} : vector<32x32xbf16>, vector<32x512xbf16>, vector<32x512xf32> -> vector<32x512xf32>
      %c0_47 = arith.constant 0 : index
      %c0_48 = arith.constant 0 : index
      %c0_49 = arith.constant 0 : index
      %86 = vector.load %arg6[%c0_47, %c0_48, %c0_49] : memref<2x32x32xbf16, #tpu.memory_space<vmem>>, vector<1x32x32xbf16>
      %87 = vector.shape_cast %86 : vector<1x32x32xbf16> to vector<32x32xbf16>
      %cst_50 = arith.constant dense<0.000000e+00> : vector<32x512xf32>
      %88 = tpu.matmul %87, %30, %cst_50 {dimension_numbers = #tpu.dot_dimension_numbers<[1], [0], [0], [1], [0, 0, 1, 1], [], []>} : vector<32x32xbf16>, vector<32x512xbf16>, vector<32x512xf32> -> vector<32x512xf32>
      %c1_51 = arith.constant 1 : index
      %c0_52 = arith.constant 0 : index
      %c0_53 = arith.constant 0 : index
      %89 = vector.load %arg6[%c1_51, %c0_52, %c0_53] : memref<2x32x32xbf16, #tpu.memory_space<vmem>>, vector<1x32x32xbf16>
      %90 = vector.shape_cast %89 : vector<1x32x32xbf16> to vector<32x32xbf16>
      %91 = arith.truncf %85 : vector<32x512xf32> to vector<32x512xbf16>
      %cst_54 = arith.constant dense<0.000000e+00> : vector<32x512xf32>
      %92 = tpu.matmul %90, %91, %cst_54 {dimension_numbers = #tpu.dot_dimension_numbers<[1], [0], [0], [1], [0, 0, 1, 1], [], []>} : vector<32x32xbf16>, vector<32x512xbf16>, vector<32x512xf32> -> vector<32x512xf32>
      %93 = arith.addf %88, %92 : vector<32x512xf32>
      %c0_55 = arith.constant 0 : index
      %c0_56 = arith.constant 0 : index
      %94 = vector.load %arg7[%c0_55, %c0_56] : memref<32x1xf32, #tpu.memory_space<vmem>>, vector<32x1xf32>
      %95 = vector.broadcast %94 : vector<32x1xf32> to vector<32x512xf32>
      %96 = arith.addf %93, %95 : vector<32x512xf32>
      %cst_57 = arith.constant 0.000000e+00 : f32
      %97 = vector.broadcast %cst_57 : f32 to vector<32x512xf32>
      %98 = arith.maximumf %96, %97 : vector<32x512xf32>
      %99 = vector.extract_strided_slice %98 {offsets = [0, 0], sizes = [32, 256], strides = [1, 1]} : vector<32x512xf32> to vector<32x256xf32>
      %100 = vector.extract_strided_slice %98 {offsets = [0, 256], sizes = [32, 256], strides = [1, 1]} : vector<32x512xf32> to vector<32x256xf32>
      %101 = arith.subf %99, %100 : vector<32x256xf32>
      %102 = math.absf %101 : vector<32x256xf32>
      %103 = arith.truncf %102 : vector<32x256xf32> to vector<32x256xbf16>
      %c0_58 = arith.constant 0 : index
      %c0_59 = arith.constant 0 : index
      %104 = vector.load %arg8[%c0_58, %c0_59] : memref<8x32xbf16, #tpu.memory_space<vmem>>, vector<8x32xbf16>
      %cst_60 = arith.constant dense<0.000000e+00> : vector<8x256xf32>
      %105 = tpu.matmul %104, %103, %cst_60 {dimension_numbers = #tpu.dot_dimension_numbers<[1], [0], [0], [1], [0, 0, 1, 1], [], []>} : vector<8x32xbf16>, vector<32x256xbf16>, vector<8x256xf32> -> vector<8x256xf32>
      %c0_61 = arith.constant 0 : index
      %c0_62 = arith.constant 0 : index
      %106 = vector.load %arg9[%c0_61, %c0_62] : memref<8x1xf32, #tpu.memory_space<vmem>>, vector<8x1xf32>
      %107 = vector.broadcast %106 : vector<8x1xf32> to vector<8x256xf32>
      %108 = arith.addf %105, %107 : vector<8x256xf32>
      %cst_63 = arith.constant 0.000000e+00 : f32
      %109 = vector.broadcast %cst_63 : f32 to vector<8x256xf32>
      %110 = arith.maximumf %108, %109 : vector<8x256xf32>
      %c0_64 = arith.constant 0 : index
      %c0_65 = arith.constant 0 : index
      %111 = vector.load %arg10[%c0_64, %c0_65] : memref<3x8xbf16, #tpu.memory_space<vmem>>, vector<3x8xbf16>
      %112 = arith.truncf %110 : vector<8x256xf32> to vector<8x256xbf16>
      %cst_66 = arith.constant dense<0.000000e+00> : vector<3x256xf32>
      %113 = tpu.matmul %111, %112, %cst_66 {dimension_numbers = #tpu.dot_dimension_numbers<[1], [0], [0], [1], [0, 0, 1, 1], [], []>} : vector<3x8xbf16>, vector<8x256xbf16>, vector<3x256xf32> -> vector<3x256xf32>
      %c0_67 = arith.constant 0 : index
      %c0_68 = arith.constant 0 : index
      %114 = vector.load %arg11[%c0_67, %c0_68] : memref<3x1xf32, #tpu.memory_space<vmem>>, vector<3x1xf32>
      %115 = vector.broadcast %114 : vector<3x1xf32> to vector<3x256xf32>
      %116 = arith.addf %113, %115 : vector<3x256xf32>
      %117 = arith.truncf %116 : vector<3x256xf32> to vector<3x256xbf16>
      %c0_69 = arith.constant 0 : index
      %c0_70 = arith.constant 0 : index
      %118 = vector.load %arg14[%c0_69, %c0_70] : memref<3x256xbf16, #tpu.memory_space<vmem>>, vector<3x256xbf16>
      tpu.vector_store %arg14[%c0_69, %c0_70], %117 {strides = array<i32>} : memref<3x256xbf16, #tpu.memory_space<vmem>>, vector<3x256xbf16>,
    } else {
    }
    %c0 = arith.constant 0 : index
    %c0_1 = arith.constant 0 : index
    %3 = vector.load %arg14[%c0, %c0_1] : memref<3x256xbf16, #tpu.memory_space<vmem>>, vector<3x256xbf16>
    %c0_2 = arith.constant 0 : index
    %c0_3 = arith.constant 0 : index
    %4 = vector.load %arg12[%c0_2, %c0_3] : memref<256x2048xbf16, #tpu.memory_space<vmem>>, vector<256x2048xbf16>
    %cst = arith.constant dense<0.000000e+00> : vector<3x2048xf32>
    %5 = tpu.matmul %3, %4, %cst {dimension_numbers = #tpu.dot_dimension_numbers<[1], [0], [0], [1], [0, 0, 1, 1], [], []>} : vector<3x256xbf16>, vector<256x2048xbf16>, vector<3x2048xf32> -> vector<3x2048xf32>
    %c0_4 = arith.constant 0 : index
    %c0_5 = arith.constant 0 : index
    %c0_6 = arith.constant 0 : index
    %6 = vector.load %arg13[%c0_4, %c0_5, %c0_6] : memref<1x3x2048xf32, #tpu.memory_space<vmem>>, vector<1x3x2048xf32>
    %7 = vector.shape_cast %6 : vector<1x3x2048xf32> to vector<3x2048xf32>
    %8 = vector.shape_cast %5 : vector<3x2048xf32> to vector<1x3x2048xf32>
    tpu.vector_store %arg13[%c0_4, %c0_5, %c0_6], %8 {strides = array<i32>} : memref<1x3x2048xf32, #tpu.memory_space<vmem>>, vector<1x3x2048xf32>,
    return
  }
  func.func @transform_0(%arg0: i32, %arg1: i32) -> (i32, i32, i32) {
    %c0_i32 = arith.constant 0 : i32
    %c0_i32_0 = arith.constant 0 : i32
    %c0_i32_1 = arith.constant 0 : i32
    return %arg0, %c0_i32, %c0_i32_0 : i32, i32, i32
  }
  func.func @transform_1(%arg0: i32, %arg1: i32) -> (i32, i32, i32) {
    %c0_i32 = arith.constant 0 : i32
    %c0_i32_0 = arith.constant 0 : i32
    %c0_i32_1 = arith.constant 0 : i32
    %c0_i32_2 = arith.constant 0 : i32
    return %c0_i32, %c0_i32_0, %c0_i32_1 : i32, i32, i32
  }
  func.func @transform_2(%arg0: i32, %arg1: i32) -> (i32, i32, i32) {
    %c0_i32 = arith.constant 0 : i32
    %c0_i32_0 = arith.constant 0 : i32
    %c0_i32_1 = arith.constant 0 : i32
    %c0_i32_2 = arith.constant 0 : i32
    return %c0_i32, %c0_i32_0, %c0_i32_1 : i32, i32, i32
  }
  func.func @transform_3(%arg0: i32, %arg1: i32) -> (i32, i32, i32) {
    %c0_i32 = arith.constant 0 : i32
    %c0_i32_0 = arith.constant 0 : i32
    %c0_i32_1 = arith.constant 0 : i32
    %c0_i32_2 = arith.constant 0 : i32
    return %c0_i32, %c0_i32_0, %c0_i32_1 : i32, i32, i32
  }
  func.func @transform_4(%arg0: i32, %arg1: i32) -> (i32, i32, i32) {
    %c0_i32 = arith.constant 0 : i32
    %c0_i32_0 = arith.constant 0 : i32
    %c0_i32_1 = arith.constant 0 : i32
    %c0_i32_2 = arith.constant 0 : i32
    return %c0_i32, %c0_i32_0, %c0_i32_1 : i32, i32, i32
  }
  func.func @transform_5(%arg0: i32, %arg1: i32) -> (i32, i32) {
    %c0_i32 = arith.constant 0 : i32
    %c0_i32_0 = arith.constant 0 : i32
    %c0_i32_1 = arith.constant 0 : i32
    return %c0_i32, %c0_i32_0 : i32, i32
  }
  func.func @transform_6(%arg0: i32, %arg1: i32) -> (i32, i32) {
    %c0_i32 = arith.constant 0 : i32
    %c0_i32_0 = arith.constant 0 : i32
    %c0_i32_1 = arith.constant 0 : i32
    return %c0_i32, %c0_i32_0 : i32, i32
  }
  func.func @transform_7(%arg0: i32, %arg1: i32) -> (i32, i32) {
    %c0_i32 = arith.constant 0 : i32
    %c0_i32_0 = arith.constant 0 : i32
    %c0_i32_1 = arith.constant 0 : i32
    return %c0_i32, %c0_i32_0 : i32, i32
  }
  func.func @transform_8(%arg0: i32, %arg1: i32) -> (i32, i32) {
    %c0_i32 = arith.constant 0 : i32
    %c0_i32_0 = arith.constant 0 : i32
    %c0_i32_1 = arith.constant 0 : i32
    return %c0_i32, %c0_i32_0 : i32, i32
  }
  func.func @transform_9(%arg0: i32, %arg1: i32) -> (i32, i32) {
    %c0_i32 = arith.constant 0 : i32
    %c0_i32_0 = arith.constant 0 : i32
    %c0_i32_1 = arith.constant 0 : i32
    return %c0_i32, %c0_i32_0 : i32, i32
  }
  func.func @transform_10(%arg0: i32, %arg1: i32) -> (i32, i32) {
    %c0_i32 = arith.constant 0 : i32
    %c0_i32_0 = arith.constant 0 : i32
    return %c0_i32, %arg1 : i32, i32
  }
  func.func @transform_11(%arg0: i32, %arg1: i32) -> (i32, i32, i32) {
    %c0_i32 = arith.constant 0 : i32
    %c0_i32_0 = arith.constant 0 : i32
    return %arg0, %c0_i32, %arg1 : i32, i32, i32
  }
}

</mosaic_0001>

<llo_original>
// kernel: change_detection_forward.1
$region0: #{change_detection_forward.1}
  #allocation0 [shape = 'u32[]', space=smem, size = 0x4, offset = 0x4, fixed_abs, tag = 'smem constant byte address 0x4 - core index']
  #allocation1 [shape = 'u32[144,128]{1,0:T(1,128)}', space=vmem, size = 0x12000, scoped, tag = 'internal scratch']
  #allocation2 [shape = 'bf16[3,256]{1,0:T(4,128)(2,1)}', space=vmem, size = 0x800, scoped, tag = 'scratch operand']
  %s0 = inlined_call_operand.vmem [shape: f32[2,3,512], index: 0, kind: input, shape index: {}]
  %s1 = inlined_call_operand.vmem [shape: bf16[2,32,3], index: 1, kind: input, shape index: {}]
  %s2 = inlined_call_operand.vmem [shape: f32[2,32,1], index: 2, kind: input, shape index: {}]
  %s3 = inlined_call_operand.vmem [shape: bf16[4,32,32], index: 3, kind: input, shape index: {}]
  %s4 = inlined_call_operand.vmem [shape: bf16[2,32,32], index: 4, kind: input, shape index: {}]
  %s5 = inlined_call_operand.vmem [shape: f32[32,1], index: 5, kind: input, shape index: {}]
  %s6 = inlined_call_operand.vmem [shape: bf16[8,32], index: 6, kind: input, shape index: {}]
  %s7 = inlined_call_operand.vmem [shape: f32[8,1], index: 7, kind: input, shape index: {}]
  %s8 = inlined_call_operand.vmem [shape: bf16[3,8], index: 8, kind: input, shape index: {}]
  %s9 = inlined_call_operand.vmem [shape: f32[3,1], index: 9, kind: input, shape index: {}]
  %s10 = inlined_call_operand.vmem [shape: bf16[256,4096], index: 10, kind: input, shape index: {}]
  %s11 = inlined_call_operand.vmem [shape: f32[2,3,4096], index: 11, kind: output, shape index: {}]
  %s12 = sld [smem:[#allocation0]]
  $region104: #{change_detection_forward.1} parent=0
    _
  %s14 = ssub.s32 1, %s12
  %s15 = scalar_select 0, %s14, %s12
  $region1: #{change_detection_forward.1} parent=0
    #allocation3 [shape = 'u8[2097152]{0}', space=vmem, size = 0x200000, scoped, tag = 'input window, operand 10']
    loop: start=0, step=1, limit=6
    $region2: #{change_detection_forward.1} parent=1 // loop_pre_header
      _
    $region3: #{change_detection_forward.1} parent=1 // loop_header
      %s17 = sphi 0, %s21
      %p18 = scmp.ge.s32.totalorder %s17, 6
      %s24 = sphi 0, %s36
      %s25 = sphi 0, %s32
      %s26 = sphi 0, %s24
      %s27 = sphi 0, %s25
      %s28 = sphi 0, %s26
      %s29 = sphi 0, %s27
      %s39 = sphi 0, %s41
      %s42 = sphi 0, %s39
      %s43 = sphi 0, %s42
      %s59 = sphi 0, %s43
      %s63 = sphi 0, %s63
      %s65 = sphi 0, %s63
      %s66 = sphi 0, %s65
      %s80 = sphi 0, %s66
      %s84 = sphi 0, %s84
      %s86 = sphi 0, %s84
      %s87 = sphi 0, %s86
      %s101 = sphi 0, %s87
      %s105 = sphi 0, %s105
      %s107 = sphi 0, %s105
      %s108 = sphi 0, %s107
      %s122 = sphi 0, %s108
      %s126 = sphi 0, %s126
      %s128 = sphi 0, %s126
      %s129 = sphi 0, %s128
      %s143 = sphi 0, %s129
      %s147 = sphi 0, %s147
      %s149 = sphi 0, %s147
      %s150 = sphi 0, %s149
      %s164 = sphi 0, %s150
      %s168 = sphi 0, %s168
      %s170 = sphi 0, %s168
      %s171 = sphi 0, %s170
      %s185 = sphi 0, %s171
      %s189 = sphi 0, %s189
      %s191 = sphi 0, %s189
      %s192 = sphi 0, %s191
      %s206 = sphi 0, %s192
      %s210 = sphi 0, %s210
      %s212 = sphi 0, %s210
      %s213 = sphi 0, %s212
      %s227 = sphi 0, %s213
      %s231 = sphi 0, %s231
      %s233 = sphi 0, %s231
      %s234 = sphi 0, %s233
      %s248 = sphi 0, %s234
      %s254 = sphi 0, %s256
      %s257 = sphi 0, %s254
      %s258 = sphi 0, %s257
      %s274 = sphi 0, %s258
      %s282 = sphi 0, %s284
      %s285 = sphi 0, %s282
      %s286 = sphi 0, %s285
      %s302 = sphi 0, %s286
    $region4: #{change_detection_forward.1} parent=1 // loop_header_branch
      %20 = sbr.rel (%p18) target = $region8
    $region5: #{change_detection_forward.1} parent=1 // loop_body
      %s22 = ssub.s32 %s17, 1
      %s23 = ssub.s32 %s17, 2
      %s30 = sadd.s32 1, %s25
      %p31 = scmp.ge.s32.totalorder %s30, 2
      %s32 = scalar_select %p31, 0, %s30
      %s33 = sadd.s32 1, %s24
      %s34 = scalar_select %p31, %s33, %s24
      %p35 = scmp.ge.s32.totalorder %s34, 2
      %s36 = scalar_select %p35, 0, %s34
      %s37 = ssub.s32 %s24, %s36
      %p38 = scmp.eq.s32.totalorder %s37, 0
      %s40 = sadd.s32 %s39, 1
      %s41 = scalar_select %p38, %s39, %s40
      %p44 = pneg %p38
      %p45 = scmp.eq.s32.totalorder %s17, 3
      %p46 = por %p44, %p45
      %p47 = scmp.ne.s32.totalorder %s39, %s42
      %p48 = scmp.eq.s32.totalorder %s17, 0
      %p49 = por %p47, %p48
      %p50 = scmp.ne.s32.totalorder %s39, %s42
      %p51 = scmp.eq.s32.totalorder %s22, 3
      %p52 = por %p50, %p51
      %p53 = scmp.ne.s32.totalorder %s42, %s43
      %p54 = scmp.eq.s32.totalorder %s22, 0
      %p55 = por %p53, %p54
      %p56 = scmp.ne.s32.totalorder %s42, %s43
      %p57 = scmp.eq.s32.totalorder %s23, 3
      %p58 = por %p56, %p57
      %p60 = scmp.ne.s32.totalorder %s43, %s59
      %p61 = scmp.eq.s32.totalorder %s23, 0
      %p62 = por %p60, %p61
      %s64 = sadd.s32 %s63, 1
      %p67 = scmp.eq.s32.totalorder %s17, 3
      %p68 = scmp.ne.s32.totalorder %s63, %s65
      %p69 = scmp.eq.s32.totalorder %s17, 0
      %p70 = por %p68, %p69
      %p71 = scmp.ne.s32.totalorder %s63, %s65
      %p72 = scmp.eq.s32.totalorder %s22, 3
      %p73 = por %p71, %p72
      %p74 = scmp.ne.s32.totalorder %s65, %s66
      %p75 = scmp.eq.s32.totalorder %s22, 0
      %p76 = por %p74, %p75
      %p77 = scmp.ne.s32.totalorder %s65, %s66
      %p78 = scmp.eq.s32.totalorder %s23, 3
      %p79 = por %p77, %p78
      %p81 = scmp.ne.s32.totalorder %s66, %s80
      %p82 = scmp.eq.s32.totalorder %s23, 0
      %p83 = por %p81, %p82
      %s85 = sadd.s32 %s84, 1
      %p88 = scmp.eq.s32.totalorder %s17, 3
      %p89 = scmp.ne.s32.totalorder %s84, %s86
      %p90 = scmp.eq.s32.totalorder %s17, 0
      %p91 = por %p89, %p90
      %p92 = scmp.ne.s32.totalorder %s84, %s86
      %p93 = scmp.eq.s32.totalorder %s22, 3
      %p94 = por %p92, %p93
      %p95 = scmp.ne.s32.totalorder %s86, %s87
      %p96 = scmp.eq.s32.totalorder %s22, 0
      %p97 = por %p95, %p96
      %p98 = scmp.ne.s32.totalorder %s86, %s87
      %p99 = scmp.eq.s32.totalorder %s23, 3
      %p100 = por %p98, %p99
      %p102 = scmp.ne.s32.totalorder %s87, %s101
      %p103 = scmp.eq.s32.totalorder %s23, 0
      %p104 = por %p102, %p103
      %s106 = sadd.s32 %s105, 1
      %p109 = scmp.eq.s32.totalorder %s17, 3
      %p110 = scmp.ne.s32.totalorder %s105, %s107
      %p111 = scmp.eq.s32.totalorder %s17, 0
      %p112 = por %p110, %p111
      %p113 = scmp.ne.s32.totalorder %s105, %s107
      %p114 = scmp.eq.s32.totalorder %s22, 3
      %p115 = por %p113, %p114
      %p116 = scmp.ne.s32.totalorder %s107, %s108
      %p117 = scmp.eq.s32.totalorder %s22, 0
      %p118 = por %p116, %p117
      %p119 = scmp.ne.s32.totalorder %s107, %s108
      %p120 = scmp.eq.s32.totalorder %s23, 3
      %p121 = por %p119, %p120
      %p123 = scmp.ne.s32.totalorder %s108, %s122
      %p124 = scmp.eq.s32.totalorder %s23, 0
      %p125 = por %p123, %p124
      %s127 = sadd.s32 %s126, 1
      %p130 = scmp.eq.s32.totalorder %s17, 3
      %p131 = scmp.ne.s32.totalorder %s126, %s128
      %p132 = scmp.eq.s32.totalorder %s17, 0
      %p133 = por %p131, %p132
      %p134 = scmp.ne.s32.totalorder %s126, %s128
      %p135 = scmp.eq.s32.totalorder %s22, 3
      %p136 = por %p134, %p135
      %p137 = scmp.ne.s32.totalorder %s128, %s129
      %p138 = scmp.eq.s32.totalorder %s22, 0
      %p139 = por %p137, %p138
      %p140 = scmp.ne.s32.totalorder %s128, %s129
      %p141 = scmp.eq.s32.totalorder %s23, 3
      %p142 = por %p140, %p141
      %p144 = scmp.ne.s32.totalorder %s129, %s143
      %p145 = scmp.eq.s32.totalorder %s23, 0
      %p146 = por %p144, %p145
      %s148 = sadd.s32 %s147, 1
      %p151 = scmp.eq.s32.totalorder %s17, 3
      %p152 = scmp.ne.s32.totalorder %s147, %s149
      %p153 = scmp.eq.s32.totalorder %s17, 0
      %p154 = por %p152, %p153
      %p155 = scmp.ne.s32.totalorder %s147, %s149
      %p156 = scmp.eq.s32.totalorder %s22, 3
      %p157 = por %p155, %p156
      %p158 = scmp.ne.s32.totalorder %s149, %s150
      %p159 = scmp.eq.s32.totalorder %s22, 0
      %p160 = por %p158, %p159
      %p161 = scmp.ne.s32.totalorder %s149, %s150
      %p162 = scmp.eq.s32.totalorder %s23, 3
      %p163 = por %p161, %p162
      %p165 = scmp.ne.s32.totalorder %s150, %s164
      %p166 = scmp.eq.s32.totalorder %s23, 0
      %p167 = por %p165, %p166
      %s169 = sadd.s32 %s168, 1
      %p172 = scmp.eq.s32.totalorder %s17, 3
      %p173 = scmp.ne.s32.totalorder %s168, %s170
      %p174 = scmp.eq.s32.totalorder %s17, 0
      %p175 = por %p173, %p174
      %p176 = scmp.ne.s32.totalorder %s168, %s170
      %p177 = scmp.eq.s32.totalorder %s22, 3
      %p178 = por %p176, %p177
      %p179 = scmp.ne.s32.totalorder %s170, %s171
      %p180 = scmp.eq.s32.totalorder %s22, 0
      %p181 = por %p179, %p180
      %p182 = scmp.ne.s32.totalorder %s170, %s171
      %p183 = scmp.eq.s32.totalorder %s23, 3
      %p184 = por %p182, %p183
      %p186 = scmp.ne.s32.totalorder %s171, %s185
      %p187 = scmp.eq.s32.totalorder %s23, 0
      %p188 = por %p186, %p187
      %s190 = sadd.s32 %s189, 1
      %p193 = scmp.eq.s32.totalorder %s17, 3
      %p194 = scmp.ne.s32.totalorder %s189, %s191
      %p195 = scmp.eq.s32.totalorder %s17, 0
      %p196 = por %p194, %p195
      %p197 = scmp.ne.s32.totalorder %s189, %s191
      %p198 = scmp.eq.s32.totalorder %s22, 3
      %p199 = por %p197, %p198
      %p200 = scmp.ne.s32.totalorder %s191, %s192
      %p201 = scmp.eq.s32.totalorder %s22, 0
      %p202 = por %p200, %p201
      %p203 = scmp.ne.s32.totalorder %s191, %s192
      %p204 = scmp.eq.s32.totalorder %s23, 3
      %p205 = por %p203, %p204
      %p207 = scmp.ne.s32.totalorder %s192, %s206
      %p208 = scmp.eq.s32.totalorder %s23, 0
      %p209 = por %p207, %p208
      %s211 = sadd.s32 %s210, 1
      %p214 = scmp.eq.s32.totalorder %s17, 3
      %p215 = scmp.ne.s32.totalorder %s210, %s212
      %p216 = scmp.eq.s32.totalorder %s17, 0
      %p217 = por %p215, %p216
      %p218 = scmp.ne.s32.totalorder %s210, %s212
      %p219 = scmp.eq.s32.totalorder %s22, 3
      %p220 = por %p218, %p219
      %p221 = scmp.ne.s32.totalorder %s212, %s213
      %p222 = scmp.eq.s32.totalorder %s22, 0
      %p223 = por %p221, %p222
      %p224 = scmp.ne.s32.totalorder %s212, %s213
      %p225 = scmp.eq.s32.totalorder %s23, 3
      %p226 = por %p224, %p225
      %p228 = scmp.ne.s32.totalorder %s213, %s227
      %p229 = scmp.eq.s32.totalorder %s23, 0
      %p230 = por %p228, %p229
      %s232 = sadd.s32 %s231, 1
      %p235 = scmp.eq.s32.totalorder %s17, 3
      %p236 = scmp.ne.s32.totalorder %s231, %s233
      %p237 = scmp.eq.s32.totalorder %s17, 0
      %p238 = por %p236, %p237
      %p239 = scmp.ne.s32.totalorder %s231, %s233
      %p240 = scmp.eq.s32.totalorder %s22, 3
      %p241 = por %p239, %p240
      %p242 = scmp.ne.s32.totalorder %s233, %s234
      %p243 = scmp.eq.s32.totalorder %s22, 0
      %p244 = por %p242, %p243
      %p245 = scmp.ne.s32.totalorder %s233, %s234
      %p246 = scmp.eq.s32.totalorder %s23, 3
      %p247 = por %p245, %p246
      %p249 = scmp.ne.s32.totalorder %s234, %s248
      %p250 = scmp.eq.s32.totalorder %s23, 0
      %p251 = por %p249, %p250
      %s252 = ssub.s32 %s25, %s32
      %p253 = scmp.eq.s32.totalorder %s252, 0
      %s255 = sadd.s32 %s254, 1
      %s256 = scalar_select %p253, %s254, %s255
      %p259 = pneg %p253
      %p260 = scmp.eq.s32.totalorder %s17, 3
      %p261 = por %p259, %p260
      %p262 = scmp.ne.s32.totalorder %s254, %s257
      %p263 = scmp.eq.s32.totalorder %s17, 0
      %p264 = por %p262, %p263
      %p265 = scmp.ne.s32.totalorder %s254, %s257
      %p266 = scmp.eq.s32.totalorder %s22, 3
      %p267 = por %p265, %p266
      %p268 = scmp.ne.s32.totalorder %s257, %s258
      %p269 = scmp.eq.s32.totalorder %s22, 0
      %p270 = por %p268, %p269
      %p271 = scmp.ne.s32.totalorder %s257, %s258
      %p272 = scmp.eq.s32.totalorder %s23, 3
      %p273 = por %p271, %p272
      %p275 = scmp.ne.s32.totalorder %s258, %s274
      %p276 = scmp.eq.s32.totalorder %s23, 0
      %p277 = por %p275, %p276
      %s278 = ssub.s32 %s24, %s36
      %s279 = ssub.s32 %s25, %s32
      %s280 = sor.u32 %s278, %s279
      %p281 = scmp.eq.s32.totalorder %s280, 0
      %s283 = sadd.s32 %s282, 1
      %s284 = scalar_select %p281, %s282, %s283
      %p287 = pneg %p281
      %p288 = scmp.eq.s32.totalorder %s17, 3
      %p289 = por %p287, %p288
      %p290 = scmp.ne.s32.totalorder %s282, %s285
      %p291 = scmp.eq.s32.totalorder %s17, 0
      %p292 = por %p290, %p291
      %p293 = scmp.ne.s32.totalorder %s282, %s285
      %p294 = scmp.eq.s32.totalorder %s22, 3
      %p295 = por %p293, %p294
      %p296 = scmp.ne.s32.totalorder %s285, %s286
      %p297 = scmp.eq.s32.totalorder %s22, 0
      %p298 = por %p296, %p297
      %p299 = scmp.ne.s32.totalorder %s285, %s286
      %p300 = scmp.eq.s32.totalorder %s23, 3
      %p301 = por %p299, %p300
      %p303 = scmp.ne.s32.totalorder %s286, %s302
      %p304 = scmp.eq.s32.totalorder %s23, 0
      %p305 = por %p303, %p304
      %p306 = scmp.le.s32.totalorder 1, %s17
      %p307 = scmp.lt.s32.totalorder %s17, 5
      %p308 = pnand %p306, %p307
      %p309 = pneg %p308
      // Predicated region
      $region9: #{change_detection_forward.1} parent=5 // pred_check
        _
      $region10: #{change_detection_forward.1} parent=5 // pred_check_branch
        %311 = sbr.rel (%p308) target = $region12
      $region11: #{change_detection_forward.1} parent=5 // pred_region
        %s312 = ssub.s32 %s17, 1
        // Predicated region
        $region13: #{change_detection_forward.1} parent=11 // pred_check
          %p313 = pneg %p76
        $region14: #{change_detection_forward.1} parent=11 // pred_check_branch
          %315 = sbr.rel (%p313) target = $region16
        $region15: #{change_detection_forward.1} parent=11 // pred_region
          _
        $region16: #{change_detection_forward.1} parent=11 // pred_fallthru
          _
        // Predicated region
        $region17: #{change_detection_forward.1} parent=11 // pred_check
          %p316 = pneg %p97
        $region18: #{change_detection_forward.1} parent=11 // pred_check_branch
          %318 = sbr.rel (%p316) target = $region20
        $region19: #{change_detection_forward.1} parent=11 // pred_region
          _
        $region20: #{change_detection_forward.1} parent=11 // pred_fallthru
          _
        // Predicated region
        $region21: #{change_detection_forward.1} parent=11 // pred_check
          %p319 = pneg %p118
        $region22: #{change_detection_forward.1} parent=11 // pred_check_branch
          %321 = sbr.rel (%p319) target = $region24
        $region23: #{change_detection_forward.1} parent=11 // pred_region
          _
        $region24: #{change_detection_forward.1} parent=11 // pred_fallthru
          _
        // Predicated region
        $region25: #{change_detection_forward.1} parent=11 // pred_check
          %p322 = pneg %p139
        $region26: #{change_detection_forward.1} parent=11 // pred_check_branch
          %324 = sbr.rel (%p322) target = $region28
        $region27: #{change_detection_forward.1} parent=11 // pred_region
          _
        $region28: #{change_detection_forward.1} parent=11 // pred_fallthru
          _
        // Predicated region
        $region29: #{change_detection_forward.1} parent=11 // pred_check
          %p325 = pneg %p160
        $region30: #{change_detection_forward.1} parent=11 // pred_check_branch
          %327 = sbr.rel (%p325) target = $region32
        $region31: #{change_detection_forward.1} parent=11 // pred_region
          _
        $region32: #{change_detection_forward.1} parent=11 // pred_fallthru
          _
        // Predicated region
        $region33: #{change_detection_forward.1} parent=11 // pred_check
          %p328 = pneg %p181
        $region34: #{change_detection_forward.1} parent=11 // pred_check_branch
          %330 = sbr.rel (%p328) target = $region36
        $region35: #{change_detection_forward.1} parent=11 // pred_region
          _
        $region36: #{change_detection_forward.1} parent=11 // pred_fallthru
          _
        // Predicated region
        $region37: #{change_detection_forward.1} parent=11 // pred_check
          %p331 = pneg %p202
        $region38: #{change_detection_forward.1} parent=11 // pred_check_branch
          %333 = sbr.rel (%p331) target = $region40
        $region39: #{change_detection_forward.1} parent=11 // pred_region
          _
        $region40: #{change_detection_forward.1} parent=11 // pred_fallthru
          _
        // Predicated region
        $region41: #{change_detection_forward.1} parent=11 // pred_check
          %p334 = pneg %p223
        $region42: #{change_detection_forward.1} parent=11 // pred_check_branch
          %336 = sbr.rel (%p334) target = $region44
        $region43: #{change_detection_forward.1} parent=11 // pred_region
          _
        $region44: #{change_detection_forward.1} parent=11 // pred_fallthru
          _
        // Predicated region
        $region45: #{change_detection_forward.1} parent=11 // pred_check
          %p337 = pneg %p244
        $region46: #{change_detection_forward.1} parent=11 // pred_check_branch
          %339 = sbr.rel (%p337) target = $region48
        $region47: #{change_detection_forward.1} parent=11 // pred_region
          _
        $region48: #{change_detection_forward.1} parent=11 // pred_fallthru
          _
      $region12: #{change_detection_forward.1} parent=5 // pred_fallthru
        _
      %p340 = scmp.lt.s32.totalorder %s17, 4
      // Predicated region
      $region49: #{change_detection_forward.1} parent=5 // pred_check
        %p341 = pneg %p340
      $region50: #{change_detection_forward.1} parent=5 // pred_check_branch
        %343 = sbr.rel (%p341) target = $region52
      $region51: #{change_detection_forward.1} parent=5 // pred_region
        // Predicated region
        $region53: #{change_detection_forward.1} parent=51 // pred_check
          %p344 = pneg %p49
        $region54: #{change_detection_forward.1} parent=51 // pred_check_branch
          %346 = sbr.rel (%p344) target = $region56
        $region55: #{change_detection_forward.1} parent=51 // pred_region
          %p347 = scmp.lt.s32.totalorder %s24, 1
          %s348 = scalar_select %p347, %s24, 1
          %s349 = smul.addr %s348, 4
          %s350 = smul.addr %s349, 4
          %s351 = scalar_lea.vmem %s0, %s350
        $region56: #{change_detection_forward.1} parent=51 // pred_fallthru
          _
        // Predicated region
        $region57: #{change_detection_forward.1} parent=51 // pred_check
          %p352 = pneg %p264
        $region58: #{change_detection_forward.1} parent=51 // pred_check_branch
          %354 = sbr.rel (%p352) target = $region60
        $region59: #{change_detection_forward.1} parent=51 // pred_region
          %s355 = sand.u32 %s254, 1
          %s356 = sand.u32 %s254, 1
          %s357 = smul.addr %s356, 2048
          %s358 = scalar_lea.vmem [#allocation3], %s357
          %s359 = smul.u32 16, %s25
          %s360 = smul.addr %s359, 4
          %s361 = scalar_lea.vmem %s10, %s360
          // Predicated region
          $region61: #{change_detection_forward.1} parent=59 // pred_check
            _
          $region62: #{change_detection_forward.1} parent=59 // pred_check_branch
            %363 = sbr.rel (0) target = $region64
          $region63: #{change_detection_forward.1} parent=59 // pred_region
            // Predicated region
            $region65: #{change_detection_forward.1} parent=63 // pred_check
              _
            $region66: #{change_detection_forward.1} parent=63 // pred_check_branch
              %365 = sbr.rel (0) target = $region68
            $region67: #{change_detection_forward.1} parent=63 // pred_region
              loop: start=0, step=1, limit=1
              $region69: #{change_detection_forward.1} parent=67 // loop_pre_header
                _
              $region70: #{change_detection_forward.1} parent=67 // loop_header
                %s367 = sphi 0, %s371
                %p368 = scmp.ge.s32.totalorder %s367, 1
                %s372 = sphi %s361, %s361
                %s373 = sphi %s358, %s358
              $region71: #{change_detection_forward.1} parent=67 // loop_header_branch
                %370 = sbr.rel (%p368) target = $region75
              $region72: #{change_detection_forward.1} parent=67 // loop_body
                %v374 = vld [vmem:[%s372] sm:$0xff]
                %375 = vst [vmem:[%s373] sm:$0xff] %v374
                %v376 = vld [vmem:[%s372 + $0x8] sm:$0xff]
                %377 = vst [vmem:[%s373 + $0x8] sm:$0xff] %v376
                %v378 = vld [vmem:[%s372 + $0x10] sm:$0xff]
                %379 = vst [vmem:[%s373 + $0x10] sm:$0xff] %v378
                %v380 = vld [vmem:[%s372 + $0x18] sm:$0xff]
                %381 = vst [vmem:[%s373 + $0x18] sm:$0xff] %v380
                %v382 = vld [vmem:[%s372 + $0x20] sm:$0xff]
                %383 = vst [vmem:[%s373 + $0x20] sm:$0xff] %v382
                %v384 = vld [vmem:[%s372 + $0x28] sm:$0xff]
                %385 = vst [vmem:[%s373 + $0x28] sm:$0xff] %v384
                %v386 = vld [vmem:[%s372 + $0x30] sm:$0xff]
                %387 = vst [vmem:[%s373 + $0x30] sm:$0xff] %v386
                %v388 = vld [vmem:[%s372 + $0x38] sm:$0xff]
                %389 = vst [vmem:[%s373 + $0x38] sm:$0xff] %v388
                %v390 = vld [vmem:[%s372 + $0x80] sm:$0xff]
                %391 = vst [vmem:[%s373 + $0x40] sm:$0xff] %v390
                %v392 = vld [vmem:[%s372 + $0x88] sm:$0xff]
                %393 = vst [vmem:[%s373 + $0x48] sm:$0xff] %v392
                %v394 = vld [vmem:[%s372 + $0x90] sm:$0xff]
                %395 = vst [vmem:[%s373 + $0x50] sm:$0xff] %v394
                %v396 = vld [vmem:[%s372 + $0x98] sm:$0xff]
                %397 = vst [vmem:[%s373 + $0x58] sm:$0xff] %v396
                %v398 = vld [vmem:[%s372 + $0xa0] sm:$0xff]
                %399 = vst [vmem:[%s373 + $0x60] sm:$0xff] %v398
                %v400 = vld [vmem:[%s372 + $0xa8] sm:$0xff]
                %401 = vst [vmem:[%s373 + $0x68] sm:$0xff] %v400
                %v402 = vld [vmem:[%s372 + $0xb0] sm:$0xff]
                %403 = vst [vmem:[%s373 + $0x70] sm:$0xff] %v402
                %v404 = vld [vmem:[%s372 + $0xb8] sm:$0xff]
                %405 = vst [vmem:[%s373 + $0x78] sm:$0xff] %v404
                %v406 = vld [vmem:[%s372 + $0x100] sm:$0xff]
                %407 = vst [vmem:[%s373 + $0x80] sm:$0xff] %v406
                %v408 = vld [vmem:[%s372 + $0x108] sm:$0xff]
                %409 = vst [vmem:[%s373 + $0x88] sm:$0xff] %v408
                %v410 = vld [vmem:[%s372 + $0x110] sm:$0xff]
                %411 = vst [vmem:[%s373 + $0x90] sm:$0xff] %v410
                %v412 = vld [vmem:[%s372 + $0x118] sm:$0xff]
                %413 = vst [vmem:[%s373 + $0x98] sm:$0xff] %v412
                %v414 = vld [vmem:[%s372 + $0x120] sm:$0xff]
                %415 = vst [vmem:[%s373 + $0xa0] sm:$0xff] %v414
                %v416 = vld [vmem:[%s372 + $0x128] sm:$0xff]
                %417 = vst [vmem:[%s373 + $0xa8] sm:$0xff] %v416
                %v418 = vld [vmem:[%s372 + $0x130] sm:$0xff]
                %419 = vst [vmem:[%s373 + $0xb0] sm:$0xff] %v418
                %v420 = vld [vmem:[%s372 + $0x138] sm:$0xff]
                %421 = vst [vmem:[%s373 + $0xb8] sm:$0xff] %v420
                %v422 = vld [vmem:[%s372 + $0x180] sm:$0xff]
                %423 = vst [vmem:[%s373 + $0xc0] sm:$0xff] %v422
                %v424 = vld [vmem:[%s372 + $0x188] sm:$0xff]
                %425 = vst [vmem:[%s373 + $0xc8] sm:$0xff] %v424
                %v426 = vld [vmem:[%s372 + $0x190] sm:$0xff]
                %427 = vst [vmem:[%s373 + $0xd0] sm:$0xff] %v426
                %v428 = vld [vmem:[%s372 + $0x198] sm:$0xff]
                %429 = vst [vmem:[%s373 + $0xd8] sm:$0xff] %v428
                %v430 = vld [vmem:[%s372 + $0x1a0] sm:$0xff]
                %431 = vst [vmem:[%s373 + $0xe0] sm:$0xff] %v430
                %v432 = vld [vmem:[%s372 + $0x1a8] sm:$0xff]
                %433 = vst [vmem:[%s373 + $0xe8] sm:$0xff] %v432
                %v434 = vld [vmem:[%s372 + $0x1b0] sm:$0xff]
                %435 = vst [vmem:[%s373 + $0xf0] sm:$0xff] %v434
                %v436 = vld [vmem:[%s372 + $0x1b8] sm:$0xff]
                %437 = vst [vmem:[%s373 + $0xf8] sm:$0xff] %v436
                %v438 = vld [vmem:[%s372 + $0x200] sm:$0xff]
                %439 = vst [vmem:[%s373 + $0x100] sm:$0xff] %v438
                %v440 = vld [vmem:[%s372 + $0x208] sm:$0xff]
                %441 = vst [vmem:[%s373 + $0x108] sm:$0xff] %v440
                %v442 = vld [vmem:[%s372 + $0x210] sm:$0xff]
                %443 = vst [vmem:[%s373 + $0x110] sm:$0xff] %v442
                %v444 = vld [vmem:[%s372 + $0x218] sm:$0xff]
                %445 = vst [vmem:[%s373 + $0x118] sm:$0xff] %v444
                %v446 = vld [vmem:[%s372 + $0x220] sm:$0xff]
                %447 = vst [vmem:[%s373 + $0x120] sm:$0xff] %v446
                %v448 = vld [vmem:[%s372 + $0x228] sm:$0xff]
                %449 = vst [vmem:[%s373 + $0x128] sm:$0xff] %v448
                %v450 = vld [vmem:[%s372 + $0x230] sm:$0xff]
                %451 = vst [vmem:[%s373 + $0x130] sm:$0xff] %v450
                %v452 = vld [vmem:[%s372 + $0x238] sm:$0xff]
                %453 = vst [vmem:[%s373 + $0x138] sm:$0xff] %v452
                %v454 = vld [vmem:[%s372 + $0x280] sm:$0xff]
                %455 = vst [vmem:[%s373 + $0x140] sm:$0xff] %v454
                %v456 = vld [vmem:[%s372 + $0x288] sm:$0xff]
                %457 = vst [vmem:[%s373 + $0x148] sm:$0xff] %v456
                %v458 = vld [vmem:[%s372 + $0x290] sm:$0xff]
                %459 = vst [vmem:[%s373 + $0x150] sm:$0xff] %v458
                %v460 = vld [vmem:[%s372 + $0x298] sm:$0xff]
                %461 = vst [vmem:[%s373 + $0x158] sm:$0xff] %v460
                %v462 = vld [vmem:[%s372 + $0x2a0] sm:$0xff]
                %463 = vst [vmem:[%s373 + $0x160] sm:$0xff] %v462
                %v464 = vld [vmem:[%s372 + $0x2a8] sm:$0xff]
                %465 = vst [vmem:[%s373 + $0x168] sm:$0xff] %v464
                %v466 = vld [vmem:[%s372 + $0x2b0] sm:$0xff]
                %467 = vst [vmem:[%s373 + $0x170] sm:$0xff] %v466
                %v468 = vld [vmem:[%s372 + $0x2b8] sm:$0xff]
                %469 = vst [vmem:[%s373 + $0x178] sm:$0xff] %v468
                %v470 = vld [vmem:[%s372 + $0x300] sm:$0xff]
                %471 = vst [vmem:[%s373 + $0x180] sm:$0xff] %v470
                %v472 = vld [vmem:[%s372 + $0x308] sm:$0xff]
                %473 = vst [vmem:[%s373 + $0x188] sm:$0xff] %v472
                %v474 = vld [vmem:[%s372 + $0x310] sm:$0xff]
                %475 = vst [vmem:[%s373 + $0x190] sm:$0xff] %v474
                %v476 = vld [vmem:[%s372 + $0x318] sm:$0xff]
                %477 = vst [vmem:[%s373 + $0x198] sm:$0xff] %v476
                %v478 = vld [vmem:[%s372 + $0x320] sm:$0xff]
                %479 = vst [vmem:[%s373 + $0x1a0] sm:$0xff] %v478
                %v480 = vld [vmem:[%s372 + $0x328] sm:$0xff]
                %481 = vst [vmem:[%s373 + $0x1a8] sm:$0xff] %v480
                %v482 = vld [vmem:[%s372 + $0x330] sm:$0xff]
                %483 = vst [vmem:[%s373 + $0x1b0] sm:$0xff] %v482
                %v484 = vld [vmem:[%s372 + $0x338] sm:$0xff]
                %485 = vst [vmem:[%s373 + $0x1b8] sm:$0xff] %v484
                %v486 = vld [vmem:[%s372 + $0x380] sm:$0xff]
                %487 = vst [vmem:[%s373 + $0x1c0] sm:$0xff] %v486
                %v488 = vld [vmem:[%s372 + $0x388] sm:$0xff]
                %489 = vst [vmem:[%s373 + $0x1c8] sm:$0xff] %v488
                %v490 = vld [vmem:[%s372 + $0x390] sm:$0xff]
                %491 = vst [vmem:[%s373 + $0x1d0] sm:$0xff] %v490
                %v492 = vld [vmem:[%s372 + $0x398] sm:$0xff]
                %493 = vst [vmem:[%s373 + $0x1d8] sm:$0xff] %v492
                %v494 = vld [vmem:[%s372 + $0x3a0] sm:$0xff]
                %495 = vst [vmem:[%s373 + $0x1e0] sm:$0xff] %v494
                %v496 = vld [vmem:[%s372 + $0x3a8] sm:$0xff]
                %497 = vst [vmem:[%s373 + $0x1e8] sm:$0xff] %v496
                %v498 = vld [vmem:[%s372 + $0x3b0] sm:$0xff]
                %499 = vst [vmem:[%s373 + $0x1f0] sm:$0xff] %v498
                %v500 = vld [vmem:[%s372 + $0x3b8] sm:$0xff]
                %501 = vst [vmem:[%s373 + $0x1f8] sm:$0xff] %v500
                %v502 = vld [vmem:[%s372 + $0x400] sm:$0xff]
                %503 = vst [vmem:[%s373 + $0x200] sm:$0xff] %v502
                %v504 = vld [vmem:[%s372 + $0x408] sm:$0xff]
                %505 = vst [vmem:[%s373 + $0x208] sm:$0xff] %v504
                %v506 = vld [vmem:[%s372 + $0x410] sm:$0xff]
                %507 = vst [vmem:[%s373 + $0x210] sm:$0xff] %v506
                %v508 = vld [vmem:[%s372 + $0x418] sm:$0xff]
                %509 = vst [vmem:[%s373 + $0x218] sm:$0xff] %v508
                %v510 = vld [vmem:[%s372 + $0x420] sm:$0xff]
                %511 = vst [vmem:[%s373 + $0x220] sm:$0xff] %v510
                %v512 = vld [vmem:[%s372 + $0x428] sm:$0xff]
                %513 = vst [vmem:[%s373 + $0x228] sm:$0xff] %v512
                %v514 = vld [vmem:[%s372 + $0x430] sm:$0xff]
                %515 = vst [vmem:[%s373 + $0x230] sm:$0xff] %v514
                %v516 = vld [vmem:[%s372 + $0x438] sm:$0xff]
                %517 = vst [vmem:[%s373 + $0x238] sm:$0xff] %v516
                %v518 = vld [vmem:[%s372 + $0x480] sm:$0xff]
                %519 = vst [vmem:[%s373 + $0x240] sm:$0xff] %v518
                %v520 = vld [vmem:[%s372 + $0x488] sm:$0xff]
                %521 = vst [vmem:[%s373 + $0x248] sm:$0xff] %v520
                %v522 = vld [vmem:[%s372 + $0x490] sm:$0xff]
                %523 = vst [vmem:[%s373 + $0x250] sm:$0xff] %v522
                %v524 = vld [vmem:[%s372 + $0x498] sm:$0xff]
                %525 = vst [vmem:[%s373 + $0x258] sm:$0xff] %v524
                %v526 = vld [vmem:[%s372 + $0x4a0] sm:$0xff]
                %527 = vst [vmem:[%s373 + $0x260] sm:$0xff] %v526
                %v528 = vld [vmem:[%s372 + $0x4a8] sm:$0xff]
                %529 = vst [vmem:[%s373 + $0x268] sm:$0xff] %v528
                %v530 = vld [vmem:[%s372 + $0x4b0] sm:$0xff]
                %531 = vst [vmem:[%s373 + $0x270] sm:$0xff] %v530
                %v532 = vld [vmem:[%s372 + $0x4b8] sm:$0xff]
                %533 = vst [vmem:[%s373 + $0x278] sm:$0xff] %v532
                %v534 = vld [vmem:[%s372 + $0x500] sm:$0xff]
                %535 = vst [vmem:[%s373 + $0x280] sm:$0xff] %v534
                %v536 = vld [vmem:[%s372 + $0x508] sm:$0xff]
                %537 = vst [vmem:[%s373 + $0x288] sm:$0xff] %v536
                %v538 = vld [vmem:[%s372 + $0x510] sm:$0xff]
                %539 = vst [vmem:[%s373 + $0x290] sm:$0xff] %v538
                %v540 = vld [vmem:[%s372 + $0x518] sm:$0xff]
                %541 = vst [vmem:[%s373 + $0x298] sm:$0xff] %v540
                %v542 = vld [vmem:[%s372 + $0x520] sm:$0xff]
                %543 = vst [vmem:[%s373 + $0x2a0] sm:$0xff] %v542
                %v544 = vld [vmem:[%s372 + $0x528] sm:$0xff]
                %545 = vst [vmem:[%s373 + $0x2a8] sm:$0xff] %v544
                %v546 = vld [vmem:[%s372 + $0x530] sm:$0xff]
                %547 = vst [vmem:[%s373 + $0x2b0] sm:$0xff] %v546
                %v548 = vld [vmem:[%s372 + $0x538] sm:$0xff]
                %549 = vst [vmem:[%s373 + $0x2b8] sm:$0xff] %v548
                %v550 = vld [vmem:[%s372 + $0x580] sm:$0xff]
                %551 = vst [vmem:[%s373 + $0x2c0] sm:$0xff] %v550
                %v552 = vld [vmem:[%s372 + $0x588] sm:$0xff]
                %553 = vst [vmem:[%s373 + $0x2c8] sm:$0xff] %v552
                %v554 = vld [vmem:[%s372 + $0x590] sm:$0xff]
                %555 = vst [vmem:[%s373 + $0x2d0] sm:$0xff] %v554
                %v556 = vld [vmem:[%s372 + $0x598] sm:$0xff]
                %557 = vst [vmem:[%s373 + $0x2d8] sm:$0xff] %v556
                %v558 = vld [vmem:[%s372 + $0x5a0] sm:$0xff]
                %559 = vst [vmem:[%s373 + $0x2e0] sm:$0xff] %v558
                %v560 = vld [vmem:[%s372 + $0x5a8] sm:$0xff]
                %561 = vst [vmem:[%s373 + $0x2e8] sm:$0xff] %v560
                %v562 = vld [vmem:[%s372 + $0x5b0] sm:$0xff]
                %563 = vst [vmem:[%s373 + $0x2f0] sm:$0xff] %v562
                %v564 = vld [vmem:[%s372 + $0x5b8] sm:$0xff]
                %565 = vst [vmem:[%s373 + $0x2f8] sm:$0xff] %v564
                %v566 = vld [vmem:[%s372 + $0x600] sm:$0xff]
                %567 = vst [vmem:[%s373 + $0x300] sm:$0xff] %v566
                %v568 = vld [vmem:[%s372 + $0x608] sm:$0xff]
                %569 = vst [vmem:[%s373 + $0x308] sm:$0xff] %v568
                %v570 = vld [vmem:[%s372 + $0x610] sm:$0xff]
                %571 = vst [vmem:[%s373 + $0x310] sm:$0xff] %v570
                %v572 = vld [vmem:[%s372 + $0x618] sm:$0xff]
                %573 = vst [vmem:[%s373 + $0x318] sm:$0xff] %v572
                %v574 = vld [vmem:[%s372 + $0x620] sm:$0xff]
                %575 = vst [vmem:[%s373 + $0x320] sm:$0xff] %v574
                %v576 = vld [vmem:[%s372 + $0x628] sm:$0xff]
                %577 = vst [vmem:[%s373 + $0x328] sm:$0xff] %v576
                %v578 = vld [vmem:[%s372 + $0x630] sm:$0xff]
                %579 = vst [vmem:[%s373 + $0x330] sm:$0xff] %v578
                %v580 = vld [vmem:[%s372 + $0x638] sm:$0xff]
                %581 = vst [vmem:[%s373 + $0x338] sm:$0xff] %v580
                %v582 = vld [vmem:[%s372 + $0x680] sm:$0xff]
                %583 = vst [vmem:[%s373 + $0x340] sm:$0xff] %v582
                %v584 = vld [vmem:[%s372 + $0x688] sm:$0xff]
                %585 = vst [vmem:[%s373 + $0x348] sm:$0xff] %v584
                %v586 = vld [vmem:[%s372 + $0x690] sm:$0xff]
                %587 = vst [vmem:[%s373 + $0x350] sm:$0xff] %v586
                %v588 = vld [vmem:[%s372 + $0x698] sm:$0xff]
                %589 = vst [vmem:[%s373 + $0x358] sm:$0xff] %v588
                %v590 = vld [vmem:[%s372 + $0x6a0] sm:$0xff]
                %591 = vst [vmem:[%s373 + $0x360] sm:$0xff] %v590
                %v592 = vld [vmem:[%s372 + $0x6a8] sm:$0xff]
                %593 = vst [vmem:[%s373 + $0x368] sm:$0xff] %v592
                %v594 = vld [vmem:[%s372 + $0x6b0] sm:$0xff]
                %595 = vst [vmem:[%s373 + $0x370] sm:$0xff] %v594
                %v596 = vld [vmem:[%s372 + $0x6b8] sm:$0xff]
                %597 = vst [vmem:[%s373 + $0x378] sm:$0xff] %v596
                %v598 = vld [vmem:[%s372 + $0x700] sm:$0xff]
                %599 = vst [vmem:[%s373 + $0x380] sm:$0xff] %v598
                %v600 = vld [vmem:[%s372 + $0x708] sm:$0xff]
                %601 = vst [vmem:[%s373 + $0x388] sm:$0xff] %v600
                %v602 = vld [vmem:[%s372 + $0x710] sm:$0xff]
                %603 = vst [vmem:[%s373 + $0x390] sm:$0xff] %v602
                %v604 = vld [vmem:[%s372 + $0x718] sm:$0xff]
                %605 = vst [vmem:[%s373 + $0x398] sm:$0xff] %v604
                %v606 = vld [vmem:[%s372 + $0x720] sm:$0xff]
                %607 = vst [vmem:[%s373 + $0x3a0] sm:$0xff] %v606
                %v608 = vld [vmem:[%s372 + $0x728] sm:$0xff]
                %609 = vst [vmem:[%s373 + $0x3a8] sm:$0xff] %v608
                %v610 = vld [vmem:[%s372 + $0x730] sm:$0xff]
                %611 = vst [vmem:[%s373 + $0x3b0] sm:$0xff] %v610
                %v612 = vld [vmem:[%s372 + $0x738] sm:$0xff]
                %613 = vst [vmem:[%s373 + $0x3b8] sm:$0xff] %v612
                %v614 = vld [vmem:[%s372 + $0x780] sm:$0xff]
                %615 = vst [vmem:[%s373 + $0x3c0] sm:$0xff] %v614
                %v616 = vld [vmem:[%s372 + $0x788] sm:$0xff]
                %617 = vst [vmem:[%s373 + $0x3c8] sm:$0xff] %v616
                %v618 = vld [vmem:[%s372 + $0x790] sm:$0xff]
                %619 = vst [vmem:[%s373 + $0x3d0] sm:$0xff] %v618
                %v620 = vld [vmem:[%s372 + $0x798] sm:$0xff]
                %621 = vst [vmem:[%s373 + $0x3d8] sm:$0xff] %v620
                %v622 = vld [vmem:[%s372 + $0x7a0] sm:$0xff]
                %623 = vst [vmem:[%s373 + $0x3e0] sm:$0xff] %v622
                %v624 = vld [vmem:[%s372 + $0x7a8] sm:$0xff]
                %625 = vst [vmem:[%s373 + $0x3e8] sm:$0xff] %v624
                %v626 = vld [vmem:[%s372 + $0x7b0] sm:$0xff]
                %627 = vst [vmem:[%s373 + $0x3f0] sm:$0xff] %v626
                %v628 = vld [vmem:[%s372 + $0x7b8] sm:$0xff]
                %629 = vst [vmem:[%s373 + $0x3f8] sm:$0xff] %v628
                %v630 = vld [vmem:[%s372 + $0x800] sm:$0xff]
                %631 = vst [vmem:[%s373 + $0x400] sm:$0xff] %v630
                %v632 = vld [vmem:[%s372 + $0x808] sm:$0xff]
                %633 = vst [vmem:[%s373 + $0x408] sm:$0xff] %v632
                %v634 = vld [vmem:[%s372 + $0x810] sm:$0xff]
                %635 = vst [vmem:[%s373 + $0x410] sm:$0xff] %v634
                %v636 = vld [vmem:[%s372 + $0x818] sm:$0xff]
                %637 = vst [vmem:[%s373 + $0x418] sm:$0xff] %v636
                %v638 = vld [vmem:[%s372 + $0x820] sm:$0xff]
                %639 = vst [vmem:[%s373 + $0x420] sm:$0xff] %v638
                %v640 = vld [vmem:[%s372 + $0x828] sm:$0xff]
                %641 = vst [vmem:[%s373 + $0x428] sm:$0xff] %v640
                %v642 = vld [vmem:[%s372 + $0x830] sm:$0xff]
                %643 = vst [vmem:[%s373 + $0x430] sm:$0xff] %v642
                %v644 = vld [vmem:[%s372 + $0x838] sm:$0xff]
                %645 = vst [vmem:[%s373 + $0x438] sm:$0xff] %v644
                %v646 = vld [vmem:[%s372 + $0x880] sm:$0xff]
                %647 = vst [vmem:[%s373 + $0x440] sm:$0xff] %v646
                %v648 = vld [vmem:[%s372 + $0x888] sm:$0xff]
                %649 = vst [vmem:[%s373 + $0x448] sm:$0xff] %v648
                %v650 = vld [vmem:[%s372 + $0x890] sm:$0xff]
                %651 = vst [vmem:[%s373 + $0x450] sm:$0xff] %v650
                %v652 = vld [vmem:[%s372 + $0x898] sm:$0xff]
                %653 = vst [vmem:[%s373 + $0x458] sm:$0xff] %v652
                %v654 = vld [vmem:[%s372 + $0x8a0] sm:$0xff]
                %655 = vst [vmem:[%s373 + $0x460] sm:$0xff] %v654
                %v656 = vld [vmem:[%s372 + $0x8a8] sm:$0xff]
                %657 = vst [vmem:[%s373 + $0x468] sm:$0xff] %v656
                %v658 = vld [vmem:[%s372 + $0x8b0] sm:$0xff]
                %659 = vst [vmem:[%s373 + $0x470] sm:$0xff] %v658
                %v660 = vld [vmem:[%s372 + $0x8b8] sm:$0xff]
                %661 = vst [vmem:[%s373 + $0x478] sm:$0xff] %v660
                %v662 = vld [vmem:[%s372 + $0x900] sm:$0xff]
                %663 = vst [vmem:[%s373 + $0x480] sm:$0xff] %v662
                %v664 = vld [vmem:[%s372 + $0x908] sm:$0xff]
                %665 = vst [vmem:[%s373 + $0x488] sm:$0xff] %v664
                %v666 = vld [vmem:[%s372 + $0x910] sm:$0xff]
                %667 = vst [vmem:[%s373 + $0x490] sm:$0xff] %v666
                %v668 = vld [vmem:[%s372 + $0x918] sm:$0xff]
                %669 = vst [vmem:[%s373 + $0x498] sm:$0xff] %v668
                %v670 = vld [vmem:[%s372 + $0x920] sm:$0xff]
                %671 = vst [vmem:[%s373 + $0x4a0] sm:$0xff] %v670
                %v672 = vld [vmem:[%s372 + $0x928] sm:$0xff]
                %673 = vst [vmem:[%s373 + $0x4a8] sm:$0xff] %v672
                %v674 = vld [vmem:[%s372 + $0x930] sm:$0xff]
                %675 = vst [vmem:[%s373 + $0x4b0] sm:$0xff] %v674
                %v676 = vld [vmem:[%s372 + $0x938] sm:$0xff]
                %677 = vst [vmem:[%s373 + $0x4b8] sm:$0xff] %v676
                %v678 = vld [vmem:[%s372 + $0x980] sm:$0xff]
                %679 = vst [vmem:[%s373 + $0x4c0] sm:$0xff] %v678
                %v680 = vld [vmem:[%s372 + $0x988] sm:$0xff]
                %681 = vst [vmem:[%s373 + $0x4c8] sm:$0xff] %v680
                %v682 = vld [vmem:[%s372 + $0x990] sm:$0xff]
                %683 = vst [vmem:[%s373 + $0x4d0] sm:$0xff] %v682
                %v684 = vld [vmem:[%s372 + $0x998] sm:$0xff]
                %685 = vst [vmem:[%s373 + $0x4d8] sm:$0xff] %v684
                %v686 = vld [vmem:[%s372 + $0x9a0] sm:$0xff]
                %687 = vst [vmem:[%s373 + $0x4e0] sm:$0xff] %v686
                %v688 = vld [vmem:[%s372 + $0x9a8] sm:$0xff]
                %689 = vst [vmem:[%s373 + $0x4e8] sm:$0xff] %v688
                %v690 = vld [vmem:[%s372 + $0x9b0] sm:$0xff]
                %691 = vst [vmem:[%s373 + $0x4f0] sm:$0xff] %v690
                %v692 = vld [vmem:[%s372 + $0x9b8] sm:$0xff]
                %693 = vst [vmem:[%s373 + $0x4f8] sm:$0xff] %v692
                %v694 = vld [vmem:[%s372 + $0xa00] sm:$0xff]
                %695 = vst [vmem:[%s373 + $0x500] sm:$0xff] %v694
                %v696 = vld [vmem:[%s372 + $0xa08] sm:$0xff]
                %697 = vst [vmem:[%s373 + $0x508] sm:$0xff] %v696
                %v698 = vld [vmem:[%s372 + $0xa10] sm:$0xff]
                %699 = vst [vmem:[%s373 + $0x510] sm:$0xff] %v698
                %v700 = vld [vmem:[%s372 + $0xa18] sm:$0xff]
                %701 = vst [vmem:[%s373 + $0x518] sm:$0xff] %v700
                %v702 = vld [vmem:[%s372 + $0xa20] sm:$0xff]
                %703 = vst [vmem:[%s373 + $0x520] sm:$0xff] %v702
                %v704 = vld [vmem:[%s372 + $0xa28] sm:$0xff]
                %705 = vst [vmem:[%s373 + $0x528] sm:$0xff] %v704
                %v706 = vld [vmem:[%s372 + $0xa30] sm:$0xff]
                %707 = vst [vmem:[%s373 + $0x530] sm:$0xff] %v706
                %v708 = vld [vmem:[%s372 + $0xa38] sm:$0xff]
                %709 = vst [vmem:[%s373 + $0x538] sm:$0xff] %v708
                %v710 = vld [vmem:[%s372 + $0xa80] sm:$0xff]
                %711 = vst [vmem:[%s373 + $0x540] sm:$0xff] %v710
                %v712 = vld [vmem:[%s372 + $0xa88] sm:$0xff]
                %713 = vst [vmem:[%s373 + $0x548] sm:$0xff] %v712
                %v714 = vld [vmem:[%s372 + $0xa90] sm:$0xff]
                %715 = vst [vmem:[%s373 + $0x550] sm:$0xff] %v714
                %v716 = vld [vmem:[%s372 + $0xa98] sm:$0xff]
                %717 = vst [vmem:[%s373 + $0x558] sm:$0xff] %v716
                %v718 = vld [vmem:[%s372 + $0xaa0] sm:$0xff]
                %719 = vst [vmem:[%s373 + $0x560] sm:$0xff] %v718
                %v720 = vld [vmem:[%s372 + $0xaa8] sm:$0xff]
                %721 = vst [vmem:[%s373 + $0x568] sm:$0xff] %v720
                %v722 = vld [vmem:[%s372 + $0xab0] sm:$0xff]
                %723 = vst [vmem:[%s373 + $0x570] sm:$0xff] %v722
                %v724 = vld [vmem:[%s372 + $0xab8] sm:$0xff]
                %725 = vst [vmem:[%s373 + $0x578] sm:$0xff] %v724
                %v726 = vld [vmem:[%s372 + $0xb00] sm:$0xff]
                %727 = vst [vmem:[%s373 + $0x580] sm:$0xff] %v726
                %v728 = vld [vmem:[%s372 + $0xb08] sm:$0xff]
                %729 = vst [vmem:[%s373 + $0x588] sm:$0xff] %v728
                %v730 = vld [vmem:[%s372 + $0xb10] sm:$0xff]
                %731 = vst [vmem:[%s373 + $0x590] sm:$0xff] %v730
                %v732 = vld [vmem:[%s372 + $0xb18] sm:$0xff]
                %733 = vst [vmem:[%s373 + $0x598] sm:$0xff] %v732
                %v734 = vld [vmem:[%s372 + $0xb20] sm:$0xff]
                %735 = vst [vmem:[%s373 + $0x5a0] sm:$0xff] %v734
                %v736 = vld [vmem:[%s372 + $0xb28] sm:$0xff]
                %737 = vst [vmem:[%s373 + $0x5a8] sm:$0xff] %v736
                %v738 = vld [vmem:[%s372 + $0xb30] sm:$0xff]
                %739 = vst [vmem:[%s373 + $0x5b0] sm:$0xff] %v738
                %v740 = vld [vmem:[%s372 + $0xb38] sm:$0xff]
                %741 = vst [vmem:[%s373 + $0x5b8] sm:$0xff] %v740
                %v742 = vld [vmem:[%s372 + $0xb80] sm:$0xff]
                %743 = vst [vmem:[%s373 + $0x5c0] sm:$0xff] %v742
                %v744 = vld [vmem:[%s372 + $0xb88] sm:$0xff]
                %745 = vst [vmem:[%s373 + $0x5c8] sm:$0xff] %v744
                %v746 = vld [vmem:[%s372 + $0xb90] sm:$0xff]
                %747 = vst [vmem:[%s373 + $0x5d0] sm:$0xff] %v746
                %v748 = vld [vmem:[%s372 + $0xb98] sm:$0xff]
                %749 = vst [vmem:[%s373 + $0x5d8] sm:$0xff] %v748
                %v750 = vld [vmem:[%s372 + $0xba0] sm:$0xff]
                %751 = vst [vmem:[%s373 + $0x5e0] sm:$0xff] %v750
                %v752 = vld [vmem:[%s372 + $0xba8] sm:$0xff]
                %753 = vst [vmem:[%s373 + $0x5e8] sm:$0xff] %v752
                %v754 = vld [vmem:[%s372 + $0xbb0] sm:$0xff]
                %755 = vst [vmem:[%s373 + $0x5f0] sm:$0xff] %v754
                %v756 = vld [vmem:[%s372 + $0xbb8] sm:$0xff]
                %757 = vst [vmem:[%s373 + $0x5f8] sm:$0xff] %v756
                %v758 = vld [vmem:[%s372 + $0xc00] sm:$0xff]
                %759 = vst [vmem:[%s373 + $0x600] sm:$0xff] %v758
                %v760 = vld [vmem:[%s372 + $0xc08] sm:$0xff]
                %761 = vst [vmem:[%s373 + $0x608] sm:$0xff] %v760
                %v762 = vld [vmem:[%s372 + $0xc10] sm:$0xff]
                %763 = vst [vmem:[%s373 + $0x610] sm:$0xff] %v762
                %v764 = vld [vmem:[%s372 + $0xc18] sm:$0xff]
                %765 = vst [vmem:[%s373 + $0x618] sm:$0xff] %v764
                %v766 = vld [vmem:[%s372 + $0xc20] sm:$0xff]
                %767 = vst [vmem:[%s373 + $0x620] sm:$0xff] %v766
                %v768 = vld [vmem:[%s372 + $0xc28] sm:$0xff]
                %769 = vst [vmem:[%s373 + $0x628] sm:$0xff] %v768
                %v770 = vld [vmem:[%s372 + $0xc30] sm:$0xff]
                %771 = vst [vmem:[%s373 + $0x630] sm:$0xff] %v770
                %v772 = vld [vmem:[%s372 + $0xc38] sm:$0xff]
                %773 = vst [vmem:[%s373 + $0x638] sm:$0xff] %v772
                %v774 = vld [vmem:[%s372 + $0xc80] sm:$0xff]
                %775 = vst [vmem:[%s373 + $0x640] sm:$0xff] %v774
                %v776 = vld [vmem:[%s372 + $0xc88] sm:$0xff]
                %777 = vst [vmem:[%s373 + $0x648] sm:$0xff] %v776
                %v778 = vld [vmem:[%s372 + $0xc90] sm:$0xff]
                %779 = vst [vmem:[%s373 + $0x650] sm:$0xff] %v778
                %v780 = vld [vmem:[%s372 + $0xc98] sm:$0xff]
                %781 = vst [vmem:[%s373 + $0x658] sm:$0xff] %v780
                %v782 = vld [vmem:[%s372 + $0xca0] sm:$0xff]
                %783 = vst [vmem:[%s373 + $0x660] sm:$0xff] %v782
                %v784 = vld [vmem:[%s372 + $0xca8] sm:$0xff]
                %785 = vst [vmem:[%s373 + $0x668] sm:$0xff] %v784
                %v786 = vld [vmem:[%s372 + $0xcb0] sm:$0xff]
                %787 = vst [vmem:[%s373 + $0x670] sm:$0xff] %v786
                %v788 = vld [vmem:[%s372 + $0xcb8] sm:$0xff]
                %789 = vst [vmem:[%s373 + $0x678] sm:$0xff] %v788
                %v790 = vld [vmem:[%s372 + $0xd00] sm:$0xff]
                %791 = vst [vmem:[%s373 + $0x680] sm:$0xff] %v790
                %v792 = vld [vmem:[%s372 + $0xd08] sm:$0xff]
                %793 = vst [vmem:[%s373 + $0x688] sm:$0xff] %v792
                %v794 = vld [vmem:[%s372 + $0xd10] sm:$0xff]
                %795 = vst [vmem:[%s373 + $0x690] sm:$0xff] %v794
                %v796 = vld [vmem:[%s372 + $0xd18] sm:$0xff]
                %797 = vst [vmem:[%s373 + $0x698] sm:$0xff] %v796
                %v798 = vld [vmem:[%s372 + $0xd20] sm:$0xff]
                %799 = vst [vmem:[%s373 + $0x6a0] sm:$0xff] %v798
                %v800 = vld [vmem:[%s372 + $0xd28] sm:$0xff]
                %801 = vst [vmem:[%s373 + $0x6a8] sm:$0xff] %v800
                %v802 = vld [vmem:[%s372 + $0xd30] sm:$0xff]
                %803 = vst [vmem:[%s373 + $0x6b0] sm:$0xff] %v802
                %v804 = vld [vmem:[%s372 + $0xd38] sm:$0xff]
                %805 = vst [vmem:[%s373 + $0x6b8] sm:$0xff] %v804
                %v806 = vld [vmem:[%s372 + $0xd80] sm:$0xff]
                %807 = vst [vmem:[%s373 + $0x6c0] sm:$0xff] %v806
                %v808 = vld [vmem:[%s372 + $0xd88] sm:$0xff]
                %809 = vst [vmem:[%s373 + $0x6c8] sm:$0xff] %v808
                %v810 = vld [vmem:[%s372 + $0xd90] sm:$0xff]
                %811 = vst [vmem:[%s373 + $0x6d0] sm:$0xff] %v810
                %v812 = vld [vmem:[%s372 + $0xd98] sm:$0xff]
                %813 = vst [vmem:[%s373 + $0x6d8] sm:$0xff] %v812
                %v814 = vld [vmem:[%s372 + $0xda0] sm:$0xff]
                %815 = vst [vmem:[%s373 + $0x6e0] sm:$0xff] %v814
                %v816 = vld [vmem:[%s372 + $0xda8] sm:$0xff]
                %817 = vst [vmem:[%s373 + $0x6e8] sm:$0xff] %v816
                %v818 = vld [vmem:[%s372 + $0xdb0] sm:$0xff]
                %819 = vst [vmem:[%s373 + $0x6f0] sm:$0xff] %v818
                %v820 = vld [vmem:[%s372 + $0xdb8] sm:$0xff]
                %821 = vst [vmem:[%s373 + $0x6f8] sm:$0xff] %v820
                %v822 = vld [vmem:[%s372 + $0xe00] sm:$0xff]
                %823 = vst [vmem:[%s373 + $0x700] sm:$0xff] %v822
                %v824 = vld [vmem:[%s372 + $0xe08] sm:$0xff]
                %825 = vst [vmem:[%s373 + $0x708] sm:$0xff] %v824
                %v826 = vld [vmem:[%s372 + $0xe10] sm:$0xff]
                %827 = vst [vmem:[%s373 + $0x710] sm:$0xff] %v826
                %v828 = vld [vmem:[%s372 + $0xe18] sm:$0xff]
                %829 = vst [vmem:[%s373 + $0x718] sm:$0xff] %v828
                %v830 = vld [vmem:[%s372 + $0xe20] sm:$0xff]
                %831 = vst [vmem:[%s373 + $0x720] sm:$0xff] %v830
                %v832 = vld [vmem:[%s372 + $0xe28] sm:$0xff]
                %833 = vst [vmem:[%s373 + $0x728] sm:$0xff] %v832
                %v834 = vld [vmem:[%s372 + $0xe30] sm:$0xff]
                %835 = vst [vmem:[%s373 + $0x730] sm:$0xff] %v834
                %v836 = vld [vmem:[%s372 + $0xe38] sm:$0xff]
                %837 = vst [vmem:[%s373 + $0x738] sm:$0xff] %v836
                %v838 = vld [vmem:[%s372 + $0xe80] sm:$0xff]
                %839 = vst [vmem:[%s373 + $0x740] sm:$0xff] %v838
                %v840 = vld [vmem:[%s372 + $0xe88] sm:$0xff]
                %841 = vst [vmem:[%s373 + $0x748] sm:$0xff] %v840
                %v842 = vld [vmem:[%s372 + $0xe90] sm:$0xff]
                %843 = vst [vmem:[%s373 + $0x750] sm:$0xff] %v842
                %v844 = vld [vmem:[%s372 + $0xe98] sm:$0xff]
                %845 = vst [vmem:[%s373 + $0x758] sm:$0xff] %v844
                %v846 = vld [vmem:[%s372 + $0xea0] sm:$0xff]
                %847 = vst [vmem:[%s373 + $0x760] sm:$0xff] %v846
                %v848 = vld [vmem:[%s372 + $0xea8] sm:$0xff]
                %849 = vst [vmem:[%s373 + $0x768] sm:$0xff] %v848
                %v850 = vld [vmem:[%s372 + $0xeb0] sm:$0xff]
                %851 = vst [vmem:[%s373 + $0x770] sm:$0xff] %v850
                %v852 = vld [vmem:[%s372 + $0xeb8] sm:$0xff]
                %853 = vst [vmem:[%s373 + $0x778] sm:$0xff] %v852
                %v854 = vld [vmem:[%s372 + $0xf00] sm:$0xff]
                %855 = vst [vmem:[%s373 + $0x780] sm:$0xff] %v854
                %v856 = vld [vmem:[%s372 + $0xf08] sm:$0xff]
                %857 = vst [vmem:[%s373 + $0x788] sm:$0xff] %v856
                %v858 = vld [vmem:[%s372 + $0xf10] sm:$0xff]
                %859 = vst [vmem:[%s373 + $0x790] sm:$0xff] %v858
                %v860 = vld [vmem:[%s372 + $0xf18] sm:$0xff]
                %861 = vst [vmem:[%s373 + $0x798] sm:$0xff] %v860
                %v862 = vld [vmem:[%s372 + $0xf20] sm:$0xff]
                %863 = vst [vmem:[%s373 + $0x7a0] sm:$0xff] %v862
                %v864 = vld [vmem:[%s372 + $0xf28] sm:$0xff]
                %865 = vst [vmem:[%s373 + $0x7a8] sm:$0xff] %v864
                %v866 = vld [vmem:[%s372 + $0xf30] sm:$0xff]
                %867 = vst [vmem:[%s373 + $0x7b0] sm:$0xff] %v866
                %v868 = vld [vmem:[%s372 + $0xf38] sm:$0xff]
                %869 = vst [vmem:[%s373 + $0x7b8] sm:$0xff] %v868
                %v870 = vld [vmem:[%s372 + $0xf80] sm:$0xff]
                %871 = vst [vmem:[%s373 + $0x7c0] sm:$0xff] %v870
                %v872 = vld [vmem:[%s372 + $0xf88] sm:$0xff]
                %873 = vst [vmem:[%s373 + $0x7c8] sm:$0xff] %v872
                %v874 = vld [vmem:[%s372 + $0xf90] sm:$0xff]
                %875 = vst [vmem:[%s373 + $0x7d0] sm:$0xff] %v874
                %v876 = vld [vmem:[%s372 + $0xf98] sm:$0xff]
                %877 = vst [vmem:[%s373 + $0x7d8] sm:$0xff] %v876
                %v878 = vld [vmem:[%s372 + $0xfa0] sm:$0xff]
                %879 = vst [vmem:[%s373 + $0x7e0] sm:$0xff] %v878
                %v880 = vld [vmem:[%s372 + $0xfa8] sm:$0xff]
                %881 = vst [vmem:[%s373 + $0x7e8] sm:$0xff] %v880
                %v882 = vld [vmem:[%s372 + $0xfb0] sm:$0xff]
                %883 = vst [vmem:[%s373 + $0x7f0] sm:$0xff] %v882
                %v884 = vld [vmem:[%s372 + $0xfb8] sm:$0xff]
                %885 = vst [vmem:[%s373 + $0x7f8] sm:$0xff] %v884
              $region73: #{change_detection_forward.1} parent=67 // loop_footer
                %s371 = sadd.s32 1, %s367
              $region74: #{change_detection_forward.1} parent=67 // loop_footer_branch
                %366 = sbr.rel target = $region70
              $region75: #{change_detection_forward.1} parent=67 // loop_exit
                _
            $region68: #{change_detection_forward.1} parent=63 // pred_fallthru
              _
            // Predicated region
            $region76: #{change_detection_forward.1} parent=63 // pred_check
              _
            $region77: #{change_detection_forward.1} parent=63 // pred_check_branch
              %887 = sbr.rel target = $region79
            $region78: #{change_detection_forward.1} parent=63 // pred_region
              _
            $region79: #{change_detection_forward.1} parent=63 // pred_fallthru
              _
          $region64: #{change_detection_forward.1} parent=59 // pred_fallthru
            _
          %888 = vnop
        $region60: #{change_detection_forward.1} parent=51 // pred_fallthru
          _
      $region52: #{change_detection_forward.1} parent=5 // pred_fallthru
        _
      %p889 = scmp.le.s32.totalorder 1, %s17
      %p890 = scmp.lt.s32.totalorder %s17, 5
      %p891 = pnand %p889, %p890
      %p892 = pneg %p891
      // Predicated region
      $region80: #{change_detection_forward.1} parent=5 // pred_check
        _
      $region81: #{change_detection_forward.1} parent=5 // pred_check_branch
        %894 = sbr.rel (%p891) target = $region83
      $region82: #{change_detection_forward.1} parent=5 // pred_region
        %s895 = ssub.s32 %s17, 1
        %s896 = sand.u32 %s257, 1
        %s897 = sand.u32 %s257, 1
        %s898 = smul.addr %s897, 2048
        %s899 = scalar_lea.vmem [#allocation3], %s898
        // Predicated region
        $region84: #{change_detection_forward.1} parent=82 // pred_check
          %p900 = pneg %p270
        $region85: #{change_detection_forward.1} parent=82 // pred_check_branch
          %902 = sbr.rel (%p900) target = $region87
        $region86: #{change_detection_forward.1} parent=82 // pred_region
          _
        $region87: #{change_detection_forward.1} parent=82 // pred_fallthru
          _
        %p903 = scmp.lt.s32.totalorder %s26, 1
        %s904 = scalar_select %p903, %s26, 1
        %s905 = smul.addr %s904, 4
        %s906 = smul.addr %s905, 4
        %s907 = scalar_lea.vmem %s0, %s906
        %p908 = pneg %p55
        %p909 = pneg %p52
        %p910 = pneg %p76
        %p911 = pneg %p73
        %p912 = pneg %p97
        %p913 = pneg %p94
        %p914 = pneg %p118
        %p915 = pneg %p115
        %p916 = pneg %p139
        %p917 = pneg %p136
        %p918 = pneg %p160
        %p919 = pneg %p157
        %p920 = pneg %p181
        %p921 = pneg %p178
        %p922 = pneg %p202
        %p923 = pneg %p199
        %p924 = pneg %p223
        %p925 = pneg %p220
        %p926 = pneg %p244
        %p927 = pneg %p241
        %s928 = sand.u32 %s257, 1
        %s929 = sand.u32 %s257, 1
        %s930 = smul.addr %s929, 2048
        %s931 = scalar_lea.vmem [#allocation3], %s930
        %p932 = pneg %p270
        %p933 = pneg %p267
        %p934 = pneg %p298
        %p935 = pneg %p295
        %s936 = smul.u32 16, %s27
        %p937 = scmp.lt.s32.totalorder %s26, 1
        %s938 = scalar_select %p937, %s26, 1
        %p939 = scmp.lt.s32.totalorder %s936, 31
        %s940 = scalar_select %p939, %s936, 31
        %s941 = smul.addr %s938, 32
        %s942 = sadd.s32 %s940, %s941
        %s943 = smul.addr %s942, 4
        %s944 = scalar_lea.vmem %s11, %s943
        %p945 = scmp.lt.s32.totalorder %s26, 1
        %s946 = scalar_select %p945, %s26, 1
        %s947 = smul.addr %s946, 4
        %s948 = smul.addr %s947, 4
        %s949 = scalar_lea.vmem %s0, %s948
        %s950 = smul.u32 16, %s27
        %s951 = smul.u32 16, %s27
        %p952 = scmp.lt.s32.totalorder %s26, 1
        %s953 = scalar_select %p952, %s26, 1
        %p954 = scmp.lt.s32.totalorder %s951, 31
        %s955 = scalar_select %p954, %s951, 31
        %s956 = smul.addr %s953, 32
        %s957 = sadd.s32 %s955, %s956
        %s958 = smul.addr %s957, 4
        %s959 = scalar_lea.vmem %s11, %s958
        %s960 = smul.u32 16, %s27
        %p962 = scmp.eq.s32.totalorder %s27, 0
        // Predicated region
        $region88: #{change_detection_forward.1} parent=82 // pred_check
          %p963 = pneg %p962
        $region89: #{change_detection_forward.1} parent=82 // pred_check_branch
          %965 = sbr.rel (%p963) target = $region91
        $region90: #{change_detection_forward.1} parent=82 // pred_region
          %v966 = vld [vmem:[%s949] sm:$0x77]
          %v967 = vld [vmem:[%s949 + $0x8] sm:$0x77]
          %v970 = vcombine.high %v966, %v966
          %v971 = vcombine.high %v967, %v967
          %v974 = vpack.c.bf16 %v966, %v966
          %v975 = vpack.c.bf16 %v970, %v970
          %v976 = vpack.c.bf16 %v967, %v967
          %v977 = vpack.c.bf16 %v971, %v971
          %v978 = vld [vmem:[%s1] sm:$0xf]
          %v979 = vld [vmem:[%s1 + $0x4] sm:$0xf]
          %v980 = vld [vmem:[%s1 + $0x8] sm:$0xf]
          %v981 = vld [vmem:[%s1 + $0xc] sm:$0xf]
          %v982 = vld [vmem:[%s2] sm:$0xff]
          %v983 = vld [vmem:[%s2 + $0x8] sm:$0xff]
          %v984 = vld [vmem:[%s2 + $0x10] sm:$0xff]
          %v985 = vld [vmem:[%s2 + $0x18] sm:$0xff]
          %987 = vset.pattern.permute.xlu0 0
          %988 = vperm.xlu0 %987, %v982
          %v989 = vpop.permute.xlu0 %988
          %992 = vset.pattern.permute.xlu0 0
          %993 = vperm.xlu0 %992, %v983
          %v994 = vpop.permute.xlu0 %993
          %997 = vset.pattern.permute.xlu0 0
          %998 = vperm.xlu0 %997, %v984
          %v999 = vpop.permute.xlu0 %998
          %1002 = vset.pattern.permute.xlu0 0
          %1003 = vperm.xlu0 %1002, %v985
          %v1004 = vpop.permute.xlu0 %1003
          %v1010 = vunpack.c.l.b16 %v978
          %v1011 = vunpack.c.l.b16 %v979
          %v1012 = vunpack.c.l.b16 %v980
          %v1013 = vunpack.c.l.b16 %v981
          %v1014 = vpack.c.b16 %v1011, %v1010
          %v1015 = vpack.c.b16 %v1013, %v1012
          %vm1016 = vcmask 23552
          %v1018 = vsel %vm1016, %v1014, 0
          %v1021 = vsel %vm1016, %v1015, 0
          %vm1023 = vcmask 1040384
          %vm1024 = vcmask 1041408
          %v1025 = vsel %vm1023, 4294967295, 65535
          %v1026 = vsel %vm1024, %v1025, 0
          %v1028 = vand.u32 %v974, %v1026
          %v1031 = vand.u32 %v975, %v1026
          %v1034 = vand.u32 %v976, %v1026
          %v1037 = vand.u32 %v977, %v1026
          %1039 = vmatprep.subr.bf16.mxu0 0
          %1040 = vmatpush1.bf16.msra.mxu0 0
          %1041 = vmatprep.subr.bf16.mxu0 0
          %1042 = vmatpush1.bf16.msra.mxu0 0
          %1043 = vmatprep.subr.bf16.mxu0 0
          %1044 = vmatpush1.bf16.msra.mxu0 0
          %1045 = vmatprep.subr.bf16.mxu0 0
          %1046 = vmatpush1.bf16.msra.mxu0 0
          %1047 = vmatprep.subr.bf16.mxu0 0
          %1048 = vmatpush1.bf16.msra.mxu0 0
          %1049 = vmatprep.subr.bf16.mxu0 0
          %1050 = vmatpush1.bf16.msra.mxu0 0
          %1051 = vmatprep.subr.bf16.mxu0 0
          %1052 = vmatpush1.bf16.msra.mxu0 0
          %1053 = vmatprep.subr.bf16.mxu0 %v1031
          %1054 = vmatpush1.bf16.msra.mxu0 %v1028
          %1055 = vmatprep.subr.bf16.mxu0 0
          %1056 = vmatpush2.bf16.msra.mxu0 0
          %1057 = vmatprep.subr.bf16.mxu0 0
          %1058 = vmatpush2.bf16.msra.mxu0 0
          %1059 = vmatprep.subr.bf16.mxu0 0
          %1060 = vmatpush2.bf16.msra.mxu0 0
          %1061 = vmatprep.subr.bf16.mxu0 0
          %1062 = vmatpush2.bf16.msra.mxu0 0
          %1063 = vmatprep.subr.bf16.mxu0 0
          %1064 = vmatpush2.bf16.msra.mxu0 0
          %1065 = vmatprep.subr.bf16.mxu0 0
          %1066 = vmatpush2.bf16.msra.mxu0 0
          %1067 = vmatprep.subr.bf16.mxu0 0
          %1068 = vmatpush2.bf16.msra.mxu0 0
          %1069 = vmatprep.subr.bf16.mxu0 0
          %1070 = vmatpush2.bf16.msra.mxu0 0
          %1071 = vmatprep.mubr.bf16.mxu0 0
          %1072 = vmatmul.mubr.bf16.gmra.mxu0 %v1018
          %v1073 = vpop.f32.mrf.mxu0
          %v1074 = vadd.f32 %v989, %v1073
          %v1075 = vpop.f32.mrf.mxu0
          %v1076 = vadd.f32 %v989, %v1075
          %v1077 = vpop.f32.mrf.mxu0
          %v1078 = vadd.f32 %v994, %v1077
          %v1079 = vpop.f32.mrf.mxu0
          %v1080 = vadd.f32 %v994, %v1079
          %1081 = vmatprep.mubr.bf16.mxu0 0
          %1082 = vmatmul.mubr.bf16.gmra.mxu0 %v1021
          %v1083 = vpop.f32.mrf.mxu0
          %v1084 = vadd.f32 %v999, %v1083
          %v1085 = vpop.f32.mrf.mxu0
          %v1086 = vadd.f32 %v999, %v1085
          %v1087 = vpop.f32.mrf.mxu0
          %v1088 = vadd.f32 %v1004, %v1087
          %v1089 = vpop.f32.mrf.mxu0
          %v1090 = vadd.f32 %v1004, %v1089
          %1091 = vdwg.mxu0
          %1092 = vmatprep.subr.bf16.mxu0 0
          %1093 = vmatpush1.bf16.msra.mxu0 0
          %1094 = vmatprep.subr.bf16.mxu0 0
          %1095 = vmatpush1.bf16.msra.mxu0 0
          %1096 = vmatprep.subr.bf16.mxu0 0
          %1097 = vmatpush1.bf16.msra.mxu0 0
          %1098 = vmatprep.subr.bf16.mxu0 0
          %1099 = vmatpush1.bf16.msra.mxu0 0
          %1100 = vmatprep.subr.bf16.mxu0 0
          %1101 = vmatpush1.bf16.msra.mxu0 0
          %1102 = vmatprep.subr.bf16.mxu0 0
          %1103 = vmatpush1.bf16.msra.mxu0 0
          %1104 = vmatprep.subr.bf16.mxu0 0
          %1105 = vmatpush1.bf16.msra.mxu0 0
          %1106 = vmatprep.subr.bf16.mxu0 %v1037
          %1107 = vmatpush1.bf16.msra.mxu0 %v1034
          %1108 = vmatprep.subr.bf16.mxu0 0
          %1109 = vmatpush2.bf16.msra.mxu0 0
          %1110 = vmatprep.subr.bf16.mxu0 0
          %1111 = vmatpush2.bf16.msra.mxu0 0
          %1112 = vmatprep.subr.bf16.mxu0 0
          %1113 = vmatpush2.bf16.msra.mxu0 0
          %1114 = vmatprep.subr.bf16.mxu0 0
          %1115 = vmatpush2.bf16.msra.mxu0 0
          %1116 = vmatprep.subr.bf16.mxu0 0
          %1117 = vmatpush2.bf16.msra.mxu0 0
          %1118 = vmatprep.subr.bf16.mxu0 0
          %1119 = vmatpush2.bf16.msra.mxu0 0
          %1120 = vmatprep.subr.bf16.mxu0 0
          %1121 = vmatpush2.bf16.msra.mxu0 0
          %1122 = vmatprep.subr.bf16.mxu0 0
          %1123 = vmatpush2.bf16.msra.mxu0 0
          %1124 = vmatprep.mubr.bf16.mxu0 0
          %1125 = vmatmul.mubr.bf16.gmra.mxu0 %v1018
          %v1126 = vpop.f32.mrf.mxu0
          %v1127 = vadd.f32 %v989, %v1126
          %v1128 = vpop.f32.mrf.mxu0
          %v1129 = vadd.f32 %v989, %v1128
          %v1130 = vpop.f32.mrf.mxu0
          %v1131 = vadd.f32 %v994, %v1130
          %v1132 = vpop.f32.mrf.mxu0
          %v1133 = vadd.f32 %v994, %v1132
          %1134 = vmatprep.mubr.bf16.mxu0 0
          %1135 = vmatmul.mubr.bf16.gmra.mxu0 %v1021
          %v1136 = vpop.f32.mrf.mxu0
          %v1137 = vadd.f32 %v999, %v1136
          %v1138 = vpop.f32.mrf.mxu0
          %v1139 = vadd.f32 %v999, %v1138
          %v1140 = vpop.f32.mrf.mxu0
          %v1141 = vadd.f32 %v1004, %v1140
          %v1142 = vpop.f32.mrf.mxu0
          %v1143 = vadd.f32 %v1004, %v1142
          %1144 = vdwg.mxu0
          %v1145 = vmax.f32 %v1074, 0.0
          %v1146 = vmax.f32 %v1076, 0.0
          %v1147 = vmax.f32 %v1127, 0.0
          %v1148 = vmax.f32 %v1129, 0.0
          %v1149 = vmax.f32 %v1078, 0.0
          %v1150 = vmax.f32 %v1080, 0.0
          %v1151 = vmax.f32 %v1131, 0.0
          %v1152 = vmax.f32 %v1133, 0.0
          %v1153 = vmax.f32 %v1084, 0.0
          %v1154 = vmax.f32 %v1086, 0.0
          %v1155 = vmax.f32 %v1137, 0.0
          %v1156 = vmax.f32 %v1139, 0.0
          %v1157 = vmax.f32 %v1088, 0.0
          %v1158 = vmax.f32 %v1090, 0.0
          %v1159 = vmax.f32 %v1141, 0.0
          %v1160 = vmax.f32 %v1143, 0.0
          %s1161 = scalar_lea.vmem %s1, 16
          %v1162 = vld [vmem:[%s1161] sm:$0xf]
          %v1163 = vld [vmem:[%s1161 + $0x4] sm:$0xf]
          %v1164 = vld [vmem:[%s1161 + $0x8] sm:$0xf]
          %v1165 = vld [vmem:[%s1161 + $0xc] sm:$0xf]
          %s1166 = scalar_lea.vmem %s2, 32
          %v1167 = vld [vmem:[%s1166] sm:$0xff]
          %v1168 = vld [vmem:[%s1166 + $0x8] sm:$0xff]
          %v1169 = vld [vmem:[%s1166 + $0x10] sm:$0xff]
          %v1170 = vld [vmem:[%s1166 + $0x18] sm:$0xff]
          %1172 = vset.pattern.permute.xlu0 0
          %1173 = vperm.xlu0 %1172, %v1167
          %v1174 = vpop.permute.xlu0 %1173
          %1177 = vset.pattern.permute.xlu0 0
          %1178 = vperm.xlu0 %1177, %v1168
          %v1179 = vpop.permute.xlu0 %1178
          %1182 = vset.pattern.permute.xlu0 0
          %1183 = vperm.xlu0 %1182, %v1169
          %v1184 = vpop.permute.xlu0 %1183
          %1187 = vset.pattern.permute.xlu0 0
          %1188 = vperm.xlu0 %1187, %v1170
          %v1189 = vpop.permute.xlu0 %1188
          %v1195 = vunpack.c.l.b16 %v1162
          %v1196 = vunpack.c.l.b16 %v1163
          %v1197 = vunpack.c.l.b16 %v1164
          %v1198 = vunpack.c.l.b16 %v1165
          %v1199 = vpack.c.b16 %v1196, %v1195
          %v1200 = vpack.c.b16 %v1198, %v1197
          %v1202 = vsel %vm1016, %v1199, 0
          %v1205 = vsel %vm1016, %v1200, 0
          %1207 = vmatprep.subr.bf16.mxu0 0
          %1208 = vmatpush1.bf16.msra.mxu0 0
          %1209 = vmatprep.subr.bf16.mxu0 0
          %1210 = vmatpush1.bf16.msra.mxu0 0
          %1211 = vmatprep.subr.bf16.mxu0 0
          %1212 = vmatpush1.bf16.msra.mxu0 0
          %1213 = vmatprep.subr.bf16.mxu0 0
          %1214 = vmatpush1.bf16.msra.mxu0 0
          %1215 = vmatprep.subr.bf16.mxu0 0
          %1216 = vmatpush1.bf16.msra.mxu0 0
          %1217 = vmatprep.subr.bf16.mxu0 0
          %1218 = vmatpush1.bf16.msra.mxu0 0
          %1219 = vmatprep.subr.bf16.mxu0 0
          %1220 = vmatpush1.bf16.msra.mxu0 0
          %1221 = vmatprep.subr.bf16.mxu0 %v1031
          %1222 = vmatpush1.bf16.msra.mxu0 %v1028
          %1223 = vmatprep.subr.bf16.mxu0 0
          %1224 = vmatpush2.bf16.msra.mxu0 0
          %1225 = vmatprep.subr.bf16.mxu0 0
          %1226 = vmatpush2.bf16.msra.mxu0 0
          %1227 = vmatprep.subr.bf16.mxu0 0
          %1228 = vmatpush2.bf16.msra.mxu0 0
          %1229 = vmatprep.subr.bf16.mxu0 0
          %1230 = vmatpush2.bf16.msra.mxu0 0
          %1231 = vmatprep.subr.bf16.mxu0 0
          %1232 = vmatpush2.bf16.msra.mxu0 0
          %1233 = vmatprep.subr.bf16.mxu0 0
          %1234 = vmatpush2.bf16.msra.mxu0 0
          %1235 = vmatprep.subr.bf16.mxu0 0
          %1236 = vmatpush2.bf16.msra.mxu0 0
          %1237 = vmatprep.subr.bf16.mxu0 0
          %1238 = vmatpush2.bf16.msra.mxu0 0
          %1239 = vmatprep.mubr.bf16.mxu0 0
          %1240 = vmatmul.mubr.bf16.gmra.mxu0 %v1202
          %v1241 = vpop.f32.mrf.mxu0
          %v1242 = vadd.f32 %v1174, %v1241
          %v1243 = vpop.f32.mrf.mxu0
          %v1244 = vadd.f32 %v1174, %v1243
          %v1245 = vpop.f32.mrf.mxu0
          %v1246 = vadd.f32 %v1179, %v1245
          %v1247 = vpop.f32.mrf.mxu0
          %v1248 = vadd.f32 %v1179, %v1247
          %1249 = vmatprep.mubr.bf16.mxu0 0
          %1250 = vmatmul.mubr.bf16.gmra.mxu0 %v1205
          %v1251 = vpop.f32.mrf.mxu0
          %v1252 = vadd.f32 %v1184, %v1251
          %v1253 = vpop.f32.mrf.mxu0
          %v1254 = vadd.f32 %v1184, %v1253
          %v1255 = vpop.f32.mrf.mxu0
          %v1256 = vadd.f32 %v1189, %v1255
          %v1257 = vpop.f32.mrf.mxu0
          %v1258 = vadd.f32 %v1189, %v1257
          %1259 = vdwg.mxu0
          %1260 = vmatprep.subr.bf16.mxu0 0
          %1261 = vmatpush1.bf16.msra.mxu0 0
          %1262 = vmatprep.subr.bf16.mxu0 0
          %1263 = vmatpush1.bf16.msra.mxu0 0
          %1264 = vmatprep.subr.bf16.mxu0 0
          %1265 = vmatpush1.bf16.msra.mxu0 0
          %1266 = vmatprep.subr.bf16.mxu0 0
          %1267 = vmatpush1.bf16.msra.mxu0 0
          %1268 = vmatprep.subr.bf16.mxu0 0
          %1269 = vmatpush1.bf16.msra.mxu0 0
          %1270 = vmatprep.subr.bf16.mxu0 0
          %1271 = vmatpush1.bf16.msra.mxu0 0
          %1272 = vmatprep.subr.bf16.mxu0 0
          %1273 = vmatpush1.bf16.msra.mxu0 0
          %1274 = vmatprep.subr.bf16.mxu0 %v1037
          %1275 = vmatpush1.bf16.msra.mxu0 %v1034
          %1276 = vmatprep.subr.bf16.mxu0 0
          %1277 = vmatpush2.bf16.msra.mxu0 0
          %1278 = vmatprep.subr.bf16.mxu0 0
          %1279 = vmatpush2.bf16.msra.mxu0 0
          %1280 = vmatprep.subr.bf16.mxu0 0
          %1281 = vmatpush2.bf16.msra.mxu0 0
          %1282 = vmatprep.subr.bf16.mxu0 0
          %1283 = vmatpush2.bf16.msra.mxu0 0
          %1284 = vmatprep.subr.bf16.mxu0 0
          %1285 = vmatpush2.bf16.msra.mxu0 0
          %1286 = vmatprep.subr.bf16.mxu0 0
          %1287 = vmatpush2.bf16.msra.mxu0 0
          %1288 = vmatprep.subr.bf16.mxu0 0
          %1289 = vmatpush2.bf16.msra.mxu0 0
          %1290 = vmatprep.subr.bf16.mxu0 0
          %1291 = vmatpush2.bf16.msra.mxu0 0
          %1292 = vmatprep.mubr.bf16.mxu0 0
          %1293 = vmatmul.mubr.bf16.gmra.mxu0 %v1202
          %v1294 = vpop.f32.mrf.mxu0
          %v1295 = vadd.f32 %v1174, %v1294
          %v1296 = vpop.f32.mrf.mxu0
          %v1297 = vadd.f32 %v1174, %v1296
          %v1298 = vpop.f32.mrf.mxu0
          %v1299 = vadd.f32 %v1179, %v1298
          %v1300 = vpop.f32.mrf.mxu0
          %v1301 = vadd.f32 %v1179, %v1300
          %1302 = vmatprep.mubr.bf16.mxu0 0
          %1303 = vmatmul.mubr.bf16.gmra.mxu0 %v1205
          %v1304 = vpop.f32.mrf.mxu0
          %v1305 = vadd.f32 %v1184, %v1304
          %v1306 = vpop.f32.mrf.mxu0
          %v1307 = vadd.f32 %v1184, %v1306
          %v1308 = vpop.f32.mrf.mxu0
          %v1309 = vadd.f32 %v1189, %v1308
          %v1310 = vpop.f32.mrf.mxu0
          %v1311 = vadd.f32 %v1189, %v1310
          %1312 = vdwg.mxu0
          %v1313 = vmax.f32 %v1242, 0.0
          %v1314 = vmax.f32 %v1244, 0.0
          %v1315 = vmax.f32 %v1295, 0.0
          %v1316 = vmax.f32 %v1297, 0.0
          %v1317 = vmax.f32 %v1246, 0.0
          %v1318 = vmax.f32 %v1248, 0.0
          %v1319 = vmax.f32 %v1299, 0.0
          %v1320 = vmax.f32 %v1301, 0.0
          %v1321 = vmax.f32 %v1252, 0.0
          %v1322 = vmax.f32 %v1254, 0.0
          %v1323 = vmax.f32 %v1305, 0.0
          %v1324 = vmax.f32 %v1307, 0.0
          %v1325 = vmax.f32 %v1256, 0.0
          %v1326 = vmax.f32 %v1258, 0.0
          %v1327 = vmax.f32 %v1309, 0.0
          %v1328 = vmax.f32 %v1311, 0.0
          %v1329 = vpack.c.bf16 %v1149, %v1145
          %v1330 = vpack.c.bf16 %v1150, %v1146
          %v1331 = vpack.c.bf16 %v1151, %v1147
          %v1332 = vpack.c.bf16 %v1152, %v1148
          %v1333 = vpack.c.bf16 %v1157, %v1153
          %v1334 = vpack.c.bf16 %v1158, %v1154
          %v1335 = vpack.c.bf16 %v1159, %v1155
          %v1336 = vpack.c.bf16 %v1160, %v1156
          %v1337 = vpack.c.bf16 %v1317, %v1313
          %v1338 = vpack.c.bf16 %v1318, %v1314
          %v1339 = vpack.c.bf16 %v1319, %v1315
          %v1340 = vpack.c.bf16 %v1320, %v1316
          %v1341 = vpack.c.bf16 %v1325, %v1321
          %v1342 = vpack.c.bf16 %v1326, %v1322
          %v1343 = vpack.c.bf16 %v1327, %v1323
          %v1344 = vpack.c.bf16 %v1328, %v1324
          %v1345 = vld [vmem:[%s3] sm:$0xf]
          %v1346 = vld [vmem:[%s3 + $0x4] sm:$0xf]
          %v1347 = vld [vmem:[%s3 + $0x8] sm:$0xf]
          %v1348 = vld [vmem:[%s3 + $0xc] sm:$0xf]
          %v1353 = vunpack.c.l.b16 %v1345
          %v1354 = vunpack.c.l.b16 %v1346
          %v1355 = vunpack.c.l.b16 %v1347
          %v1356 = vunpack.c.l.b16 %v1348
          %v1357 = vpack.c.b16 %v1354, %v1353
          %v1358 = vpack.c.b16 %v1356, %v1355
          %vm1359 = vcmask 261120
          %v1361 = vsel %vm1359, %v1357, 0
          %v1364 = vsel %vm1359, %v1358, 0
          %1366 = vmatprep.subr.bf16.mxu0 0
          %1367 = vmatpush1.bf16.msra.mxu0 0
          %1368 = vmatprep.subr.bf16.mxu0 0
          %1369 = vmatpush1.bf16.msra.mxu0 0
          %1370 = vmatprep.subr.bf16.mxu0 0
          %1371 = vmatpush1.bf16.msra.mxu0 0
          %1372 = vmatprep.subr.bf16.mxu0 0
          %1373 = vmatpush1.bf16.msra.mxu0 0
          %1374 = vmatprep.subr.bf16.mxu0 0
          %1375 = vmatpush1.bf16.msra.mxu0 0
          %1376 = vmatprep.subr.bf16.mxu0 0
          %1377 = vmatpush1.bf16.msra.mxu0 0
          %1378 = vmatprep.subr.bf16.mxu0 %v1334
          %1379 = vmatpush1.bf16.msra.mxu0 %v1333
          %1380 = vmatprep.subr.bf16.mxu0 %v1330
          %1381 = vmatpush1.bf16.msra.mxu0 %v1329
          %1382 = vmatprep.subr.bf16.mxu0 0
          %1383 = vmatpush2.bf16.msra.mxu0 0
          %1384 = vmatprep.subr.bf16.mxu0 0
          %1385 = vmatpush2.bf16.msra.mxu0 0
          %1386 = vmatprep.subr.bf16.mxu0 0
          %1387 = vmatpush2.bf16.msra.mxu0 0
          %1388 = vmatprep.subr.bf16.mxu0 0
          %1389 = vmatpush2.bf16.msra.mxu0 0
          %1390 = vmatprep.subr.bf16.mxu0 0
          %1391 = vmatpush2.bf16.msra.mxu0 0
          %1392 = vmatprep.subr.bf16.mxu0 0
          %1393 = vmatpush2.bf16.msra.mxu0 0
          %1394 = vmatprep.subr.bf16.mxu0 0
          %1395 = vmatpush2.bf16.msra.mxu0 0
          %1396 = vmatprep.subr.bf16.mxu0 0
          %1397 = vmatpush2.bf16.msra.mxu0 0
          %1398 = vmatprep.mubr.bf16.mxu0 0
          %1399 = vmatmul.mubr.bf16.gmra.mxu0 %v1361
          %v1400 = vpop.f32.mrf.mxu0
          %v1401 = vadd.f32 0.0, %v1400
          %v1402 = vpop.f32.mrf.mxu0
          %v1403 = vadd.f32 0.0, %v1402
          %v1404 = vpop.f32.mrf.mxu0
          %v1405 = vadd.f32 0.0, %v1404
          %v1406 = vpop.f32.mrf.mxu0
          %v1407 = vadd.f32 0.0, %v1406
          %1408 = vmatprep.mubr.bf16.mxu0 0
          %1409 = vmatmul.mubr.bf16.gmra.mxu0 %v1364
          %v1410 = vpop.f32.mrf.mxu0
          %v1411 = vadd.f32 0.0, %v1410
          %v1412 = vpop.f32.mrf.mxu0
          %v1413 = vadd.f32 0.0, %v1412
          %v1414 = vpop.f32.mrf.mxu0
          %v1415 = vadd.f32 0.0, %v1414
          %v1416 = vpop.f32.mrf.mxu0
          %v1417 = vadd.f32 0.0, %v1416
          %1418 = vdwg.mxu0
          %1419 = vmatprep.subr.bf16.mxu0 0
          %1420 = vmatpush1.bf16.msra.mxu0 0
          %1421 = vmatprep.subr.bf16.mxu0 0
          %1422 = vmatpush1.bf16.msra.mxu0 0
          %1423 = vmatprep.subr.bf16.mxu0 0
          %1424 = vmatpush1.bf16.msra.mxu0 0
          %1425 = vmatprep.subr.bf16.mxu0 0
          %1426 = vmatpush1.bf16.msra.mxu0 0
          %1427 = vmatprep.subr.bf16.mxu0 0
          %1428 = vmatpush1.bf16.msra.mxu0 0
          %1429 = vmatprep.subr.bf16.mxu0 0
          %1430 = vmatpush1.bf16.msra.mxu0 0
          %1431 = vmatprep.subr.bf16.mxu0 %v1336
          %1432 = vmatpush1.bf16.msra.mxu0 %v1335
          %1433 = vmatprep.subr.bf16.mxu0 %v1332
          %1434 = vmatpush1.bf16.msra.mxu0 %v1331
          %1435 = vmatprep.subr.bf16.mxu0 0
          %1436 = vmatpush2.bf16.msra.mxu0 0
          %1437 = vmatprep.subr.bf16.mxu0 0
          %1438 = vmatpush2.bf16.msra.mxu0 0
          %1439 = vmatprep.subr.bf16.mxu0 0
          %1440 = vmatpush2.bf16.msra.mxu0 0
          %1441 = vmatprep.subr.bf16.mxu0 0
          %1442 = vmatpush2.bf16.msra.mxu0 0
          %1443 = vmatprep.subr.bf16.mxu0 0
          %1444 = vmatpush2.bf16.msra.mxu0 0
          %1445 = vmatprep.subr.bf16.mxu0 0
          %1446 = vmatpush2.bf16.msra.mxu0 0
          %1447 = vmatprep.subr.bf16.mxu0 0
          %1448 = vmatpush2.bf16.msra.mxu0 0
          %1449 = vmatprep.subr.bf16.mxu0 0
          %1450 = vmatpush2.bf16.msra.mxu0 0
          %1451 = vmatprep.mubr.bf16.mxu0 0
          %1452 = vmatmul.mubr.bf16.gmra.mxu0 %v1361
          %v1453 = vpop.f32.mrf.mxu0
          %v1454 = vadd.f32 0.0, %v1453
          %v1455 = vpop.f32.mrf.mxu0
          %v1456 = vadd.f32 0.0, %v1455
          %v1457 = vpop.f32.mrf.mxu0
          %v1458 = vadd.f32 0.0, %v1457
          %v1459 = vpop.f32.mrf.mxu0
          %v1460 = vadd.f32 0.0, %v1459
          %1461 = vmatprep.mubr.bf16.mxu0 0
          %1462 = vmatmul.mubr.bf16.gmra.mxu0 %v1364
          %v1463 = vpop.f32.mrf.mxu0
          %v1464 = vadd.f32 0.0, %v1463
          %v1465 = vpop.f32.mrf.mxu0
          %v1466 = vadd.f32 0.0, %v1465
          %v1467 = vpop.f32.mrf.mxu0
          %v1468 = vadd.f32 0.0, %v1467
          %v1469 = vpop.f32.mrf.mxu0
          %v1470 = vadd.f32 0.0, %v1469
          %1471 = vdwg.mxu0
          %s1472 = scalar_lea.vmem %s3, 16
          %v1473 = vld [vmem:[%s1472] sm:$0xf]
          %v1474 = vld [vmem:[%s1472 + $0x4] sm:$0xf]
          %v1475 = vld [vmem:[%s1472 + $0x8] sm:$0xf]
          %v1476 = vld [vmem:[%s1472 + $0xc] sm:$0xf]
          %v1481 = vunpack.c.l.b16 %v1473
          %v1482 = vunpack.c.l.b16 %v1474
          %v1483 = vunpack.c.l.b16 %v1475
          %v1484 = vunpack.c.l.b16 %v1476
          %v1485 = vpack.c.b16 %v1482, %v1481
          %v1486 = vpack.c.b16 %v1484, %v1483
          %v1488 = vsel %vm1359, %v1485, 0
          %v1491 = vsel %vm1359, %v1486, 0
          %1493 = vmatprep.subr.bf16.mxu0 0
          %1494 = vmatpush1.bf16.msra.mxu0 0
          %1495 = vmatprep.subr.bf16.mxu0 0
          %1496 = vmatpush1.bf16.msra.mxu0 0
          %1497 = vmatprep.subr.bf16.mxu0 0
          %1498 = vmatpush1.bf16.msra.mxu0 0
          %1499 = vmatprep.subr.bf16.mxu0 0
          %1500 = vmatpush1.bf16.msra.mxu0 0
          %1501 = vmatprep.subr.bf16.mxu0 0
          %1502 = vmatpush1.bf16.msra.mxu0 0
          %1503 = vmatprep.subr.bf16.mxu0 0
          %1504 = vmatpush1.bf16.msra.mxu0 0
          %1505 = vmatprep.subr.bf16.mxu0 %v1342
          %1506 = vmatpush1.bf16.msra.mxu0 %v1341
          %1507 = vmatprep.subr.bf16.mxu0 %v1338
          %1508 = vmatpush1.bf16.msra.mxu0 %v1337
          %1509 = vmatprep.subr.bf16.mxu0 0
          %1510 = vmatpush2.bf16.msra.mxu0 0
          %1511 = vmatprep.subr.bf16.mxu0 0
          %1512 = vmatpush2.bf16.msra.mxu0 0
          %1513 = vmatprep.subr.bf16.mxu0 0
          %1514 = vmatpush2.bf16.msra.mxu0 0
          %1515 = vmatprep.subr.bf16.mxu0 0
          %1516 = vmatpush2.bf16.msra.mxu0 0
          %1517 = vmatprep.subr.bf16.mxu0 0
          %1518 = vmatpush2.bf16.msra.mxu0 0
          %1519 = vmatprep.subr.bf16.mxu0 0
          %1520 = vmatpush2.bf16.msra.mxu0 0
          %1521 = vmatprep.subr.bf16.mxu0 0
          %1522 = vmatpush2.bf16.msra.mxu0 0
          %1523 = vmatprep.subr.bf16.mxu0 0
          %1524 = vmatpush2.bf16.msra.mxu0 0
          %1525 = vmatprep.mubr.bf16.mxu0 0
          %1526 = vmatmul.mubr.bf16.gmra.mxu0 %v1488
          %v1527 = vpop.f32.mrf.mxu0
          %v1528 = vadd.f32 0.0, %v1527
          %v1529 = vpop.f32.mrf.mxu0
          %v1530 = vadd.f32 0.0, %v1529
          %v1531 = vpop.f32.mrf.mxu0
          %v1532 = vadd.f32 0.0, %v1531
          %v1533 = vpop.f32.mrf.mxu0
          %v1534 = vadd.f32 0.0, %v1533
          %1535 = vmatprep.mubr.bf16.mxu0 0
          %1536 = vmatmul.mubr.bf16.gmra.mxu0 %v1491
          %v1537 = vpop.f32.mrf.mxu0
          %v1538 = vadd.f32 0.0, %v1537
          %v1539 = vpop.f32.mrf.mxu0
          %v1540 = vadd.f32 0.0, %v1539
          %v1541 = vpop.f32.mrf.mxu0
          %v1542 = vadd.f32 0.0, %v1541
          %v1543 = vpop.f32.mrf.mxu0
          %v1544 = vadd.f32 0.0, %v1543
          %1545 = vdwg.mxu0
          %1546 = vmatprep.subr.bf16.mxu0 0
          %1547 = vmatpush1.bf16.msra.mxu0 0
          %1548 = vmatprep.subr.bf16.mxu0 0
          %1549 = vmatpush1.bf16.msra.mxu0 0
          %1550 = vmatprep.subr.bf16.mxu0 0
          %1551 = vmatpush1.bf16.msra.mxu0 0
          %1552 = vmatprep.subr.bf16.mxu0 0
          %1553 = vmatpush1.bf16.msra.mxu0 0
          %1554 = vmatprep.subr.bf16.mxu0 0
          %1555 = vmatpush1.bf16.msra.mxu0 0
          %1556 = vmatprep.subr.bf16.mxu0 0
          %1557 = vmatpush1.bf16.msra.mxu0 0
          %1558 = vmatprep.subr.bf16.mxu0 %v1344
          %1559 = vmatpush1.bf16.msra.mxu0 %v1343
          %1560 = vmatprep.subr.bf16.mxu0 %v1340
          %1561 = vmatpush1.bf16.msra.mxu0 %v1339
          %1562 = vmatprep.subr.bf16.mxu0 0
          %1563 = vmatpush2.bf16.msra.mxu0 0
          %1564 = vmatprep.subr.bf16.mxu0 0
          %1565 = vmatpush2.bf16.msra.mxu0 0
          %1566 = vmatprep.subr.bf16.mxu0 0
          %1567 = vmatpush2.bf16.msra.mxu0 0
          %1568 = vmatprep.subr.bf16.mxu0 0
          %1569 = vmatpush2.bf16.msra.mxu0 0
          %1570 = vmatprep.subr.bf16.mxu0 0
          %1571 = vmatpush2.bf16.msra.mxu0 0
          %1572 = vmatprep.subr.bf16.mxu0 0
          %1573 = vmatpush2.bf16.msra.mxu0 0
          %1574 = vmatprep.subr.bf16.mxu0 0
          %1575 = vmatpush2.bf16.msra.mxu0 0
          %1576 = vmatprep.subr.bf16.mxu0 0
          %1577 = vmatpush2.bf16.msra.mxu0 0
          %1578 = vmatprep.mubr.bf16.mxu0 0
          %1579 = vmatmul.mubr.bf16.gmra.mxu0 %v1488
          %v1580 = vpop.f32.mrf.mxu0
          %v1581 = vadd.f32 0.0, %v1580
          %v1582 = vpop.f32.mrf.mxu0
          %v1583 = vadd.f32 0.0, %v1582
          %v1584 = vpop.f32.mrf.mxu0
          %v1585 = vadd.f32 0.0, %v1584
          %v1586 = vpop.f32.mrf.mxu0
          %v1587 = vadd.f32 0.0, %v1586
          %1588 = vmatprep.mubr.bf16.mxu0 0
          %1589 = vmatmul.mubr.bf16.gmra.mxu0 %v1491
          %v1590 = vpop.f32.mrf.mxu0
          %v1591 = vadd.f32 0.0, %v1590
          %v1592 = vpop.f32.mrf.mxu0
          %v1593 = vadd.f32 0.0, %v1592
          %v1594 = vpop.f32.mrf.mxu0
          %v1595 = vadd.f32 0.0, %v1594
          %v1596 = vpop.f32.mrf.mxu0
          %v1597 = vadd.f32 0.0, %v1596
          %1598 = vdwg.mxu0
          %s1599 = scalar_lea.vmem %s3, 32
          %v1600 = vld [vmem:[%s1599] sm:$0xf]
          %v1601 = vld [vmem:[%s1599 + $0x4] sm:$0xf]
          %v1602 = vld [vmem:[%s1599 + $0x8] sm:$0xf]
          %v1603 = vld [vmem:[%s1599 + $0xc] sm:$0xf]
          %v1608 = vunpack.c.l.b16 %v1600
          %v1609 = vunpack.c.l.b16 %v1601
          %v1610 = vunpack.c.l.b16 %v1602
          %v1611 = vunpack.c.l.b16 %v1603
          %v1612 = vpack.c.b16 %v1609, %v1608
          %v1613 = vpack.c.b16 %v1611, %v1610
          %v1615 = vsel %vm1359, %v1612, 0
          %v1618 = vsel %vm1359, %v1613, 0
          %1620 = vmatprep.subr.bf16.mxu0 0
          %1621 = vmatpush1.bf16.msra.mxu0 0
          %1622 = vmatprep.subr.bf16.mxu0 0
          %1623 = vmatpush1.bf16.msra.mxu0 0
          %1624 = vmatprep.subr.bf16.mxu0 0
          %1625 = vmatpush1.bf16.msra.mxu0 0
          %1626 = vmatprep.subr.bf16.mxu0 0
          %1627 = vmatpush1.bf16.msra.mxu0 0
          %1628 = vmatprep.subr.bf16.mxu0 0
          %1629 = vmatpush1.bf16.msra.mxu0 0
          %1630 = vmatprep.subr.bf16.mxu0 0
          %1631 = vmatpush1.bf16.msra.mxu0 0
          %1632 = vmatprep.subr.bf16.mxu0 %v1342
          %1633 = vmatpush1.bf16.msra.mxu0 %v1341
          %1634 = vmatprep.subr.bf16.mxu0 %v1338
          %1635 = vmatpush1.bf16.msra.mxu0 %v1337
          %1636 = vmatprep.subr.bf16.mxu0 0
          %1637 = vmatpush2.bf16.msra.mxu0 0
          %1638 = vmatprep.subr.bf16.mxu0 0
          %1639 = vmatpush2.bf16.msra.mxu0 0
          %1640 = vmatprep.subr.bf16.mxu0 0
          %1641 = vmatpush2.bf16.msra.mxu0 0
          %1642 = vmatprep.subr.bf16.mxu0 0
          %1643 = vmatpush2.bf16.msra.mxu0 0
          %1644 = vmatprep.subr.bf16.mxu0 0
          %1645 = vmatpush2.bf16.msra.mxu0 0
          %1646 = vmatprep.subr.bf16.mxu0 0
          %1647 = vmatpush2.bf16.msra.mxu0 0
          %1648 = vmatprep.subr.bf16.mxu0 0
          %1649 = vmatpush2.bf16.msra.mxu0 0
          %1650 = vmatprep.subr.bf16.mxu0 0
          %1651 = vmatpush2.bf16.msra.mxu0 0
          %1652 = vmatprep.mubr.bf16.mxu0 0
          %1653 = vmatmul.mubr.bf16.gmra.mxu0 %v1615
          %v1654 = vpop.f32.mrf.mxu0
          %v1655 = vadd.f32 0.0, %v1654
          %v1656 = vpop.f32.mrf.mxu0
          %v1657 = vadd.f32 0.0, %v1656
          %v1658 = vpop.f32.mrf.mxu0
          %v1659 = vadd.f32 0.0, %v1658
          %v1660 = vpop.f32.mrf.mxu0
          %v1661 = vadd.f32 0.0, %v1660
          %1662 = vmatprep.mubr.bf16.mxu0 0
          %1663 = vmatmul.mubr.bf16.gmra.mxu0 %v1618
          %v1664 = vpop.f32.mrf.mxu0
          %v1665 = vadd.f32 0.0, %v1664
          %v1666 = vpop.f32.mrf.mxu0
          %v1667 = vadd.f32 0.0, %v1666
          %v1668 = vpop.f32.mrf.mxu0
          %v1669 = vadd.f32 0.0, %v1668
          %v1670 = vpop.f32.mrf.mxu0
          %v1671 = vadd.f32 0.0, %v1670
          %1672 = vdwg.mxu0
          %1673 = vmatprep.subr.bf16.mxu0 0
          %1674 = vmatpush1.bf16.msra.mxu0 0
          %1675 = vmatprep.subr.bf16.mxu0 0
          %1676 = vmatpush1.bf16.msra.mxu0 0
          %1677 = vmatprep.subr.bf16.mxu0 0
          %1678 = vmatpush1.bf16.msra.mxu0 0
          %1679 = vmatprep.subr.bf16.mxu0 0
          %1680 = vmatpush1.bf16.msra.mxu0 0
          %1681 = vmatprep.subr.bf16.mxu0 0
          %1682 = vmatpush1.bf16.msra.mxu0 0
          %1683 = vmatprep.subr.bf16.mxu0 0
          %1684 = vmatpush1.bf16.msra.mxu0 0
          %1685 = vmatprep.subr.bf16.mxu0 %v1344
          %1686 = vmatpush1.bf16.msra.mxu0 %v1343
          %1687 = vmatprep.subr.bf16.mxu0 %v1340
          %1688 = vmatpush1.bf16.msra.mxu0 %v1339
          %1689 = vmatprep.subr.bf16.mxu0 0
          %1690 = vmatpush2.bf16.msra.mxu0 0
          %1691 = vmatprep.subr.bf16.mxu0 0
          %1692 = vmatpush2.bf16.msra.mxu0 0
          %1693 = vmatprep.subr.bf16.mxu0 0
          %1694 = vmatpush2.bf16.msra.mxu0 0
          %1695 = vmatprep.subr.bf16.mxu0 0
          %1696 = vmatpush2.bf16.msra.mxu0 0
          %1697 = vmatprep.subr.bf16.mxu0 0
          %1698 = vmatpush2.bf16.msra.mxu0 0
          %1699 = vmatprep.subr.bf16.mxu0 0
          %1700 = vmatpush2.bf16.msra.mxu0 0
          %1701 = vmatprep.subr.bf16.mxu0 0
          %1702 = vmatpush2.bf16.msra.mxu0 0
          %1703 = vmatprep.subr.bf16.mxu0 0
          %1704 = vmatpush2.bf16.msra.mxu0 0
          %1705 = vmatprep.mubr.bf16.mxu0 0
          %1706 = vmatmul.mubr.bf16.gmra.mxu0 %v1615
          %v1707 = vpop.f32.mrf.mxu0
          %v1708 = vadd.f32 0.0, %v1707
          %v1709 = vpop.f32.mrf.mxu0
          %v1710 = vadd.f32 0.0, %v1709
          %v1711 = vpop.f32.mrf.mxu0
          %v1712 = vadd.f32 0.0, %v1711
          %v1713 = vpop.f32.mrf.mxu0
          %v1714 = vadd.f32 0.0, %v1713
          %1715 = vmatprep.mubr.bf16.mxu0 0
          %1716 = vmatmul.mubr.bf16.gmra.mxu0 %v1618
          %v1717 = vpop.f32.mrf.mxu0
          %v1718 = vadd.f32 0.0, %v1717
          %v1719 = vpop.f32.mrf.mxu0
          %v1720 = vadd.f32 0.0, %v1719
          %v1721 = vpop.f32.mrf.mxu0
          %v1722 = vadd.f32 0.0, %v1721
          %v1723 = vpop.f32.mrf.mxu0
          %v1724 = vadd.f32 0.0, %v1723
          %1725 = vdwg.mxu0
          %1726 = vxpose.xlu0.b32.start [1/16] %v1401, 128
          %1727 = vxpose.xlu0.b32.cont [2/16] %v1405, 128
          %1728 = vxpose.xlu0.b32.cont [3/16] %v1411, 128
          %1729 = vxpose.xlu0.b32.cont [4/16] %v1415, 128
          %1730 = vxpose.xlu0.b32.cont [5/16] 0.0, 128
          %1731 = vxpose.xlu0.b32.cont [6/16] 0.0, 128
          %1732 = vxpose.xlu0.b32.cont [7/16] 0.0, 128
          %1733 = vxpose.xlu0.b32.cont [8/16] 0.0, 128
          %1734 = vxpose.xlu0.b32.cont [9/16] 0.0, 128
          %1735 = vxpose.xlu0.b32.cont [10/16] 0.0, 128
          %1736 = vxpose.xlu0.b32.cont [11/16] 0.0, 128
          %1737 = vxpose.xlu0.b32.cont [12/16] 0.0, 128
          %1738 = vxpose.xlu0.b32.cont [13/16] 0.0, 128
          %1739 = vxpose.xlu0.b32.cont [14/16] 0.0, 128
          %1740 = vxpose.xlu0.b32.cont [15/16] 0.0, 128
          %1741 = vxpose.xlu0.b32.end [16/16] 0.0, 128
          %v1742 = vpop.trf.xlu0
          %v1743 = vpop.trf.xlu0
          %v1744 = vpop.trf.xlu0
          %v1745 = vpop.trf.xlu0
          %v1746 = vpop.trf.xlu0
          %v1747 = vpop.trf.xlu0
          %v1748 = vpop.trf.xlu0
          %v1749 = vpop.trf.xlu0
          %v1750 = vpop.trf.xlu0
          %v1751 = vpop.trf.xlu0
          %v1752 = vpop.trf.xlu0
          %v1753 = vpop.trf.xlu0
          %v1754 = vpop.trf.xlu0
          %v1755 = vpop.trf.xlu0
          %v1756 = vpop.trf.xlu0
          %v1757 = vpop.trf.xlu0
          %1758 = vxpose.xlu0.b32.start [1/16] %v1403, 128
          %1759 = vxpose.xlu0.b32.cont [2/16] %v1407, 128
          %1760 = vxpose.xlu0.b32.cont [3/16] %v1413, 128
          %1761 = vxpose.xlu0.b32.cont [4/16] %v1417, 128
          %1762 = vxpose.xlu0.b32.cont [5/16] 0.0, 128
          %1763 = vxpose.xlu0.b32.cont [6/16] 0.0, 128
          %1764 = vxpose.xlu0.b32.cont [7/16] 0.0, 128
          %1765 = vxpose.xlu0.b32.cont [8/16] 0.0, 128
          %1766 = vxpose.xlu0.b32.cont [9/16] 0.0, 128
          %1767 = vxpose.xlu0.b32.cont [10/16] 0.0, 128
          %1768 = vxpose.xlu0.b32.cont [11/16] 0.0, 128
          %1769 = vxpose.xlu0.b32.cont [12/16] 0.0, 128
          %1770 = vxpose.xlu0.b32.cont [13/16] 0.0, 128
          %1771 = vxpose.xlu0.b32.cont [14/16] 0.0, 128
          %1772 = vxpose.xlu0.b32.cont [15/16] 0.0, 128
          %1773 = vxpose.xlu0.b32.end [16/16] 0.0, 128
          %v1774 = vpop.trf.xlu0
          %v1775 = vpop.trf.xlu0
          %v1776 = vpop.trf.xlu0
          %v1777 = vpop.trf.xlu0
          %v1778 = vpop.trf.xlu0
          %v1779 = vpop.trf.xlu0
          %v1780 = vpop.trf.xlu0
          %v1781 = vpop.trf.xlu0
          %v1782 = vpop.trf.xlu0
          %v1783 = vpop.trf.xlu0
          %v1784 = vpop.trf.xlu0
          %v1785 = vpop.trf.xlu0
          %v1786 = vpop.trf.xlu0
          %v1787 = vpop.trf.xlu0
          %v1788 = vpop.trf.xlu0
          %v1789 = vpop.trf.xlu0
          %v1790 = vpack.c.bf16 %v1743, %v1742
          %v1791 = vpack.c.bf16 %v1745, %v1744
          %v1792 = vpack.c.bf16 %v1747, %v1746
          %v1793 = vpack.c.bf16 %v1749, %v1748
          %v1794 = vpack.c.bf16 %v1751, %v1750
          %v1795 = vpack.c.bf16 %v1753, %v1752
          %v1796 = vpack.c.bf16 %v1755, %v1754
          %v1797 = vpack.c.bf16 %v1757, %v1756
          %v1798 = vpack.c.bf16 %v1775, %v1774
          %v1799 = vpack.c.bf16 %v1777, %v1776
          %v1800 = vpack.c.bf16 %v1779, %v1778
          %v1801 = vpack.c.bf16 %v1781, %v1780
          %v1802 = vpack.c.bf16 %v1783, %v1782
          %v1803 = vpack.c.bf16 %v1785, %v1784
          %v1804 = vpack.c.bf16 %v1787, %v1786
          %v1805 = vpack.c.bf16 %v1789, %v1788
          %v1806 = vpack.c.bf16 %v1532, %v1528
          %v1807 = vpack.c.bf16 %v1534, %v1530
          %v1808 = vpack.c.bf16 %v1542, %v1538
          %v1809 = vpack.c.bf16 %v1544, %v1540
          %v1810 = vpack.c.bf16 %v1659, %v1655
          %v1811 = vpack.c.bf16 %v1661, %v1657
          %v1812 = vpack.c.bf16 %v1669, %v1665
          %v1813 = vpack.c.bf16 %v1671, %v1667
          %v1815 = vsel %vm1359, %v1790, 0
          %v1818 = vsel %vm1359, %v1791, 0
          %v1821 = vsel %vm1359, %v1792, 0
          %v1824 = vsel %vm1359, %v1793, 0
          %v1827 = vsel %vm1359, %v1794, 0
          %v1830 = vsel %vm1359, %v1795, 0
          %v1833 = vsel %vm1359, %v1796, 0
          %v1836 = vsel %vm1359, %v1797, 0
          %v1839 = vsel %vm1359, %v1798, 0
          %v1842 = vsel %vm1359, %v1799, 0
          %v1845 = vsel %vm1359, %v1800, 0
          %v1848 = vsel %vm1359, %v1801, 0
          %v1851 = vsel %vm1359, %v1802, 0
          %v1854 = vsel %vm1359, %v1803, 0
          %v1857 = vsel %vm1359, %v1804, 0
          %v1860 = vsel %vm1359, %v1805, 0
          %1862 = vmatprep.subr.bf16.mxu0 0
          %1863 = vmatpush1.bf16.msra.mxu0 0
          %1864 = vmatprep.subr.bf16.mxu0 0
          %1865 = vmatpush1.bf16.msra.mxu0 0
          %1866 = vmatprep.subr.bf16.mxu0 0
          %1867 = vmatpush1.bf16.msra.mxu0 0
          %1868 = vmatprep.subr.bf16.mxu0 0
          %1869 = vmatpush1.bf16.msra.mxu0 0
          %1870 = vmatprep.subr.bf16.mxu0 0
          %1871 = vmatpush1.bf16.msra.mxu0 0
          %1872 = vmatprep.subr.bf16.mxu0 0
          %1873 = vmatpush1.bf16.msra.mxu0 0
          %1874 = vmatprep.subr.bf16.mxu0 %v1809
          %1875 = vmatpush1.bf16.msra.mxu0 %v1808
          %1876 = vmatprep.subr.bf16.mxu0 %v1807
          %1877 = vmatpush1.bf16.msra.mxu0 %v1806
          %1878 = vmatprep.subr.bf16.mxu0 0
          %1879 = vmatpush2.bf16.msra.mxu0 0
          %1880 = vmatprep.subr.bf16.mxu0 0
          %1881 = vmatpush2.bf16.msra.mxu0 0
          %1882 = vmatprep.subr.bf16.mxu0 0
          %1883 = vmatpush2.bf16.msra.mxu0 0
          %1884 = vmatprep.subr.bf16.mxu0 0
          %1885 = vmatpush2.bf16.msra.mxu0 0
          %1886 = vmatprep.subr.bf16.mxu0 0
          %1887 = vmatpush2.bf16.msra.mxu0 0
          %1888 = vmatprep.subr.bf16.mxu0 0
          %1889 = vmatpush2.bf16.msra.mxu0 0
          %1890 = vmatprep.subr.bf16.mxu0 0
          %1891 = vmatpush2.bf16.msra.mxu0 0
          %1892 = vmatprep.subr.bf16.mxu0 0
          %1893 = vmatpush2.bf16.msra.mxu0 0
          %1894 = vmatprep.mubr.bf16.mxu0 0
          %1895 = vmatmul.mubr.bf16.gmra.mxu0 %v1815
          %v1896 = vpop.f32.mrf.mxu0
          %v1897 = vadd.f32 0.0, %v1896
          %v1898 = vpop.f32.mrf.mxu0
          %v1899 = vadd.f32 0.0, %v1898
          %v1900 = vpop.f32.mrf.mxu0
          %v1901 = vadd.f32 0.0, %v1900
          %v1902 = vpop.f32.mrf.mxu0
          %v1903 = vadd.f32 0.0, %v1902
          %1904 = vmatprep.mubr.bf16.mxu0 0
          %1905 = vmatmul.mubr.bf16.gmra.mxu0 %v1818
          %v1906 = vpop.f32.mrf.mxu0
          %v1907 = vadd.f32 0.0, %v1906
          %v1908 = vpop.f32.mrf.mxu0
          %v1909 = vadd.f32 0.0, %v1908
          %v1910 = vpop.f32.mrf.mxu0
          %v1911 = vadd.f32 0.0, %v1910
          %v1912 = vpop.f32.mrf.mxu0
          %v1913 = vadd.f32 0.0, %v1912
          %1914 = vmatprep.mubr.bf16.mxu0 0
          %1915 = vmatmul.mubr.bf16.gmra.mxu0 %v1821
          %v1916 = vpop.f32.mrf.mxu0
          %v1917 = vadd.f32 0.0, %v1916
          %v1918 = vpop.f32.mrf.mxu0
          %v1919 = vadd.f32 0.0, %v1918
          %v1920 = vpop.f32.mrf.mxu0
          %v1921 = vadd.f32 0.0, %v1920
          %v1922 = vpop.f32.mrf.mxu0
          %v1923 = vadd.f32 0.0, %v1922
          %1924 = vmatprep.mubr.bf16.mxu0 0
          %1925 = vmatmul.mubr.bf16.gmra.mxu0 %v1824
          %v1926 = vpop.f32.mrf.mxu0
          %v1927 = vadd.f32 0.0, %v1926
          %v1928 = vpop.f32.mrf.mxu0
          %v1929 = vadd.f32 0.0, %v1928
          %v1930 = vpop.f32.mrf.mxu0
          %v1931 = vadd.f32 0.0, %v1930
          %v1932 = vpop.f32.mrf.mxu0
          %v1933 = vadd.f32 0.0, %v1932
          %1934 = vmatprep.mubr.bf16.mxu0 0
          %1935 = vmatmul.mubr.bf16.gmra.mxu0 %v1827
          %v1936 = vpop.f32.mrf.mxu0
          %v1937 = vadd.f32 0.0, %v1936
          %v1938 = vpop.f32.mrf.mxu0
          %v1939 = vadd.f32 0.0, %v1938
          %v1940 = vpop.f32.mrf.mxu0
          %v1941 = vadd.f32 0.0, %v1940
          %v1942 = vpop.f32.mrf.mxu0
          %v1943 = vadd.f32 0.0, %v1942
          %1944 = vmatprep.mubr.bf16.mxu0 0
          %1945 = vmatmul.mubr.bf16.gmra.mxu0 %v1830
          %v1946 = vpop.f32.mrf.mxu0
          %v1947 = vadd.f32 0.0, %v1946
          %v1948 = vpop.f32.mrf.mxu0
          %v1949 = vadd.f32 0.0, %v1948
          %v1950 = vpop.f32.mrf.mxu0
          %v1951 = vadd.f32 0.0, %v1950
          %v1952 = vpop.f32.mrf.mxu0
          %v1953 = vadd.f32 0.0, %v1952
          %1954 = vmatprep.mubr.bf16.mxu0 0
          %1955 = vmatmul.mubr.bf16.gmra.mxu0 %v1833
          %v1956 = vpop.f32.mrf.mxu0
          %v1957 = vadd.f32 0.0, %v1956
          %v1958 = vpop.f32.mrf.mxu0
          %v1959 = vadd.f32 0.0, %v1958
          %v1960 = vpop.f32.mrf.mxu0
          %v1961 = vadd.f32 0.0, %v1960
          %v1962 = vpop.f32.mrf.mxu0
          %v1963 = vadd.f32 0.0, %v1962
          %1964 = vmatprep.mubr.bf16.mxu0 0
          %1965 = vmatmul.mubr.bf16.gmra.mxu0 %v1836
          %v1966 = vpop.f32.mrf.mxu0
          %v1967 = vadd.f32 0.0, %v1966
          %v1968 = vpop.f32.mrf.mxu0
          %v1969 = vadd.f32 0.0, %v1968
          %v1970 = vpop.f32.mrf.mxu0
          %v1971 = vadd.f32 0.0, %v1970
          %v1972 = vpop.f32.mrf.mxu0
          %v1973 = vadd.f32 0.0, %v1972
          %1974 = vmatprep.mubr.bf16.mxu0 0
          %1975 = vmatmul.mubr.bf16.gmra.mxu0 %v1839
          %v1976 = vpop.f32.mrf.mxu0
          %v1977 = vadd.f32 0.0, %v1976
          %v1978 = vpop.f32.mrf.mxu0
          %v1979 = vadd.f32 0.0, %v1978
          %v1980 = vpop.f32.mrf.mxu0
          %v1981 = vadd.f32 0.0, %v1980
          %v1982 = vpop.f32.mrf.mxu0
          %v1983 = vadd.f32 0.0, %v1982
          %1984 = vmatprep.mubr.bf16.mxu0 0
          %1985 = vmatmul.mubr.bf16.gmra.mxu0 %v1842
          %v1986 = vpop.f32.mrf.mxu0
          %v1987 = vadd.f32 0.0, %v1986
          %v1988 = vpop.f32.mrf.mxu0
          %v1989 = vadd.f32 0.0, %v1988
          %v1990 = vpop.f32.mrf.mxu0
          %v1991 = vadd.f32 0.0, %v1990
          %v1992 = vpop.f32.mrf.mxu0
          %v1993 = vadd.f32 0.0, %v1992
          %1994 = vmatprep.mubr.bf16.mxu0 0
          %1995 = vmatmul.mubr.bf16.gmra.mxu0 %v1845
          %v1996 = vpop.f32.mrf.mxu0
          %v1997 = vadd.f32 0.0, %v1996
          %v1998 = vpop.f32.mrf.mxu0
          %v1999 = vadd.f32 0.0, %v1998
          %v2000 = vpop.f32.mrf.mxu0
          %v2001 = vadd.f32 0.0, %v2000
          %v2002 = vpop.f32.mrf.mxu0
          %v2003 = vadd.f32 0.0, %v2002
          %2004 = vmatprep.mubr.bf16.mxu0 0
          %2005 = vmatmul.mubr.bf16.gmra.mxu0 %v1848
          %v2006 = vpop.f32.mrf.mxu0
          %v2007 = vadd.f32 0.0, %v2006
          %v2008 = vpop.f32.mrf.mxu0
          %v2009 = vadd.f32 0.0, %v2008
          %v2010 = vpop.f32.mrf.mxu0
          %v2011 = vadd.f32 0.0, %v2010
          %v2012 = vpop.f32.mrf.mxu0
          %v2013 = vadd.f32 0.0, %v2012
          %2014 = vmatprep.mubr.bf16.mxu0 0
          %2015 = vmatmul.mubr.bf16.gmra.mxu0 %v1851
          %v2016 = vpop.f32.mrf.mxu0
          %v2017 = vadd.f32 0.0, %v2016
          %v2018 = vpop.f32.mrf.mxu0
          %v2019 = vadd.f32 0.0, %v2018
          %v2020 = vpop.f32.mrf.mxu0
          %v2021 = vadd.f32 0.0, %v2020
          %v2022 = vpop.f32.mrf.mxu0
          %v2023 = vadd.f32 0.0, %v2022
          %2024 = vmatprep.mubr.bf16.mxu0 0
          %2025 = vmatmul.mubr.bf16.gmra.mxu0 %v1854
          %v2026 = vpop.f32.mrf.mxu0
          %v2027 = vadd.f32 0.0, %v2026
          %v2028 = vpop.f32.mrf.mxu0
          %v2029 = vadd.f32 0.0, %v2028
          %v2030 = vpop.f32.mrf.mxu0
          %v2031 = vadd.f32 0.0, %v2030
          %v2032 = vpop.f32.mrf.mxu0
          %v2033 = vadd.f32 0.0, %v2032
          %2034 = vmatprep.mubr.bf16.mxu0 0
          %2035 = vmatmul.mubr.bf16.gmra.mxu0 %v1857
          %v2036 = vpop.f32.mrf.mxu0
          %v2037 = vadd.f32 0.0, %v2036
          %v2038 = vpop.f32.mrf.mxu0
          %v2039 = vadd.f32 0.0, %v2038
          %v2040 = vpop.f32.mrf.mxu0
          %v2041 = vadd.f32 0.0, %v2040
          %v2042 = vpop.f32.mrf.mxu0
          %v2043 = vadd.f32 0.0, %v2042
          %2044 = vmatprep.mubr.bf16.mxu0 0
          %2045 = vmatmul.mubr.bf16.gmra.mxu0 %v1860
          %v2046 = vpop.f32.mrf.mxu0
          %v2047 = vadd.f32 0.0, %v2046
          %v2048 = vpop.f32.mrf.mxu0
          %v2049 = vadd.f32 0.0, %v2048
          %v2050 = vpop.f32.mrf.mxu0
          %v2051 = vadd.f32 0.0, %v2050
          %v2052 = vpop.f32.mrf.mxu0
          %v2053 = vadd.f32 0.0, %v2052
          %2054 = vdwg.mxu0
          %v2055 = vmax.f32 %v1897, %v1899
          %2056 = vmax.xlane.f32.xlu0 %v2055
          %v2057 = vpop.xlane.xlu0 %2056
          %v2058 = vmax.f32 %v1901, %v1903
          %2059 = vmax.xlane.f32.xlu0 %v2058
          %v2060 = vpop.xlane.xlu0 %2059
          %v2061 = vmax.f32 %v1907, %v1909
          %2062 = vmax.xlane.f32.xlu0 %v2061
          %v2063 = vpop.xlane.xlu0 %2062
          %v2064 = vmax.f32 %v1911, %v1913
          %2065 = vmax.xlane.f32.xlu0 %v2064
          %v2066 = vpop.xlane.xlu0 %2065
          %v2067 = vmax.f32 %v1917, %v1919
          %2068 = vmax.xlane.f32.xlu0 %v2067
          %v2069 = vpop.xlane.xlu0 %2068
          %v2070 = vmax.f32 %v1921, %v1923
          %2071 = vmax.xlane.f32.xlu0 %v2070
          %v2072 = vpop.xlane.xlu0 %2071
          %v2073 = vmax.f32 %v1927, %v1929
          %2074 = vmax.xlane.f32.xlu0 %v2073
          %v2075 = vpop.xlane.xlu0 %2074
          %v2076 = vmax.f32 %v1931, %v1933
          %2077 = vmax.xlane.f32.xlu0 %v2076
          %v2078 = vpop.xlane.xlu0 %2077
          %v2079 = vmax.f32 %v1937, %v1939
          %2080 = vmax.xlane.f32.xlu0 %v2079
          %v2081 = vpop.xlane.xlu0 %2080
          %v2082 = vmax.f32 %v1941, %v1943
          %2083 = vmax.xlane.f32.xlu0 %v2082
          %v2084 = vpop.xlane.xlu0 %2083
          %v2085 = vmax.f32 %v1947, %v1949
          %2086 = vmax.xlane.f32.xlu0 %v2085
          %v2087 = vpop.xlane.xlu0 %2086
          %v2088 = vmax.f32 %v1951, %v1953
          %2089 = vmax.xlane.f32.xlu0 %v2088
          %v2090 = vpop.xlane.xlu0 %2089
          %v2091 = vmax.f32 %v1957, %v1959
          %2092 = vmax.xlane.f32.xlu0 %v2091
          %v2093 = vpop.xlane.xlu0 %2092
          %v2094 = vmax.f32 %v1961, %v1963
          %2095 = vmax.xlane.f32.xlu0 %v2094
          %v2096 = vpop.xlane.xlu0 %2095
          %v2097 = vmax.f32 %v1967, %v1969
          %2098 = vmax.xlane.f32.xlu0 %v2097
          %v2099 = vpop.xlane.xlu0 %2098
          %v2100 = vmax.f32 %v1971, %v1973
          %2101 = vmax.xlane.f32.xlu0 %v2100
          %v2102 = vpop.xlane.xlu0 %2101
          %v2103 = vmax.f32 %v1977, %v1979
          %2104 = vmax.xlane.f32.xlu0 %v2103
          %v2105 = vpop.xlane.xlu0 %2104
          %v2106 = vmax.f32 %v1981, %v1983
          %2107 = vmax.xlane.f32.xlu0 %v2106
          %v2108 = vpop.xlane.xlu0 %2107
          %v2109 = vmax.f32 %v1987, %v1989
          %2110 = vmax.xlane.f32.xlu0 %v2109
          %v2111 = vpop.xlane.xlu0 %2110
          %v2112 = vmax.f32 %v1991, %v1993
          %2113 = vmax.xlane.f32.xlu0 %v2112
          %v2114 = vpop.xlane.xlu0 %2113
          %v2115 = vmax.f32 %v1997, %v1999
          %2116 = vmax.xlane.f32.xlu0 %v2115
          %v2117 = vpop.xlane.xlu0 %2116
          %v2118 = vmax.f32 %v2001, %v2003
          %2119 = vmax.xlane.f32.xlu0 %v2118
          %v2120 = vpop.xlane.xlu0 %2119
          %v2121 = vmax.f32 %v2007, %v2009
          %2122 = vmax.xlane.f32.xlu0 %v2121
          %v2123 = vpop.xlane.xlu0 %2122
          %v2124 = vmax.f32 %v2011, %v2013
          %2125 = vmax.xlane.f32.xlu0 %v2124
          %v2126 = vpop.xlane.xlu0 %2125
          %v2127 = vmax.f32 %v2017, %v2019
          %2128 = vmax.xlane.f32.xlu0 %v2127
          %v2129 = vpop.xlane.xlu0 %2128
          %v2130 = vmax.f32 %v2021, %v2023
          %2131 = vmax.xlane.f32.xlu0 %v2130
          %v2132 = vpop.xlane.xlu0 %2131
          %v2133 = vmax.f32 %v2027, %v2029
          %2134 = vmax.xlane.f32.xlu0 %v2133
          %v2135 = vpop.xlane.xlu0 %2134
          %v2136 = vmax.f32 %v2031, %v2033
          %2137 = vmax.xlane.f32.xlu0 %v2136
          %v2138 = vpop.xlane.xlu0 %2137
          %v2139 = vmax.f32 %v2037, %v2039
          %2140 = vmax.xlane.f32.xlu0 %v2139
          %v2141 = vpop.xlane.xlu0 %2140
          %v2142 = vmax.f32 %v2041, %v2043
          %2143 = vmax.xlane.f32.xlu0 %v2142
          %v2144 = vpop.xlane.xlu0 %2143
          %v2145 = vmax.f32 %v2047, %v2049
          %2146 = vmax.xlane.f32.xlu0 %v2145
          %v2147 = vpop.xlane.xlu0 %2146
          %v2148 = vmax.f32 %v2051, %v2053
          %2149 = vmax.xlane.f32.xlu0 %v2148
          %v2150 = vpop.xlane.xlu0 %2149
          %v2151 = vsub.f32 %v1897, %v2057
          %v2152 = vsub.f32 %v1899, %v2057
          %v2153 = vsub.f32 %v1901, %v2060
          %v2154 = vsub.f32 %v1903, %v2060
          %v2155 = vsub.f32 %v1907, %v2063
          %v2156 = vsub.f32 %v1909, %v2063
          %v2157 = vsub.f32 %v1911, %v2066
          %v2158 = vsub.f32 %v1913, %v2066
          %v2159 = vsub.f32 %v1917, %v2069
          %v2160 = vsub.f32 %v1919, %v2069
          %v2161 = vsub.f32 %v1921, %v2072
          %v2162 = vsub.f32 %v1923, %v2072
          %v2163 = vsub.f32 %v1927, %v2075
          %v2164 = vsub.f32 %v1929, %v2075
          %v2165 = vsub.f32 %v1931, %v2078
          %v2166 = vsub.f32 %v1933, %v2078
          %v2167 = vsub.f32 %v1937, %v2081
          %v2168 = vsub.f32 %v1939, %v2081
          %v2169 = vsub.f32 %v1941, %v2084
          %v2170 = vsub.f32 %v1943, %v2084
          %v2171 = vsub.f32 %v1947, %v2087
          %v2172 = vsub.f32 %v1949, %v2087
          %v2173 = vsub.f32 %v1951, %v2090
          %v2174 = vsub.f32 %v1953, %v2090
          %v2175 = vsub.f32 %v1957, %v2093
          %v2176 = vsub.f32 %v1959, %v2093
          %v2177 = vsub.f32 %v1961, %v2096
          %v2178 = vsub.f32 %v1963, %v2096
          %v2179 = vsub.f32 %v1967, %v2099
          %v2180 = vsub.f32 %v1969, %v2099
          %v2181 = vsub.f32 %v1971, %v2102
          %v2182 = vsub.f32 %v1973, %v2102
          %v2183 = vsub.f32 %v1977, %v2105
          %v2184 = vsub.f32 %v1979, %v2105
          %v2185 = vsub.f32 %v1981, %v2108
          %v2186 = vsub.f32 %v1983, %v2108
          %v2187 = vsub.f32 %v1987, %v2111
          %v2188 = vsub.f32 %v1989, %v2111
          %v2189 = vsub.f32 %v1991, %v2114
          %v2190 = vsub.f32 %v1993, %v2114
          %v2191 = vsub.f32 %v1997, %v2117
          %v2192 = vsub.f32 %v1999, %v2117
          %v2193 = vsub.f32 %v2001, %v2120
          %v2194 = vsub.f32 %v2003, %v2120
          %v2195 = vsub.f32 %v2007, %v2123
          %v2196 = vsub.f32 %v2009, %v2123
          %v2197 = vsub.f32 %v2011, %v2126
          %v2198 = vsub.f32 %v2013, %v2126
          %v2199 = vsub.f32 %v2017, %v2129
          %v2200 = vsub.f32 %v2019, %v2129
          %v2201 = vsub.f32 %v2021, %v2132
          %v2202 = vsub.f32 %v2023, %v2132
          %v2203 = vsub.f32 %v2027, %v2135
          %v2204 = vsub.f32 %v2029, %v2135
          %v2205 = vsub.f32 %v2031, %v2138
          %v2206 = vsub.f32 %v2033, %v2138
          %v2207 = vsub.f32 %v2037, %v2141
          %v2208 = vsub.f32 %v2039, %v2141
          %v2209 = vsub.f32 %v2041, %v2144
          %v2210 = vsub.f32 %v2043, %v2144
          %v2211 = vsub.f32 %v2047, %v2147
          %v2212 = vsub.f32 %v2049, %v2147
          %v2213 = vsub.f32 %v2051, %v2150
          %v2214 = vsub.f32 %v2053, %v2150
          %v2215 = vmul.f32 %v2151, 1.442695
          %v2216 = vpow.pop %v2215
          %v2217 = vmul.f32 %v2152, 1.442695
          %v2218 = vpow.pop %v2217
          %v2219 = vmul.f32 %v2153, 1.442695
          %v2220 = vpow.pop %v2219
          %v2221 = vmul.f32 %v2154, 1.442695
          %v2222 = vpow.pop %v2221
          %v2223 = vmul.f32 %v2155, 1.442695
          %v2224 = vpow.pop %v2223
          %v2225 = vmul.f32 %v2156, 1.442695
          %v2226 = vpow.pop %v2225
          %v2227 = vmul.f32 %v2157, 1.442695
          %v2228 = vpow.pop %v2227
          %v2229 = vmul.f32 %v2158, 1.442695
          %v2230 = vpow.pop %v2229
          %v2231 = vmul.f32 %v2159, 1.442695
          %v2232 = vpow.pop %v2231
          %v2233 = vmul.f32 %v2160, 1.442695
          %v2234 = vpow.pop %v2233
          %v2235 = vmul.f32 %v2161, 1.442695
          %v2236 = vpow.pop %v2235
          %v2237 = vmul.f32 %v2162, 1.442695
          %v2238 = vpow.pop %v2237
          %v2239 = vmul.f32 %v2163, 1.442695
          %v2240 = vpow.pop %v2239
          %v2241 = vmul.f32 %v2164, 1.442695
          %v2242 = vpow.pop %v2241
          %v2243 = vmul.f32 %v2165, 1.442695
          %v2244 = vpow.pop %v2243
          %v2245 = vmul.f32 %v2166, 1.442695
          %v2246 = vpow.pop %v2245
          %v2247 = vmul.f32 %v2167, 1.442695
          %v2248 = vpow.pop %v2247
          %v2249 = vmul.f32 %v2168, 1.442695
          %v2250 = vpow.pop %v2249
          %v2251 = vmul.f32 %v2169, 1.442695
          %v2252 = vpow.pop %v2251
          %v2253 = vmul.f32 %v2170, 1.442695
          %v2254 = vpow.pop %v2253
          %v2255 = vmul.f32 %v2171, 1.442695
          %v2256 = vpow.pop %v2255
          %v2257 = vmul.f32 %v2172, 1.442695
          %v2258 = vpow.pop %v2257
          %v2259 = vmul.f32 %v2173, 1.442695
          %v2260 = vpow.pop %v2259
          %v2261 = vmul.f32 %v2174, 1.442695
          %v2262 = vpow.pop %v2261
          %v2263 = vmul.f32 %v2175, 1.442695
          %v2264 = vpow.pop %v2263
          %v2265 = vmul.f32 %v2176, 1.442695
          %v2266 = vpow.pop %v2265
          %v2267 = vmul.f32 %v2177, 1.442695
          %v2268 = vpow.pop %v2267
          %v2269 = vmul.f32 %v2178, 1.442695
          %v2270 = vpow.pop %v2269
          %v2271 = vmul.f32 %v2179, 1.442695
          %v2272 = vpow.pop %v2271
          %v2273 = vmul.f32 %v2180, 1.442695
          %v2274 = vpow.pop %v2273
          %v2275 = vmul.f32 %v2181, 1.442695
          %v2276 = vpow.pop %v2275
          %v2277 = vmul.f32 %v2182, 1.442695
          %v2278 = vpow.pop %v2277
          %v2279 = vmul.f32 %v2183, 1.442695
          %v2280 = vpow.pop %v2279
          %v2281 = vmul.f32 %v2184, 1.442695
          %v2282 = vpow.pop %v2281
          %v2283 = vmul.f32 %v2185, 1.442695
          %v2284 = vpow.pop %v2283
          %v2285 = vmul.f32 %v2186, 1.442695
          %v2286 = vpow.pop %v2285
          %v2287 = vmul.f32 %v2187, 1.442695
          %v2288 = vpow.pop %v2287
          %v2289 = vmul.f32 %v2188, 1.442695
          %v2290 = vpow.pop %v2289
          %v2291 = vmul.f32 %v2189, 1.442695
          %v2292 = vpow.pop %v2291
          %v2293 = vmul.f32 %v2190, 1.442695
          %v2294 = vpow.pop %v2293
          %v2295 = vmul.f32 %v2191, 1.442695
          %v2296 = vpow.pop %v2295
          %v2297 = vmul.f32 %v2192, 1.442695
          %v2298 = vpow.pop %v2297
          %v2299 = vmul.f32 %v2193, 1.442695
          %v2300 = vpow.pop %v2299
          %v2301 = vmul.f32 %v2194, 1.442695
          %v2302 = vpow.pop %v2301
          %v2303 = vmul.f32 %v2195, 1.442695
          %v2304 = vpow.pop %v2303
          %v2305 = vmul.f32 %v2196, 1.442695
          %v2306 = vpow.pop %v2305
          %v2307 = vmul.f32 %v2197, 1.442695
          %v2308 = vpow.pop %v2307
          %v2309 = vmul.f32 %v2198, 1.442695
          %v2310 = vpow.pop %v2309
          %v2311 = vmul.f32 %v2199, 1.442695
          %v2312 = vpow.pop %v2311
          %v2313 = vmul.f32 %v2200, 1.442695
          %v2314 = vpow.pop %v2313
          %v2315 = vmul.f32 %v2201, 1.442695
          %v2316 = vpow.pop %v2315
          %v2317 = vmul.f32 %v2202, 1.442695
          %v2318 = vpow.pop %v2317
          %v2319 = vmul.f32 %v2203, 1.442695
          %v2320 = vpow.pop %v2319
          %v2321 = vmul.f32 %v2204, 1.442695
          %v2322 = vpow.pop %v2321
          %v2323 = vmul.f32 %v2205, 1.442695
          %v2324 = vpow.pop %v2323
          %v2325 = vmul.f32 %v2206, 1.442695
          %v2326 = vpow.pop %v2325
          %v2327 = vmul.f32 %v2207, 1.442695
          %v2328 = vpow.pop %v2327
          %v2329 = vmul.f32 %v2208, 1.442695
          %v2330 = vpow.pop %v2329
          %v2331 = vmul.f32 %v2209, 1.442695
          %v2332 = vpow.pop %v2331
          %v2333 = vmul.f32 %v2210, 1.442695
          %v2334 = vpow.pop %v2333
          %v2335 = vmul.f32 %v2211, 1.442695
          %v2336 = vpow.pop %v2335
          %v2337 = vmul.f32 %v2212, 1.442695
          %v2338 = vpow.pop %v2337
          %v2339 = vmul.f32 %v2213, 1.442695
          %v2340 = vpow.pop %v2339
          %v2341 = vmul.f32 %v2214, 1.442695
          %v2342 = vpow.pop %v2341
          %v2343 = vadd.f32 %v2216, %v2218
          %2344 = vadd.xlane.f32.xlu0 %v2343
          %v2345 = vpop.xlane.xlu0 %2344
          %v2346 = vadd.f32 %v2220, %v2222
          %2347 = vadd.xlane.f32.xlu0 %v2346
          %v2348 = vpop.xlane.xlu0 %2347
          %v2349 = vadd.f32 %v2224, %v2226
          %2350 = vadd.xlane.f32.xlu0 %v2349
          %v2351 = vpop.xlane.xlu0 %2350
          %v2352 = vadd.f32 %v2228, %v2230
          %2353 = vadd.xlane.f32.xlu0 %v2352
          %v2354 = vpop.xlane.xlu0 %2353
          %v2355 = vadd.f32 %v2232, %v2234
          %2356 = vadd.xlane.f32.xlu0 %v2355
          %v2357 = vpop.xlane.xlu0 %2356
          %v2358 = vadd.f32 %v2236, %v2238
          %2359 = vadd.xlane.f32.xlu0 %v2358
          %v2360 = vpop.xlane.xlu0 %2359
          %v2361 = vadd.f32 %v2240, %v2242
          %2362 = vadd.xlane.f32.xlu0 %v2361
          %v2363 = vpop.xlane.xlu0 %2362
          %v2364 = vadd.f32 %v2244, %v2246
          %2365 = vadd.xlane.f32.xlu0 %v2364
          %v2366 = vpop.xlane.xlu0 %2365
          %v2367 = vadd.f32 %v2248, %v2250
          %2368 = vadd.xlane.f32.xlu0 %v2367
          %v2369 = vpop.xlane.xlu0 %2368
          %v2370 = vadd.f32 %v2252, %v2254
          %2371 = vadd.xlane.f32.xlu0 %v2370
          %v2372 = vpop.xlane.xlu0 %2371
          %v2373 = vadd.f32 %v2256, %v2258
          %2374 = vadd.xlane.f32.xlu0 %v2373
          %v2375 = vpop.xlane.xlu0 %2374
          %v2376 = vadd.f32 %v2260, %v2262
          %2377 = vadd.xlane.f32.xlu0 %v2376
          %v2378 = vpop.xlane.xlu0 %2377
          %v2379 = vadd.f32 %v2264, %v2266
          %2380 = vadd.xlane.f32.xlu0 %v2379
          %v2381 = vpop.xlane.xlu0 %2380
          %v2382 = vadd.f32 %v2268, %v2270
          %2383 = vadd.xlane.f32.xlu0 %v2382
          %v2384 = vpop.xlane.xlu0 %2383
          %v2385 = vadd.f32 %v2272, %v2274
          %2386 = vadd.xlane.f32.xlu0 %v2385
          %v2387 = vpop.xlane.xlu0 %2386
          %v2388 = vadd.f32 %v2276, %v2278
          %2389 = vadd.xlane.f32.xlu0 %v2388
          %v2390 = vpop.xlane.xlu0 %2389
          %v2391 = vadd.f32 %v2280, %v2282
          %2392 = vadd.xlane.f32.xlu0 %v2391
          %v2393 = vpop.xlane.xlu0 %2392
          %v2394 = vadd.f32 %v2284, %v2286
          %2395 = vadd.xlane.f32.xlu0 %v2394
          %v2396 = vpop.xlane.xlu0 %2395
          %v2397 = vadd.f32 %v2288, %v2290
          %2398 = vadd.xlane.f32.xlu0 %v2397
          %v2399 = vpop.xlane.xlu0 %2398
          %v2400 = vadd.f32 %v2292, %v2294
          %2401 = vadd.xlane.f32.xlu0 %v2400
          %v2402 = vpop.xlane.xlu0 %2401
          %v2403 = vadd.f32 %v2296, %v2298
          %2404 = vadd.xlane.f32.xlu0 %v2403
          %v2405 = vpop.xlane.xlu0 %2404
          %v2406 = vadd.f32 %v2300, %v2302
          %2407 = vadd.xlane.f32.xlu0 %v2406
          %v2408 = vpop.xlane.xlu0 %2407
          %v2409 = vadd.f32 %v2304, %v2306
          %2410 = vadd.xlane.f32.xlu0 %v2409
          %v2411 = vpop.xlane.xlu0 %2410
          %v2412 = vadd.f32 %v2308, %v2310
          %2413 = vadd.xlane.f32.xlu0 %v2412
          %v2414 = vpop.xlane.xlu0 %2413
          %v2415 = vadd.f32 %v2312, %v2314
          %2416 = vadd.xlane.f32.xlu0 %v2415
          %v2417 = vpop.xlane.xlu0 %2416
          %v2418 = vadd.f32 %v2316, %v2318
          %2419 = vadd.xlane.f32.xlu0 %v2418
          %v2420 = vpop.xlane.xlu0 %2419
          %v2421 = vadd.f32 %v2320, %v2322
          %2422 = vadd.xlane.f32.xlu0 %v2421
          %v2423 = vpop.xlane.xlu0 %2422
          %v2424 = vadd.f32 %v2324, %v2326
          %2425 = vadd.xlane.f32.xlu0 %v2424
          %v2426 = vpop.xlane.xlu0 %2425
          %v2427 = vadd.f32 %v2328, %v2330
          %2428 = vadd.xlane.f32.xlu0 %v2427
          %v2429 = vpop.xlane.xlu0 %2428
          %v2430 = vadd.f32 %v2332, %v2334
          %2431 = vadd.xlane.f32.xlu0 %v2430
          %v2432 = vpop.xlane.xlu0 %2431
          %v2433 = vadd.f32 %v2336, %v2338
          %2434 = vadd.xlane.f32.xlu0 %v2433
          %v2435 = vpop.xlane.xlu0 %2434
          %v2436 = vadd.f32 %v2340, %v2342
          %2437 = vadd.xlane.f32.xlu0 %v2436
          %v2438 = vpop.xlane.xlu0 %2437
          %v2439 = vrcp.pop %v2345
          %v2440 = vrcp.pop %v2348
          %v2441 = vrcp.pop %v2351
          %v2442 = vrcp.pop %v2354
          %v2443 = vrcp.pop %v2357
          %v2444 = vrcp.pop %v2360
          %v2445 = vrcp.pop %v2363
          %v2446 = vrcp.pop %v2366
          %v2447 = vrcp.pop %v2369
          %v2448 = vrcp.pop %v2372
          %v2449 = vrcp.pop %v2375
          %v2450 = vrcp.pop %v2378
          %v2451 = vrcp.pop %v2381
          %v2452 = vrcp.pop %v2384
          %v2453 = vrcp.pop %v2387
          %v2454 = vrcp.pop %v2390
          %v2455 = vrcp.pop %v2393
          %v2456 = vrcp.pop %v2396
          %v2457 = vrcp.pop %v2399
          %v2458 = vrcp.pop %v2402
          %v2459 = vrcp.pop %v2405
          %v2460 = vrcp.pop %v2408
          %v2461 = vrcp.pop %v2411
          %v2462 = vrcp.pop %v2414
          %v2463 = vrcp.pop %v2417
          %v2464 = vrcp.pop %v2420
          %v2465 = vrcp.pop %v2423
          %v2466 = vrcp.pop %v2426
          %v2467 = vrcp.pop %v2429
          %v2468 = vrcp.pop %v2432
          %v2469 = vrcp.pop %v2435
          %v2470 = vrcp.pop %v2438
          %v2471 = vmul.f32 %v2216, %v2439
          %v2472 = vmul.f32 %v2218, %v2439
          %v2473 = vmul.f32 %v2220, %v2440
          %v2474 = vmul.f32 %v2222, %v2440
          %v2475 = vmul.f32 %v2224, %v2441
          %v2476 = vmul.f32 %v2226, %v2441
          %v2477 = vmul.f32 %v2228, %v2442
          %v2478 = vmul.f32 %v2230, %v2442
          %v2479 = vmul.f32 %v2232, %v2443
          %v2480 = vmul.f32 %v2234, %v2443
          %v2481 = vmul.f32 %v2236, %v2444
          %v2482 = vmul.f32 %v2238, %v2444
          %v2483 = vmul.f32 %v2240, %v2445
          %v2484 = vmul.f32 %v2242, %v2445
          %v2485 = vmul.f32 %v2244, %v2446
          %v2486 = vmul.f32 %v2246, %v2446
          %v2487 = vmul.f32 %v2248, %v2447
          %v2488 = vmul.f32 %v2250, %v2447
          %v2489 = vmul.f32 %v2252, %v2448
          %v2490 = vmul.f32 %v2254, %v2448
          %v2491 = vmul.f32 %v2256, %v2449
          %v2492 = vmul.f32 %v2258, %v2449
          %v2493 = vmul.f32 %v2260, %v2450
          %v2494 = vmul.f32 %v2262, %v2450
          %v2495 = vmul.f32 %v2264, %v2451
          %v2496 = vmul.f32 %v2266, %v2451
          %v2497 = vmul.f32 %v2268, %v2452
          %v2498 = vmul.f32 %v2270, %v2452
          %v2499 = vmul.f32 %v2272, %v2453
          %v2500 = vmul.f32 %v2274, %v2453
          %v2501 = vmul.f32 %v2276, %v2454
          %v2502 = vmul.f32 %v2278, %v2454
          %v2503 = vmul.f32 %v2280, %v2455
          %v2504 = vmul.f32 %v2282, %v2455
          %v2505 = vmul.f32 %v2284, %v2456
          %v2506 = vmul.f32 %v2286, %v2456
          %v2507 = vmul.f32 %v2288, %v2457
          %v2508 = vmul.f32 %v2290, %v2457
          %v2509 = vmul.f32 %v2292, %v2458
          %v2510 = vmul.f32 %v2294, %v2458
          %v2511 = vmul.f32 %v2296, %v2459
          %v2512 = vmul.f32 %v2298, %v2459
          %v2513 = vmul.f32 %v2300, %v2460
          %v2514 = vmul.f32 %v2302, %v2460
          %v2515 = vmul.f32 %v2304, %v2461
          %v2516 = vmul.f32 %v2306, %v2461
          %v2517 = vmul.f32 %v2308, %v2462
          %v2518 = vmul.f32 %v2310, %v2462
          %v2519 = vmul.f32 %v2312, %v2463
          %v2520 = vmul.f32 %v2314, %v2463
          %v2521 = vmul.f32 %v2316, %v2464
          %v2522 = vmul.f32 %v2318, %v2464
          %v2523 = vmul.f32 %v2320, %v2465
          %v2524 = vmul.f32 %v2322, %v2465
          %v2525 = vmul.f32 %v2324, %v2466
          %v2526 = vmul.f32 %v2326, %v2466
          %v2527 = vmul.f32 %v2328, %v2467
          %v2528 = vmul.f32 %v2330, %v2467
          %v2529 = vmul.f32 %v2332, %v2468
          %v2530 = vmul.f32 %v2334, %v2468
          %v2531 = vmul.f32 %v2336, %v2469
          %v2532 = vmul.f32 %v2338, %v2469
          %v2533 = vmul.f32 %v2340, %v2470
          %v2534 = vmul.f32 %v2342, %v2470
          %v2535 = vpack.c.bf16 %v2473, %v2471
          %v2536 = vpack.c.bf16 %v2474, %v2472
          %v2537 = vpack.c.bf16 %v2477, %v2475
          %v2538 = vpack.c.bf16 %v2478, %v2476
          %v2539 = vpack.c.bf16 %v2481, %v2479
          %v2540 = vpack.c.bf16 %v2482, %v2480
          %v2541 = vpack.c.bf16 %v2485, %v2483
          %v2542 = vpack.c.bf16 %v2486, %v2484
          %v2543 = vpack.c.bf16 %v2489, %v2487
          %v2544 = vpack.c.bf16 %v2490, %v2488
          %v2545 = vpack.c.bf16 %v2493, %v2491
          %v2546 = vpack.c.bf16 %v2494, %v2492
          %v2547 = vpack.c.bf16 %v2497, %v2495
          %v2548 = vpack.c.bf16 %v2498, %v2496
          %v2549 = vpack.c.bf16 %v2501, %v2499
          %v2550 = vpack.c.bf16 %v2502, %v2500
          %v2551 = vpack.c.bf16 %v2505, %v2503
          %v2552 = vpack.c.bf16 %v2506, %v2504
          %v2553 = vpack.c.bf16 %v2509, %v2507
          %v2554 = vpack.c.bf16 %v2510, %v2508
          %v2555 = vpack.c.bf16 %v2513, %v2511
          %v2556 = vpack.c.bf16 %v2514, %v2512
          %v2557 = vpack.c.bf16 %v2517, %v2515
          %v2558 = vpack.c.bf16 %v2518, %v2516
          %v2559 = vpack.c.bf16 %v2521, %v2519
          %v2560 = vpack.c.bf16 %v2522, %v2520
          %v2561 = vpack.c.bf16 %v2525, %v2523
          %v2562 = vpack.c.bf16 %v2526, %v2524
          %v2563 = vpack.c.bf16 %v2529, %v2527
          %v2564 = vpack.c.bf16 %v2530, %v2528
          %v2565 = vpack.c.bf16 %v2533, %v2531
          %v2566 = vpack.c.bf16 %v2534, %v2532
          %2567 = vmatprep.subr.bf16.mxu0 %v2550
          %2568 = vmatpush1.bf16.xpose.msra.mxu0 %v2549
          %2569 = vmatprep.subr.bf16.mxu0 %v2548
          %2570 = vmatpush1.bf16.xpose.msra.mxu0 %v2547
          %2571 = vmatprep.subr.bf16.mxu0 %v2546
          %2572 = vmatpush1.bf16.xpose.msra.mxu0 %v2545
          %2573 = vmatprep.subr.bf16.mxu0 %v2544
          %2574 = vmatpush1.bf16.xpose.msra.mxu0 %v2543
          %2575 = vmatprep.subr.bf16.mxu0 %v2542
          %2576 = vmatpush1.bf16.xpose.msra.mxu0 %v2541
          %2577 = vmatprep.subr.bf16.mxu0 %v2540
          %2578 = vmatpush1.bf16.xpose.msra.mxu0 %v2539
          %2579 = vmatprep.subr.bf16.mxu0 %v2538
          %2580 = vmatpush1.bf16.xpose.msra.mxu0 %v2537
          %2581 = vmatprep.subr.bf16.mxu0 %v2536
          %2582 = vmatpush1.bf16.xpose.msra.mxu0 %v2535
          %2583 = vmatprep.subr.bf16.mxu0 %v2566
          %2584 = vmatpush2.bf16.xpose.msra.mxu0 %v2565
          %2585 = vmatprep.subr.bf16.mxu0 %v2564
          %2586 = vmatpush2.bf16.xpose.msra.mxu0 %v2563
          %2587 = vmatprep.subr.bf16.mxu0 %v2562
          %2588 = vmatpush2.bf16.xpose.msra.mxu0 %v2561
          %2589 = vmatprep.subr.bf16.mxu0 %v2560
          %2590 = vmatpush2.bf16.xpose.msra.mxu0 %v2559
          %2591 = vmatprep.subr.bf16.mxu0 %v2558
          %2592 = vmatpush2.bf16.xpose.msra.mxu0 %v2557
          %2593 = vmatprep.subr.bf16.mxu0 %v2556
          %2594 = vmatpush2.bf16.xpose.msra.mxu0 %v2555
          %2595 = vmatprep.subr.bf16.mxu0 %v2554
          %2596 = vmatpush2.bf16.xpose.msra.mxu0 %v2553
          %2597 = vmatprep.subr.bf16.mxu0 %v2552
          %2598 = vmatpush2.bf16.xpose.msra.mxu0 %v2551
          %2599 = vmatprep.mubr.bf16.mxu0 %v1811
          %2600 = vmatmul.mubr.bf16.gmra.mxu0 %v1810
          %v2601 = vpop.f32.mrf.mxu0
          %v2602 = vadd.f32 0.0, %v2601
          %v2603 = vpop.f32.mrf.mxu0
          %v2604 = vadd.f32 0.0, %v2603
          %v2605 = vpop.f32.mrf.mxu0
          %v2606 = vadd.f32 0.0, %v2605
          %v2607 = vpop.f32.mrf.mxu0
          %v2608 = vadd.f32 0.0, %v2607
          %2609 = vmatprep.mubr.bf16.mxu0 %v1813
          %2610 = vmatmul.mubr.bf16.gmra.mxu0 %v1812
          %v2611 = vpop.f32.mrf.mxu0
          %v2612 = vadd.f32 0.0, %v2611
          %v2613 = vpop.f32.mrf.mxu0
          %v2614 = vadd.f32 0.0, %v2613
          %v2615 = vpop.f32.mrf.mxu0
          %v2616 = vadd.f32 0.0, %v2615
          %v2617 = vpop.f32.mrf.mxu0
          %v2618 = vadd.f32 0.0, %v2617
          %2619 = vdwg.mxu0
          %2620 = vxpose.xlu0.b32.start [1/16] %v1454, 128
          %2621 = vxpose.xlu0.b32.cont [2/16] %v1458, 128
          %2622 = vxpose.xlu0.b32.cont [3/16] %v1464, 128
          %2623 = vxpose.xlu0.b32.cont [4/16] %v1468, 128
          %2624 = vxpose.xlu0.b32.cont [5/16] 0.0, 128
          %2625 = vxpose.xlu0.b32.cont [6/16] 0.0, 128
          %2626 = vxpose.xlu0.b32.cont [7/16] 0.0, 128
          %2627 = vxpose.xlu0.b32.cont [8/16] 0.0, 128
          %2628 = vxpose.xlu0.b32.cont [9/16] 0.0, 128
          %2629 = vxpose.xlu0.b32.cont [10/16] 0.0, 128
          %2630 = vxpose.xlu0.b32.cont [11/16] 0.0, 128
          %2631 = vxpose.xlu0.b32.cont [12/16] 0.0, 128
          %2632 = vxpose.xlu0.b32.cont [13/16] 0.0, 128
          %2633 = vxpose.xlu0.b32.cont [14/16] 0.0, 128
          %2634 = vxpose.xlu0.b32.cont [15/16] 0.0, 128
          %2635 = vxpose.xlu0.b32.end [16/16] 0.0, 128
          %v2636 = vpop.trf.xlu0
          %v2637 = vpop.trf.xlu0
          %v2638 = vpop.trf.xlu0
          %v2639 = vpop.trf.xlu0
          %v2640 = vpop.trf.xlu0
          %v2641 = vpop.trf.xlu0
          %v2642 = vpop.trf.xlu0
          %v2643 = vpop.trf.xlu0
          %v2644 = vpop.trf.xlu0
          %v2645 = vpop.trf.xlu0
          %v2646 = vpop.trf.xlu0
          %v2647 = vpop.trf.xlu0
          %v2648 = vpop.trf.xlu0
          %v2649 = vpop.trf.xlu0
          %v2650 = vpop.trf.xlu0
          %v2651 = vpop.trf.xlu0
          %2652 = vxpose.xlu0.b32.start [1/16] %v1456, 128
          %2653 = vxpose.xlu0.b32.cont [2/16] %v1460, 128
          %2654 = vxpose.xlu0.b32.cont [3/16] %v1466, 128
          %2655 = vxpose.xlu0.b32.cont [4/16] %v1470, 128
          %2656 = vxpose.xlu0.b32.cont [5/16] 0.0, 128
          %2657 = vxpose.xlu0.b32.cont [6/16] 0.0, 128
          %2658 = vxpose.xlu0.b32.cont [7/16] 0.0, 128
          %2659 = vxpose.xlu0.b32.cont [8/16] 0.0, 128
          %2660 = vxpose.xlu0.b32.cont [9/16] 0.0, 128
          %2661 = vxpose.xlu0.b32.cont [10/16] 0.0, 128
          %2662 = vxpose.xlu0.b32.cont [11/16] 0.0, 128
          %2663 = vxpose.xlu0.b32.cont [12/16] 0.0, 128
          %2664 = vxpose.xlu0.b32.cont [13/16] 0.0, 128
          %2665 = vxpose.xlu0.b32.cont [14/16] 0.0, 128
          %2666 = vxpose.xlu0.b32.cont [15/16] 0.0, 128
          %2667 = vxpose.xlu0.b32.end [16/16] 0.0, 128
          %v2668 = vpop.trf.xlu0
          %v2669 = vpop.trf.xlu0
          %v2670 = vpop.trf.xlu0
          %v2671 = vpop.trf.xlu0
          %v2672 = vpop.trf.xlu0
          %v2673 = vpop.trf.xlu0
          %v2674 = vpop.trf.xlu0
          %v2675 = vpop.trf.xlu0
          %v2676 = vpop.trf.xlu0
          %v2677 = vpop.trf.xlu0
          %v2678 = vpop.trf.xlu0
          %v2679 = vpop.trf.xlu0
          %v2680 = vpop.trf.xlu0
          %v2681 = vpop.trf.xlu0
          %v2682 = vpop.trf.xlu0
          %v2683 = vpop.trf.xlu0
          %v2684 = vpack.c.bf16 %v2637, %v2636
          %v2685 = vpack.c.bf16 %v2639, %v2638
          %v2686 = vpack.c.bf16 %v2641, %v2640
          %v2687 = vpack.c.bf16 %v2643, %v2642
          %v2688 = vpack.c.bf16 %v2645, %v2644
          %v2689 = vpack.c.bf16 %v2647, %v2646
          %v2690 = vpack.c.bf16 %v2649, %v2648
          %v2691 = vpack.c.bf16 %v2651, %v2650
          %v2692 = vpack.c.bf16 %v2669, %v2668
          %v2693 = vpack.c.bf16 %v2671, %v2670
          %v2694 = vpack.c.bf16 %v2673, %v2672
          %v2695 = vpack.c.bf16 %v2675, %v2674
          %v2696 = vpack.c.bf16 %v2677, %v2676
          %v2697 = vpack.c.bf16 %v2679, %v2678
          %v2698 = vpack.c.bf16 %v2681, %v2680
          %v2699 = vpack.c.bf16 %v2683, %v2682
          %v2700 = vpack.c.bf16 %v1585, %v1581
          %v2701 = vpack.c.bf16 %v1587, %v1583
          %v2702 = vpack.c.bf16 %v1595, %v1591
          %v2703 = vpack.c.bf16 %v1597, %v1593
          %v2704 = vpack.c.bf16 %v1712, %v1708
          %v2705 = vpack.c.bf16 %v1714, %v1710
          %v2706 = vpack.c.bf16 %v1722, %v1718
          %v2707 = vpack.c.bf16 %v1724, %v1720
          %v2709 = vsel %vm1359, %v2684, 0
          %v2712 = vsel %vm1359, %v2685, 0
          %v2715 = vsel %vm1359, %v2686, 0
          %v2718 = vsel %vm1359, %v2687, 0
          %v2721 = vsel %vm1359, %v2688, 0
          %v2724 = vsel %vm1359, %v2689, 0
          %v2727 = vsel %vm1359, %v2690, 0
          %v2730 = vsel %vm1359, %v2691, 0
          %v2733 = vsel %vm1359, %v2692, 0
          %v2736 = vsel %vm1359, %v2693, 0
          %v2739 = vsel %vm1359, %v2694, 0
          %v2742 = vsel %vm1359, %v2695, 0
          %v2745 = vsel %vm1359, %v2696, 0
          %v2748 = vsel %vm1359, %v2697, 0
          %v2751 = vsel %vm1359, %v2698, 0
          %v2754 = vsel %vm1359, %v2699, 0
          %2756 = vmatprep.subr.bf16.mxu0 0
          %2757 = vmatpush1.bf16.msra.mxu0 0
          %2758 = vmatprep.subr.bf16.mxu0 0
          %2759 = vmatpush1.bf16.msra.mxu0 0
          %2760 = vmatprep.subr.bf16.mxu0 0
          %2761 = vmatpush1.bf16.msra.mxu0 0
          %2762 = vmatprep.subr.bf16.mxu0 0
          %2763 = vmatpush1.bf16.msra.mxu0 0
          %2764 = vmatprep.subr.bf16.mxu0 0
          %2765 = vmatpush1.bf16.msra.mxu0 0
          %2766 = vmatprep.subr.bf16.mxu0 0
          %2767 = vmatpush1.bf16.msra.mxu0 0
          %2768 = vmatprep.subr.bf16.mxu0 %v2703
          %2769 = vmatpush1.bf16.msra.mxu0 %v2702
          %2770 = vmatprep.subr.bf16.mxu0 %v2701
          %2771 = vmatpush1.bf16.msra.mxu0 %v2700
          %2772 = vmatprep.subr.bf16.mxu0 0
          %2773 = vmatpush2.bf16.msra.mxu0 0
          %2774 = vmatprep.subr.bf16.mxu0 0
          %2775 = vmatpush2.bf16.msra.mxu0 0
          %2776 = vmatprep.subr.bf16.mxu0 0
          %2777 = vmatpush2.bf16.msra.mxu0 0
          %2778 = vmatprep.subr.bf16.mxu0 0
          %2779 = vmatpush2.bf16.msra.mxu0 0
          %2780 = vmatprep.subr.bf16.mxu0 0
          %2781 = vmatpush2.bf16.msra.mxu0 0
          %2782 = vmatprep.subr.bf16.mxu0 0
          %2783 = vmatpush2.bf16.msra.mxu0 0
          %2784 = vmatprep.subr.bf16.mxu0 0
          %2785 = vmatpush2.bf16.msra.mxu0 0
          %2786 = vmatprep.subr.bf16.mxu0 0
          %2787 = vmatpush2.bf16.msra.mxu0 0
          %2788 = vmatprep.mubr.bf16.mxu0 0
          %2789 = vmatmul.mubr.bf16.gmra.mxu0 %v2709
          %v2790 = vpop.f32.mrf.mxu0
          %v2791 = vadd.f32 0.0, %v2790
          %v2792 = vpop.f32.mrf.mxu0
          %v2793 = vadd.f32 0.0, %v2792
          %v2794 = vpop.f32.mrf.mxu0
          %v2795 = vadd.f32 0.0, %v2794
          %v2796 = vpop.f32.mrf.mxu0
          %v2797 = vadd.f32 0.0, %v2796
          %2798 = vmatprep.mubr.bf16.mxu0 0
          %2799 = vmatmul.mubr.bf16.gmra.mxu0 %v2712
          %v2800 = vpop.f32.mrf.mxu0
          %v2801 = vadd.f32 0.0, %v2800
          %v2802 = vpop.f32.mrf.mxu0
          %v2803 = vadd.f32 0.0, %v2802
          %v2804 = vpop.f32.mrf.mxu0
          %v2805 = vadd.f32 0.0, %v2804
          %v2806 = vpop.f32.mrf.mxu0
          %v2807 = vadd.f32 0.0, %v2806
          %2808 = vmatprep.mubr.bf16.mxu0 0
          %2809 = vmatmul.mubr.bf16.gmra.mxu0 %v2715
          %v2810 = vpop.f32.mrf.mxu0
          %v2811 = vadd.f32 0.0, %v2810
          %v2812 = vpop.f32.mrf.mxu0
          %v2813 = vadd.f32 0.0, %v2812
          %v2814 = vpop.f32.mrf.mxu0
          %v2815 = vadd.f32 0.0, %v2814
          %v2816 = vpop.f32.mrf.mxu0
          %v2817 = vadd.f32 0.0, %v2816
          %2818 = vmatprep.mubr.bf16.mxu0 0
          %2819 = vmatmul.mubr.bf16.gmra.mxu0 %v2718
          %v2820 = vpop.f32.mrf.mxu0
          %v2821 = vadd.f32 0.0, %v2820
          %v2822 = vpop.f32.mrf.mxu0
          %v2823 = vadd.f32 0.0, %v2822
          %v2824 = vpop.f32.mrf.mxu0
          %v2825 = vadd.f32 0.0, %v2824
          %v2826 = vpop.f32.mrf.mxu0
          %v2827 = vadd.f32 0.0, %v2826
          %2828 = vmatprep.mubr.bf16.mxu0 0
          %2829 = vmatmul.mubr.bf16.gmra.mxu0 %v2721
          %v2830 = vpop.f32.mrf.mxu0
          %v2831 = vadd.f32 0.0, %v2830
          %v2832 = vpop.f32.mrf.mxu0
          %v2833 = vadd.f32 0.0, %v2832
          %v2834 = vpop.f32.mrf.mxu0
          %v2835 = vadd.f32 0.0, %v2834
          %v2836 = vpop.f32.mrf.mxu0
          %v2837 = vadd.f32 0.0, %v2836
          %2838 = vmatprep.mubr.bf16.mxu0 0
          %2839 = vmatmul.mubr.bf16.gmra.mxu0 %v2724
          %v2840 = vpop.f32.mrf.mxu0
          %v2841 = vadd.f32 0.0, %v2840
          %v2842 = vpop.f32.mrf.mxu0
          %v2843 = vadd.f32 0.0, %v2842
          %v2844 = vpop.f32.mrf.mxu0
          %v2845 = vadd.f32 0.0, %v2844
          %v2846 = vpop.f32.mrf.mxu0
          %v2847 = vadd.f32 0.0, %v2846
          %2848 = vmatprep.mubr.bf16.mxu0 0
          %2849 = vmatmul.mubr.bf16.gmra.mxu0 %v2727
          %v2850 = vpop.f32.mrf.mxu0
          %v2851 = vadd.f32 0.0, %v2850
          %v2852 = vpop.f32.mrf.mxu0
          %v2853 = vadd.f32 0.0, %v2852
          %v2854 = vpop.f32.mrf.mxu0
          %v2855 = vadd.f32 0.0, %v2854
          %v2856 = vpop.f32.mrf.mxu0
          %v2857 = vadd.f32 0.0, %v2856
          %2858 = vmatprep.mubr.bf16.mxu0 0
          %2859 = vmatmul.mubr.bf16.gmra.mxu0 %v2730
          %v2860 = vpop.f32.mrf.mxu0
          %v2861 = vadd.f32 0.0, %v2860
          %v2862 = vpop.f32.mrf.mxu0
          %v2863 = vadd.f32 0.0, %v2862
          %v2864 = vpop.f32.mrf.mxu0
          %v2865 = vadd.f32 0.0, %v2864
          %v2866 = vpop.f32.mrf.mxu0
          %v2867 = vadd.f32 0.0, %v2866
          %2868 = vmatprep.mubr.bf16.mxu0 0
          %2869 = vmatmul.mubr.bf16.gmra.mxu0 %v2733
          %v2870 = vpop.f32.mrf.mxu0
          %v2871 = vadd.f32 0.0, %v2870
          %v2872 = vpop.f32.mrf.mxu0
          %v2873 = vadd.f32 0.0, %v2872
          %v2874 = vpop.f32.mrf.mxu0
          %v2875 = vadd.f32 0.0, %v2874
          %v2876 = vpop.f32.mrf.mxu0
          %v2877 = vadd.f32 0.0, %v2876
          %2878 = vmatprep.mubr.bf16.mxu0 0
          %2879 = vmatmul.mubr.bf16.gmra.mxu0 %v2736
          %v2880 = vpop.f32.mrf.mxu0
          %v2881 = vadd.f32 0.0, %v2880
          %v2882 = vpop.f32.mrf.mxu0
          %v2883 = vadd.f32 0.0, %v2882
          %v2884 = vpop.f32.mrf.mxu0
          %v2885 = vadd.f32 0.0, %v2884
          %v2886 = vpop.f32.mrf.mxu0
          %v2887 = vadd.f32 0.0, %v2886
          %2888 = vmatprep.mubr.bf16.mxu0 0
          %2889 = vmatmul.mubr.bf16.gmra.mxu0 %v2739
          %v2890 = vpop.f32.mrf.mxu0
          %v2891 = vadd.f32 0.0, %v2890
          %v2892 = vpop.f32.mrf.mxu0
          %v2893 = vadd.f32 0.0, %v2892
          %v2894 = vpop.f32.mrf.mxu0
          %v2895 = vadd.f32 0.0, %v2894
          %v2896 = vpop.f32.mrf.mxu0
          %v2897 = vadd.f32 0.0, %v2896
          %2898 = vmatprep.mubr.bf16.mxu0 0
          %2899 = vmatmul.mubr.bf16.gmra.mxu0 %v2742
          %v2900 = vpop.f32.mrf.mxu0
          %v2901 = vadd.f32 0.0, %v2900
          %v2902 = vpop.f32.mrf.mxu0
          %v2903 = vadd.f32 0.0, %v2902
          %v2904 = vpop.f32.mrf.mxu0
          %v2905 = vadd.f32 0.0, %v2904
          %v2906 = vpop.f32.mrf.mxu0
          %v2907 = vadd.f32 0.0, %v2906
          %2908 = vmatprep.mubr.bf16.mxu0 0
          %2909 = vmatmul.mubr.bf16.gmra.mxu0 %v2745
          %v2910 = vpop.f32.mrf.mxu0
          %v2911 = vadd.f32 0.0, %v2910
          %v2912 = vpop.f32.mrf.mxu0
          %v2913 = vadd.f32 0.0, %v2912
          %v2914 = vpop.f32.mrf.mxu0
          %v2915 = vadd.f32 0.0, %v2914
          %v2916 = vpop.f32.mrf.mxu0
          %v2917 = vadd.f32 0.0, %v2916
          %2918 = vmatprep.mubr.bf16.mxu0 0
          %2919 = vmatmul.mubr.bf16.gmra.mxu0 %v2748
          %v2920 = vpop.f32.mrf.mxu0
          %v2921 = vadd.f32 0.0, %v2920
          %v2922 = vpop.f32.mrf.mxu0
          %v2923 = vadd.f32 0.0, %v2922
          %v2924 = vpop.f32.mrf.mxu0
          %v2925 = vadd.f32 0.0, %v2924
          %v2926 = vpop.f32.mrf.mxu0
          %v2927 = vadd.f32 0.0, %v2926
          %2928 = vmatprep.mubr.bf16.mxu0 0
          %2929 = vmatmul.mubr.bf16.gmra.mxu0 %v2751
          %v2930 = vpop.f32.mrf.mxu0
          %v2931 = vadd.f32 0.0, %v2930
          %v2932 = vpop.f32.mrf.mxu0
          %v2933 = vadd.f32 0.0, %v2932
          %v2934 = vpop.f32.mrf.mxu0
          %v2935 = vadd.f32 0.0, %v2934
          %v2936 = vpop.f32.mrf.mxu0
          %v2937 = vadd.f32 0.0, %v2936
          %2938 = vmatprep.mubr.bf16.mxu0 0
          %2939 = vmatmul.mubr.bf16.gmra.mxu0 %v2754
          %v2940 = vpop.f32.mrf.mxu0
          %v2941 = vadd.f32 0.0, %v2940
          %v2942 = vpop.f32.mrf.mxu0
          %v2943 = vadd.f32 0.0, %v2942
          %v2944 = vpop.f32.mrf.mxu0
          %v2945 = vadd.f32 0.0, %v2944
          %v2946 = vpop.f32.mrf.mxu0
          %v2947 = vadd.f32 0.0, %v2946
          %2948 = vdwg.mxu0
          %v2949 = vmax.f32 %v2791, %v2793
          %2950 = vmax.xlane.f32.xlu0 %v2949
          %v2951 = vpop.xlane.xlu0 %2950
          %v2952 = vmax.f32 %v2795, %v2797
          %2953 = vmax.xlane.f32.xlu0 %v2952
          %v2954 = vpop.xlane.xlu0 %2953
          %v2955 = vmax.f32 %v2801, %v2803
          %2956 = vmax.xlane.f32.xlu0 %v2955
          %v2957 = vpop.xlane.xlu0 %2956
          %v2958 = vmax.f32 %v2805, %v2807
          %2959 = vmax.xlane.f32.xlu0 %v2958
          %v2960 = vpop.xlane.xlu0 %2959
          %v2961 = vmax.f32 %v2811, %v2813
          %2962 = vmax.xlane.f32.xlu0 %v2961
          %v2963 = vpop.xlane.xlu0 %2962
          %v2964 = vmax.f32 %v2815, %v2817
          %2965 = vmax.xlane.f32.xlu0 %v2964
          %v2966 = vpop.xlane.xlu0 %2965
          %v2967 = vmax.f32 %v2821, %v2823
          %2968 = vmax.xlane.f32.xlu0 %v2967
          %v2969 = vpop.xlane.xlu0 %2968
          %v2970 = vmax.f32 %v2825, %v2827
          %2971 = vmax.xlane.f32.xlu0 %v2970
          %v2972 = vpop.xlane.xlu0 %2971
          %v2973 = vmax.f32 %v2831, %v2833
          %2974 = vmax.xlane.f32.xlu0 %v2973
          %v2975 = vpop.xlane.xlu0 %2974
          %v2976 = vmax.f32 %v2835, %v2837
          %2977 = vmax.xlane.f32.xlu0 %v2976
          %v2978 = vpop.xlane.xlu0 %2977
          %v2979 = vmax.f32 %v2841, %v2843
          %2980 = vmax.xlane.f32.xlu0 %v2979
          %v2981 = vpop.xlane.xlu0 %2980
          %v2982 = vmax.f32 %v2845, %v2847
          %2983 = vmax.xlane.f32.xlu0 %v2982
          %v2984 = vpop.xlane.xlu0 %2983
          %v2985 = vmax.f32 %v2851, %v2853
          %2986 = vmax.xlane.f32.xlu0 %v2985
          %v2987 = vpop.xlane.xlu0 %2986
          %v2988 = vmax.f32 %v2855, %v2857
          %2989 = vmax.xlane.f32.xlu0 %v2988
          %v2990 = vpop.xlane.xlu0 %2989
          %v2991 = vmax.f32 %v2861, %v2863
          %2992 = vmax.xlane.f32.xlu0 %v2991
          %v2993 = vpop.xlane.xlu0 %2992
          %v2994 = vmax.f32 %v2865, %v2867
          %2995 = vmax.xlane.f32.xlu0 %v2994
          %v2996 = vpop.xlane.xlu0 %2995
          %v2997 = vmax.f32 %v2871, %v2873
          %2998 = vmax.xlane.f32.xlu0 %v2997
          %v2999 = vpop.xlane.xlu0 %2998
          %v3000 = vmax.f32 %v2875, %v2877
          %3001 = vmax.xlane.f32.xlu0 %v3000
          %v3002 = vpop.xlane.xlu0 %3001
          %v3003 = vmax.f32 %v2881, %v2883
          %3004 = vmax.xlane.f32.xlu0 %v3003
          %v3005 = vpop.xlane.xlu0 %3004
          %v3006 = vmax.f32 %v2885, %v2887
          %3007 = vmax.xlane.f32.xlu0 %v3006
          %v3008 = vpop.xlane.xlu0 %3007
          %v3009 = vmax.f32 %v2891, %v2893
          %3010 = vmax.xlane.f32.xlu0 %v3009
          %v3011 = vpop.xlane.xlu0 %3010
          %v3012 = vmax.f32 %v2895, %v2897
          %3013 = vmax.xlane.f32.xlu0 %v3012
          %v3014 = vpop.xlane.xlu0 %3013
          %v3015 = vmax.f32 %v2901, %v2903
          %3016 = vmax.xlane.f32.xlu0 %v3015
          %v3017 = vpop.xlane.xlu0 %3016
          %v3018 = vmax.f32 %v2905, %v2907
          %3019 = vmax.xlane.f32.xlu0 %v3018
          %v3020 = vpop.xlane.xlu0 %3019
          %v3021 = vmax.f32 %v2911, %v2913
          %3022 = vmax.xlane.f32.xlu0 %v3021
          %v3023 = vpop.xlane.xlu0 %3022
          %v3024 = vmax.f32 %v2915, %v2917
          %3025 = vmax.xlane.f32.xlu0 %v3024
          %v3026 = vpop.xlane.xlu0 %3025
          %v3027 = vmax.f32 %v2921, %v2923
          %3028 = vmax.xlane.f32.xlu0 %v3027
          %v3029 = vpop.xlane.xlu0 %3028
          %v3030 = vmax.f32 %v2925, %v2927
          %3031 = vmax.xlane.f32.xlu0 %v3030
          %v3032 = vpop.xlane.xlu0 %3031
          %v3033 = vmax.f32 %v2931, %v2933
          %3034 = vmax.xlane.f32.xlu0 %v3033
          %v3035 = vpop.xlane.xlu0 %3034
          %v3036 = vmax.f32 %v2935, %v2937
          %3037 = vmax.xlane.f32.xlu0 %v3036
          %v3038 = vpop.xlane.xlu0 %3037
          %v3039 = vmax.f32 %v2941, %v2943
          %3040 = vmax.xlane.f32.xlu0 %v3039
          %v3041 = vpop.xlane.xlu0 %3040
          %v3042 = vmax.f32 %v2945, %v2947
          %3043 = vmax.xlane.f32.xlu0 %v3042
          %v3044 = vpop.xlane.xlu0 %3043
          %v3045 = vsub.f32 %v2791, %v2951
          %v3046 = vsub.f32 %v2793, %v2951
          %v3047 = vsub.f32 %v2795, %v2954
          %v3048 = vsub.f32 %v2797, %v2954
          %v3049 = vsub.f32 %v2801, %v2957
          %v3050 = vsub.f32 %v2803, %v2957
          %v3051 = vsub.f32 %v2805, %v2960
          %v3052 = vsub.f32 %v2807, %v2960
          %v3053 = vsub.f32 %v2811, %v2963
          %v3054 = vsub.f32 %v2813, %v2963
          %v3055 = vsub.f32 %v2815, %v2966
          %v3056 = vsub.f32 %v2817, %v2966
          %v3057 = vsub.f32 %v2821, %v2969
          %v3058 = vsub.f32 %v2823, %v2969
          %v3059 = vsub.f32 %v2825, %v2972
          %v3060 = vsub.f32 %v2827, %v2972
          %v3061 = vsub.f32 %v2831, %v2975
          %v3062 = vsub.f32 %v2833, %v2975
          %v3063 = vsub.f32 %v2835, %v2978
          %v3064 = vsub.f32 %v2837, %v2978
          %v3065 = vsub.f32 %v2841, %v2981
          %v3066 = vsub.f32 %v2843, %v2981
          %v3067 = vsub.f32 %v2845, %v2984
          %v3068 = vsub.f32 %v2847, %v2984
          %v3069 = vsub.f32 %v2851, %v2987
          %v3070 = vsub.f32 %v2853, %v2987
          %v3071 = vsub.f32 %v2855, %v2990
          %v3072 = vsub.f32 %v2857, %v2990
          %v3073 = vsub.f32 %v2861, %v2993
          %v3074 = vsub.f32 %v2863, %v2993
          %v3075 = vsub.f32 %v2865, %v2996
          %v3076 = vsub.f32 %v2867, %v2996
          %v3077 = vsub.f32 %v2871, %v2999
          %v3078 = vsub.f32 %v2873, %v2999
          %v3079 = vsub.f32 %v2875, %v3002
          %v3080 = vsub.f32 %v2877, %v3002
          %v3081 = vsub.f32 %v2881, %v3005
          %v3082 = vsub.f32 %v2883, %v3005
          %v3083 = vsub.f32 %v2885, %v3008
          %v3084 = vsub.f32 %v2887, %v3008
          %v3085 = vsub.f32 %v2891, %v3011
          %v3086 = vsub.f32 %v2893, %v3011
          %v3087 = vsub.f32 %v2895, %v3014
          %v3088 = vsub.f32 %v2897, %v3014
          %v3089 = vsub.f32 %v2901, %v3017
          %v3090 = vsub.f32 %v2903, %v3017
          %v3091 = vsub.f32 %v2905, %v3020
          %v3092 = vsub.f32 %v2907, %v3020
          %v3093 = vsub.f32 %v2911, %v3023
          %v3094 = vsub.f32 %v2913, %v3023
          %v3095 = vsub.f32 %v2915, %v3026
          %v3096 = vsub.f32 %v2917, %v3026
          %v3097 = vsub.f32 %v2921, %v3029
          %v3098 = vsub.f32 %v2923, %v3029
          %v3099 = vsub.f32 %v2925, %v3032
          %v3100 = vsub.f32 %v2927, %v3032
          %v3101 = vsub.f32 %v2931, %v3035
          %v3102 = vsub.f32 %v2933, %v3035
          %v3103 = vsub.f32 %v2935, %v3038
          %v3104 = vsub.f32 %v2937, %v3038
          %v3105 = vsub.f32 %v2941, %v3041
          %v3106 = vsub.f32 %v2943, %v3041
          %v3107 = vsub.f32 %v2945, %v3044
          %v3108 = vsub.f32 %v2947, %v3044
          %v3109 = vmul.f32 %v3045, 1.442695
          %v3110 = vpow.pop %v3109
          %v3111 = vmul.f32 %v3046, 1.442695
          %v3112 = vpow.pop %v3111
          %v3113 = vmul.f32 %v3047, 1.442695
          %v3114 = vpow.pop %v3113
          %v3115 = vmul.f32 %v3048, 1.442695
          %v3116 = vpow.pop %v3115
          %v3117 = vmul.f32 %v3049, 1.442695
          %v3118 = vpow.pop %v3117
          %v3119 = vmul.f32 %v3050, 1.442695
          %v3120 = vpow.pop %v3119
          %v3121 = vmul.f32 %v3051, 1.442695
          %v3122 = vpow.pop %v3121
          %v3123 = vmul.f32 %v3052, 1.442695
          %v3124 = vpow.pop %v3123
          %v3125 = vmul.f32 %v3053, 1.442695
          %v3126 = vpow.pop %v3125
          %v3127 = vmul.f32 %v3054, 1.442695
          %v3128 = vpow.pop %v3127
          %v3129 = vmul.f32 %v3055, 1.442695
          %v3130 = vpow.pop %v3129
          %v3131 = vmul.f32 %v3056, 1.442695
          %v3132 = vpow.pop %v3131
          %v3133 = vmul.f32 %v3057, 1.442695
          %v3134 = vpow.pop %v3133
          %v3135 = vmul.f32 %v3058, 1.442695
          %v3136 = vpow.pop %v3135
          %v3137 = vmul.f32 %v3059, 1.442695
          %v3138 = vpow.pop %v3137
          %v3139 = vmul.f32 %v3060, 1.442695
          %v3140 = vpow.pop %v3139
          %v3141 = vmul.f32 %v3061, 1.442695
          %v3142 = vpow.pop %v3141
          %v3143 = vmul.f32 %v3062, 1.442695
          %v3144 = vpow.pop %v3143
          %v3145 = vmul.f32 %v3063, 1.442695
          %v3146 = vpow.pop %v3145
          %v3147 = vmul.f32 %v3064, 1.442695
          %v3148 = vpow.pop %v3147
          %v3149 = vmul.f32 %v3065, 1.442695
          %v3150 = vpow.pop %v3149
          %v3151 = vmul.f32 %v3066, 1.442695
          %v3152 = vpow.pop %v3151
          %v3153 = vmul.f32 %v3067, 1.442695
          %v3154 = vpow.pop %v3153
          %v3155 = vmul.f32 %v3068, 1.442695
          %v3156 = vpow.pop %v3155
          %v3157 = vmul.f32 %v3069, 1.442695
          %v3158 = vpow.pop %v3157
          %v3159 = vmul.f32 %v3070, 1.442695
          %v3160 = vpow.pop %v3159
          %v3161 = vmul.f32 %v3071, 1.442695
          %v3162 = vpow.pop %v3161
          %v3163 = vmul.f32 %v3072, 1.442695
          %v3164 = vpow.pop %v3163
          %v3165 = vmul.f32 %v3073, 1.442695
          %v3166 = vpow.pop %v3165
          %v3167 = vmul.f32 %v3074, 1.442695
          %v3168 = vpow.pop %v3167
          %v3169 = vmul.f32 %v3075, 1.442695
          %v3170 = vpow.pop %v3169
          %v3171 = vmul.f32 %v3076, 1.442695
          %v3172 = vpow.pop %v3171
          %v3173 = vmul.f32 %v3077, 1.442695
          %v3174 = vpow.pop %v3173
          %v3175 = vmul.f32 %v3078, 1.442695
          %v3176 = vpow.pop %v3175
          %v3177 = vmul.f32 %v3079, 1.442695
          %v3178 = vpow.pop %v3177
          %v3179 = vmul.f32 %v3080, 1.442695
          %v3180 = vpow.pop %v3179
          %v3181 = vmul.f32 %v3081, 1.442695
          %v3182 = vpow.pop %v3181
          %v3183 = vmul.f32 %v3082, 1.442695
          %v3184 = vpow.pop %v3183
          %v3185 = vmul.f32 %v3083, 1.442695
          %v3186 = vpow.pop %v3185
          %v3187 = vmul.f32 %v3084, 1.442695
          %v3188 = vpow.pop %v3187
          %v3189 = vmul.f32 %v3085, 1.442695
          %v3190 = vpow.pop %v3189
          %v3191 = vmul.f32 %v3086, 1.442695
          %v3192 = vpow.pop %v3191
          %v3193 = vmul.f32 %v3087, 1.442695
          %v3194 = vpow.pop %v3193
          %v3195 = vmul.f32 %v3088, 1.442695
          %v3196 = vpow.pop %v3195
          %v3197 = vmul.f32 %v3089, 1.442695
          %v3198 = vpow.pop %v3197
          %v3199 = vmul.f32 %v3090, 1.442695
          %v3200 = vpow.pop %v3199
          %v3201 = vmul.f32 %v3091, 1.442695
          %v3202 = vpow.pop %v3201
          %v3203 = vmul.f32 %v3092, 1.442695
          %v3204 = vpow.pop %v3203
          %v3205 = vmul.f32 %v3093, 1.442695
          %v3206 = vpow.pop %v3205
          %v3207 = vmul.f32 %v3094, 1.442695
          %v3208 = vpow.pop %v3207
          %v3209 = vmul.f32 %v3095, 1.442695
          %v3210 = vpow.pop %v3209
          %v3211 = vmul.f32 %v3096, 1.442695
          %v3212 = vpow.pop %v3211
          %v3213 = vmul.f32 %v3097, 1.442695
          %v3214 = vpow.pop %v3213
          %v3215 = vmul.f32 %v3098, 1.442695
          %v3216 = vpow.pop %v3215
          %v3217 = vmul.f32 %v3099, 1.442695
          %v3218 = vpow.pop %v3217
          %v3219 = vmul.f32 %v3100, 1.442695
          %v3220 = vpow.pop %v3219
          %v3221 = vmul.f32 %v3101, 1.442695
          %v3222 = vpow.pop %v3221
          %v3223 = vmul.f32 %v3102, 1.442695
          %v3224 = vpow.pop %v3223
          %v3225 = vmul.f32 %v3103, 1.442695
          %v3226 = vpow.pop %v3225
          %v3227 = vmul.f32 %v3104, 1.442695
          %v3228 = vpow.pop %v3227
          %v3229 = vmul.f32 %v3105, 1.442695
          %v3230 = vpow.pop %v3229
          %v3231 = vmul.f32 %v3106, 1.442695
          %v3232 = vpow.pop %v3231
          %v3233 = vmul.f32 %v3107, 1.442695
          %v3234 = vpow.pop %v3233
          %v3235 = vmul.f32 %v3108, 1.442695
          %v3236 = vpow.pop %v3235
          %v3237 = vadd.f32 %v3110, %v3112
          %3238 = vadd.xlane.f32.xlu0 %v3237
          %v3239 = vpop.xlane.xlu0 %3238
          %v3240 = vadd.f32 %v3114, %v3116
          %3241 = vadd.xlane.f32.xlu0 %v3240
          %v3242 = vpop.xlane.xlu0 %3241
          %v3243 = vadd.f32 %v3118, %v3120
          %3244 = vadd.xlane.f32.xlu0 %v3243
          %v3245 = vpop.xlane.xlu0 %3244
          %v3246 = vadd.f32 %v3122, %v3124
          %3247 = vadd.xlane.f32.xlu0 %v3246
          %v3248 = vpop.xlane.xlu0 %3247
          %v3249 = vadd.f32 %v3126, %v3128
          %3250 = vadd.xlane.f32.xlu0 %v3249
          %v3251 = vpop.xlane.xlu0 %3250
          %v3252 = vadd.f32 %v3130, %v3132
          %3253 = vadd.xlane.f32.xlu0 %v3252
          %v3254 = vpop.xlane.xlu0 %3253
          %v3255 = vadd.f32 %v3134, %v3136
          %3256 = vadd.xlane.f32.xlu0 %v3255
          %v3257 = vpop.xlane.xlu0 %3256
          %v3258 = vadd.f32 %v3138, %v3140
          %3259 = vadd.xlane.f32.xlu0 %v3258
          %v3260 = vpop.xlane.xlu0 %3259
          %v3261 = vadd.f32 %v3142, %v3144
          %3262 = vadd.xlane.f32.xlu0 %v3261
          %v3263 = vpop.xlane.xlu0 %3262
          %v3264 = vadd.f32 %v3146, %v3148
          %3265 = vadd.xlane.f32.xlu0 %v3264
          %v3266 = vpop.xlane.xlu0 %3265
          %v3267 = vadd.f32 %v3150, %v3152
          %3268 = vadd.xlane.f32.xlu0 %v3267
          %v3269 = vpop.xlane.xlu0 %3268
          %v3270 = vadd.f32 %v3154, %v3156
          %3271 = vadd.xlane.f32.xlu0 %v3270
          %v3272 = vpop.xlane.xlu0 %3271
          %v3273 = vadd.f32 %v3158, %v3160
          %3274 = vadd.xlane.f32.xlu0 %v3273
          %v3275 = vpop.xlane.xlu0 %3274
          %v3276 = vadd.f32 %v3162, %v3164
          %3277 = vadd.xlane.f32.xlu0 %v3276
          %v3278 = vpop.xlane.xlu0 %3277
          %v3279 = vadd.f32 %v3166, %v3168
          %3280 = vadd.xlane.f32.xlu0 %v3279
          %v3281 = vpop.xlane.xlu0 %3280
          %v3282 = vadd.f32 %v3170, %v3172
          %3283 = vadd.xlane.f32.xlu0 %v3282
          %v3284 = vpop.xlane.xlu0 %3283
          %v3285 = vadd.f32 %v3174, %v3176
          %3286 = vadd.xlane.f32.xlu0 %v3285
          %v3287 = vpop.xlane.xlu0 %3286
          %v3288 = vadd.f32 %v3178, %v3180
          %3289 = vadd.xlane.f32.xlu0 %v3288
          %v3290 = vpop.xlane.xlu0 %3289
          %v3291 = vadd.f32 %v3182, %v3184
          %3292 = vadd.xlane.f32.xlu0 %v3291
          %v3293 = vpop.xlane.xlu0 %3292
          %v3294 = vadd.f32 %v3186, %v3188
          %3295 = vadd.xlane.f32.xlu0 %v3294
          %v3296 = vpop.xlane.xlu0 %3295
          %v3297 = vadd.f32 %v3190, %v3192
          %3298 = vadd.xlane.f32.xlu0 %v3297
          %v3299 = vpop.xlane.xlu0 %3298
          %v3300 = vadd.f32 %v3194, %v3196
          %3301 = vadd.xlane.f32.xlu0 %v3300
          %v3302 = vpop.xlane.xlu0 %3301
          %v3303 = vadd.f32 %v3198, %v3200
          %3304 = vadd.xlane.f32.xlu0 %v3303
          %v3305 = vpop.xlane.xlu0 %3304
          %v3306 = vadd.f32 %v3202, %v3204
          %3307 = vadd.xlane.f32.xlu0 %v3306
          %v3308 = vpop.xlane.xlu0 %3307
          %v3309 = vadd.f32 %v3206, %v3208
          %3310 = vadd.xlane.f32.xlu0 %v3309
          %v3311 = vpop.xlane.xlu0 %3310
          %v3312 = vadd.f32 %v3210, %v3212
          %3313 = vadd.xlane.f32.xlu0 %v3312
          %v3314 = vpop.xlane.xlu0 %3313
          %v3315 = vadd.f32 %v3214, %v3216
          %3316 = vadd.xlane.f32.xlu0 %v3315
          %v3317 = vpop.xlane.xlu0 %3316
          %v3318 = vadd.f32 %v3218, %v3220
          %3319 = vadd.xlane.f32.xlu0 %v3318
          %v3320 = vpop.xlane.xlu0 %3319
          %v3321 = vadd.f32 %v3222, %v3224
          %3322 = vadd.xlane.f32.xlu0 %v3321
          %v3323 = vpop.xlane.xlu0 %3322
          %v3324 = vadd.f32 %v3226, %v3228
          %3325 = vadd.xlane.f32.xlu0 %v3324
          %v3326 = vpop.xlane.xlu0 %3325
          %v3327 = vadd.f32 %v3230, %v3232
          %3328 = vadd.xlane.f32.xlu0 %v3327
          %v3329 = vpop.xlane.xlu0 %3328
          %v3330 = vadd.f32 %v3234, %v3236
          %3331 = vadd.xlane.f32.xlu0 %v3330
          %v3332 = vpop.xlane.xlu0 %3331
          %v3333 = vrcp.pop %v3239
          %v3334 = vrcp.pop %v3242
          %v3335 = vrcp.pop %v3245
          %v3336 = vrcp.pop %v3248
          %v3337 = vrcp.pop %v3251
          %v3338 = vrcp.pop %v3254
          %v3339 = vrcp.pop %v3257
          %v3340 = vrcp.pop %v3260
          %v3341 = vrcp.pop %v3263
          %v3342 = vrcp.pop %v3266
          %v3343 = vrcp.pop %v3269
          %v3344 = vrcp.pop %v3272
          %v3345 = vrcp.pop %v3275
          %v3346 = vrcp.pop %v3278
          %v3347 = vrcp.pop %v3281
          %v3348 = vrcp.pop %v3284
          %v3349 = vrcp.pop %v3287
          %v3350 = vrcp.pop %v3290
          %v3351 = vrcp.pop %v3293
          %v3352 = vrcp.pop %v3296
          %v3353 = vrcp.pop %v3299
          %v3354 = vrcp.pop %v3302
          %v3355 = vrcp.pop %v3305
          %v3356 = vrcp.pop %v3308
          %v3357 = vrcp.pop %v3311
          %v3358 = vrcp.pop %v3314
          %v3359 = vrcp.pop %v3317
          %v3360 = vrcp.pop %v3320
          %v3361 = vrcp.pop %v3323
          %v3362 = vrcp.pop %v3326
          %v3363 = vrcp.pop %v3329
          %v3364 = vrcp.pop %v3332
          %v3365 = vmul.f32 %v3110, %v3333
          %v3366 = vmul.f32 %v3112, %v3333
          %v3367 = vmul.f32 %v3114, %v3334
          %v3368 = vmul.f32 %v3116, %v3334
          %v3369 = vmul.f32 %v3118, %v3335
          %v3370 = vmul.f32 %v3120, %v3335
          %v3371 = vmul.f32 %v3122, %v3336
          %v3372 = vmul.f32 %v3124, %v3336
          %v3373 = vmul.f32 %v3126, %v3337
          %v3374 = vmul.f32 %v3128, %v3337
          %v3375 = vmul.f32 %v3130, %v3338
          %v3376 = vmul.f32 %v3132, %v3338
          %v3377 = vmul.f32 %v3134, %v3339
          %v3378 = vmul.f32 %v3136, %v3339
          %v3379 = vmul.f32 %v3138, %v3340
          %v3380 = vmul.f32 %v3140, %v3340
          %v3381 = vmul.f32 %v3142, %v3341
          %v3382 = vmul.f32 %v3144, %v3341
          %v3383 = vmul.f32 %v3146, %v3342
          %v3384 = vmul.f32 %v3148, %v3342
          %v3385 = vmul.f32 %v3150, %v3343
          %v3386 = vmul.f32 %v3152, %v3343
          %v3387 = vmul.f32 %v3154, %v3344
          %v3388 = vmul.f32 %v3156, %v3344
          %v3389 = vmul.f32 %v3158, %v3345
          %v3390 = vmul.f32 %v3160, %v3345
          %v3391 = vmul.f32 %v3162, %v3346
          %v3392 = vmul.f32 %v3164, %v3346
          %v3393 = vmul.f32 %v3166, %v3347
          %v3394 = vmul.f32 %v3168, %v3347
          %v3395 = vmul.f32 %v3170, %v3348
          %v3396 = vmul.f32 %v3172, %v3348
          %v3397 = vmul.f32 %v3174, %v3349
          %v3398 = vmul.f32 %v3176, %v3349
          %v3399 = vmul.f32 %v3178, %v3350
          %v3400 = vmul.f32 %v3180, %v3350
          %v3401 = vmul.f32 %v3182, %v3351
          %v3402 = vmul.f32 %v3184, %v3351
          %v3403 = vmul.f32 %v3186, %v3352
          %v3404 = vmul.f32 %v3188, %v3352
          %v3405 = vmul.f32 %v3190, %v3353
          %v3406 = vmul.f32 %v3192, %v3353
          %v3407 = vmul.f32 %v3194, %v3354
          %v3408 = vmul.f32 %v3196, %v3354
          %v3409 = vmul.f32 %v3198, %v3355
          %v3410 = vmul.f32 %v3200, %v3355
          %v3411 = vmul.f32 %v3202, %v3356
          %v3412 = vmul.f32 %v3204, %v3356
          %v3413 = vmul.f32 %v3206, %v3357
          %v3414 = vmul.f32 %v3208, %v3357
          %v3415 = vmul.f32 %v3210, %v3358
          %v3416 = vmul.f32 %v3212, %v3358
          %v3417 = vmul.f32 %v3214, %v3359
          %v3418 = vmul.f32 %v3216, %v3359
          %v3419 = vmul.f32 %v3218, %v3360
          %v3420 = vmul.f32 %v3220, %v3360
          %v3421 = vmul.f32 %v3222, %v3361
          %v3422 = vmul.f32 %v3224, %v3361
          %v3423 = vmul.f32 %v3226, %v3362
          %v3424 = vmul.f32 %v3228, %v3362
          %v3425 = vmul.f32 %v3230, %v3363
          %v3426 = vmul.f32 %v3232, %v3363
          %v3427 = vmul.f32 %v3234, %v3364
          %v3428 = vmul.f32 %v3236, %v3364
          %v3429 = vpack.c.bf16 %v3367, %v3365
          %v3430 = vpack.c.bf16 %v3368, %v3366
          %v3431 = vpack.c.bf16 %v3371, %v3369
          %v3432 = vpack.c.bf16 %v3372, %v3370
          %v3433 = vpack.c.bf16 %v3375, %v3373
          %v3434 = vpack.c.bf16 %v3376, %v3374
          %v3435 = vpack.c.bf16 %v3379, %v3377
          %v3436 = vpack.c.bf16 %v3380, %v3378
          %v3437 = vpack.c.bf16 %v3383, %v3381
          %v3438 = vpack.c.bf16 %v3384, %v3382
          %v3439 = vpack.c.bf16 %v3387, %v3385
          %v3440 = vpack.c.bf16 %v3388, %v3386
          %v3441 = vpack.c.bf16 %v3391, %v3389
          %v3442 = vpack.c.bf16 %v3392, %v3390
          %v3443 = vpack.c.bf16 %v3395, %v3393
          %v3444 = vpack.c.bf16 %v3396, %v3394
          %v3445 = vpack.c.bf16 %v3399, %v3397
          %v3446 = vpack.c.bf16 %v3400, %v3398
          %v3447 = vpack.c.bf16 %v3403, %v3401
          %v3448 = vpack.c.bf16 %v3404, %v3402
          %v3449 = vpack.c.bf16 %v3407, %v3405
          %v3450 = vpack.c.bf16 %v3408, %v3406
          %v3451 = vpack.c.bf16 %v3411, %v3409
          %v3452 = vpack.c.bf16 %v3412, %v3410
          %v3453 = vpack.c.bf16 %v3415, %v3413
          %v3454 = vpack.c.bf16 %v3416, %v3414
          %v3455 = vpack.c.bf16 %v3419, %v3417
          %v3456 = vpack.c.bf16 %v3420, %v3418
          %v3457 = vpack.c.bf16 %v3423, %v3421
          %v3458 = vpack.c.bf16 %v3424, %v3422
          %v3459 = vpack.c.bf16 %v3427, %v3425
          %v3460 = vpack.c.bf16 %v3428, %v3426
          %3461 = vmatprep.subr.bf16.mxu0 %v3444
          %3462 = vmatpush1.bf16.xpose.msra.mxu0 %v3443
          %3463 = vmatprep.subr.bf16.mxu0 %v3442
          %3464 = vmatpush1.bf16.xpose.msra.mxu0 %v3441
          %3465 = vmatprep.subr.bf16.mxu0 %v3440
          %3466 = vmatpush1.bf16.xpose.msra.mxu0 %v3439
          %3467 = vmatprep.subr.bf16.mxu0 %v3438
          %3468 = vmatpush1.bf16.xpose.msra.mxu0 %v3437
          %3469 = vmatprep.subr.bf16.mxu0 %v3436
          %3470 = vmatpush1.bf16.xpose.msra.mxu0 %v3435
          %3471 = vmatprep.subr.bf16.mxu0 %v3434
          %3472 = vmatpush1.bf16.xpose.msra.mxu0 %v3433
          %3473 = vmatprep.subr.bf16.mxu0 %v3432
          %3474 = vmatpush1.bf16.xpose.msra.mxu0 %v3431
          %3475 = vmatprep.subr.bf16.mxu0 %v3430
          %3476 = vmatpush1.bf16.xpose.msra.mxu0 %v3429
          %3477 = vmatprep.subr.bf16.mxu0 %v3460
          %3478 = vmatpush2.bf16.xpose.msra.mxu0 %v3459
          %3479 = vmatprep.subr.bf16.mxu0 %v3458
          %3480 = vmatpush2.bf16.xpose.msra.mxu0 %v3457
          %3481 = vmatprep.subr.bf16.mxu0 %v3456
          %3482 = vmatpush2.bf16.xpose.msra.mxu0 %v3455
          %3483 = vmatprep.subr.bf16.mxu0 %v3454
          %3484 = vmatpush2.bf16.xpose.msra.mxu0 %v3453
          %3485 = vmatprep.subr.bf16.mxu0 %v3452
          %3486 = vmatpush2.bf16.xpose.msra.mxu0 %v3451
          %3487 = vmatprep.subr.bf16.mxu0 %v3450
          %3488 = vmatpush2.bf16.xpose.msra.mxu0 %v3449
          %3489 = vmatprep.subr.bf16.mxu0 %v3448
          %3490 = vmatpush2.bf16.xpose.msra.mxu0 %v3447
          %3491 = vmatprep.subr.bf16.mxu0 %v3446
          %3492 = vmatpush2.bf16.xpose.msra.mxu0 %v3445
          %3493 = vmatprep.mubr.bf16.mxu0 %v2705
          %3494 = vmatmul.mubr.bf16.gmra.mxu0 %v2704
          %v3495 = vpop.f32.mrf.mxu0
          %v3496 = vadd.f32 0.0, %v3495
          %v3497 = vpop.f32.mrf.mxu0
          %v3498 = vadd.f32 0.0, %v3497
          %v3499 = vpop.f32.mrf.mxu0
          %v3500 = vadd.f32 0.0, %v3499
          %v3501 = vpop.f32.mrf.mxu0
          %v3502 = vadd.f32 0.0, %v3501
          %3503 = vmatprep.mubr.bf16.mxu0 %v2707
          %3504 = vmatmul.mubr.bf16.gmra.mxu0 %v2706
          %v3505 = vpop.f32.mrf.mxu0
          %v3506 = vadd.f32 0.0, %v3505
          %v3507 = vpop.f32.mrf.mxu0
          %v3508 = vadd.f32 0.0, %v3507
          %v3509 = vpop.f32.mrf.mxu0
          %v3510 = vadd.f32 0.0, %v3509
          %v3511 = vpop.f32.mrf.mxu0
          %v3512 = vadd.f32 0.0, %v3511
          %3513 = vdwg.mxu0
          %v3514 = vpack.c.bf16 %v2606, %v2602
          %v3515 = vpack.c.bf16 %v2608, %v2604
          %v3516 = vpack.c.bf16 %v3500, %v3496
          %v3517 = vpack.c.bf16 %v3502, %v3498
          %v3518 = vpack.c.bf16 %v2616, %v2612
          %v3519 = vpack.c.bf16 %v2618, %v2614
          %v3520 = vpack.c.bf16 %v3510, %v3506
          %v3521 = vpack.c.bf16 %v3512, %v3508
          %s3522 = scalar_lea.vmem %s3, 48
          %v3523 = vld [vmem:[%s3522] sm:$0xf]
          %v3524 = vld [vmem:[%s3522 + $0x4] sm:$0xf]
          %v3525 = vld [vmem:[%s3522 + $0x8] sm:$0xf]
          %v3526 = vld [vmem:[%s3522 + $0xc] sm:$0xf]
          %v3531 = vunpack.c.l.b16 %v3523
          %v3532 = vunpack.c.l.b16 %v3524
          %v3533 = vunpack.c.l.b16 %v3525
          %v3534 = vunpack.c.l.b16 %v3526
          %v3535 = vpack.c.b16 %v3532, %v3531
          %v3536 = vpack.c.b16 %v3534, %v3533
          %v3538 = vsel %vm1359, %v3535, 0
          %v3541 = vsel %vm1359, %v3536, 0
          %3543 = vmatprep.subr.bf16.mxu0 0
          %3544 = vmatpush1.bf16.msra.mxu0 0
          %3545 = vmatprep.subr.bf16.mxu0 0
          %3546 = vmatpush1.bf16.msra.mxu0 0
          %3547 = vmatprep.subr.bf16.mxu0 0
          %3548 = vmatpush1.bf16.msra.mxu0 0
          %3549 = vmatprep.subr.bf16.mxu0 0
          %3550 = vmatpush1.bf16.msra.mxu0 0
          %3551 = vmatprep.subr.bf16.mxu0 0
          %3552 = vmatpush1.bf16.msra.mxu0 0
          %3553 = vmatprep.subr.bf16.mxu0 0
          %3554 = vmatpush1.bf16.msra.mxu0 0
          %3555 = vmatprep.subr.bf16.mxu0 %v3519
          %3556 = vmatpush1.bf16.msra.mxu0 %v3518
          %3557 = vmatprep.subr.bf16.mxu0 %v3515
          %3558 = vmatpush1.bf16.msra.mxu0 %v3514
          %3559 = vmatprep.subr.bf16.mxu0 0
          %3560 = vmatpush2.bf16.msra.mxu0 0
          %3561 = vmatprep.subr.bf16.mxu0 0
          %3562 = vmatpush2.bf16.msra.mxu0 0
          %3563 = vmatprep.subr.bf16.mxu0 0
          %3564 = vmatpush2.bf16.msra.mxu0 0
          %3565 = vmatprep.subr.bf16.mxu0 0
          %3566 = vmatpush2.bf16.msra.mxu0 0
          %3567 = vmatprep.subr.bf16.mxu0 0
          %3568 = vmatpush2.bf16.msra.mxu0 0
          %3569 = vmatprep.subr.bf16.mxu0 0
          %3570 = vmatpush2.bf16.msra.mxu0 0
          %3571 = vmatprep.subr.bf16.mxu0 0
          %3572 = vmatpush2.bf16.msra.mxu0 0
          %3573 = vmatprep.subr.bf16.mxu0 0
          %3574 = vmatpush2.bf16.msra.mxu0 0
          %3575 = vmatprep.mubr.bf16.mxu0 0
          %3576 = vmatmul.mubr.bf16.gmra.mxu0 %v3538
          %v3577 = vpop.f32.mrf.mxu0
          %v3578 = vadd.f32 0.0, %v3577
          %v3579 = vpop.f32.mrf.mxu0
          %v3580 = vadd.f32 0.0, %v3579
          %v3581 = vpop.f32.mrf.mxu0
          %v3582 = vadd.f32 0.0, %v3581
          %v3583 = vpop.f32.mrf.mxu0
          %v3584 = vadd.f32 0.0, %v3583
          %3585 = vmatprep.mubr.bf16.mxu0 0
          %3586 = vmatmul.mubr.bf16.gmra.mxu0 %v3541
          %v3587 = vpop.f32.mrf.mxu0
          %v3588 = vadd.f32 0.0, %v3587
          %v3589 = vpop.f32.mrf.mxu0
          %v3590 = vadd.f32 0.0, %v3589
          %v3591 = vpop.f32.mrf.mxu0
          %v3592 = vadd.f32 0.0, %v3591
          %v3593 = vpop.f32.mrf.mxu0
          %v3594 = vadd.f32 0.0, %v3593
          %3595 = vdwg.mxu0
          %3596 = vmatprep.subr.bf16.mxu0 0
          %3597 = vmatpush1.bf16.msra.mxu0 0
          %3598 = vmatprep.subr.bf16.mxu0 0
          %3599 = vmatpush1.bf16.msra.mxu0 0
          %3600 = vmatprep.subr.bf16.mxu0 0
          %3601 = vmatpush1.bf16.msra.mxu0 0
          %3602 = vmatprep.subr.bf16.mxu0 0
          %3603 = vmatpush1.bf16.msra.mxu0 0
          %3604 = vmatprep.subr.bf16.mxu0 0
          %3605 = vmatpush1.bf16.msra.mxu0 0
          %3606 = vmatprep.subr.bf16.mxu0 0
          %3607 = vmatpush1.bf16.msra.mxu0 0
          %3608 = vmatprep.subr.bf16.mxu0 %v3521
          %3609 = vmatpush1.bf16.msra.mxu0 %v3520
          %3610 = vmatprep.subr.bf16.mxu0 %v3517
          %3611 = vmatpush1.bf16.msra.mxu0 %v3516
          %3612 = vmatprep.subr.bf16.mxu0 0
          %3613 = vmatpush2.bf16.msra.mxu0 0
          %3614 = vmatprep.subr.bf16.mxu0 0
          %3615 = vmatpush2.bf16.msra.mxu0 0
          %3616 = vmatprep.subr.bf16.mxu0 0
          %3617 = vmatpush2.bf16.msra.mxu0 0
          %3618 = vmatprep.subr.bf16.mxu0 0
          %3619 = vmatpush2.bf16.msra.mxu0 0
          %3620 = vmatprep.subr.bf16.mxu0 0
          %3621 = vmatpush2.bf16.msra.mxu0 0
          %3622 = vmatprep.subr.bf16.mxu0 0
          %3623 = vmatpush2.bf16.msra.mxu0 0
          %3624 = vmatprep.subr.bf16.mxu0 0
          %3625 = vmatpush2.bf16.msra.mxu0 0
          %3626 = vmatprep.subr.bf16.mxu0 0
          %3627 = vmatpush2.bf16.msra.mxu0 0
          %3628 = vmatprep.mubr.bf16.mxu0 0
          %3629 = vmatmul.mubr.bf16.gmra.mxu0 %v3538
          %v3630 = vpop.f32.mrf.mxu0
          %v3631 = vadd.f32 0.0, %v3630
          %v3632 = vpop.f32.mrf.mxu0
          %v3633 = vadd.f32 0.0, %v3632
          %v3634 = vpop.f32.mrf.mxu0
          %v3635 = vadd.f32 0.0, %v3634
          %v3636 = vpop.f32.mrf.mxu0
          %v3637 = vadd.f32 0.0, %v3636
          %3638 = vmatprep.mubr.bf16.mxu0 0
          %3639 = vmatmul.mubr.bf16.gmra.mxu0 %v3541
          %v3640 = vpop.f32.mrf.mxu0
          %v3641 = vadd.f32 0.0, %v3640
          %v3642 = vpop.f32.mrf.mxu0
          %v3643 = vadd.f32 0.0, %v3642
          %v3644 = vpop.f32.mrf.mxu0
          %v3645 = vadd.f32 0.0, %v3644
          %v3646 = vpop.f32.mrf.mxu0
          %v3647 = vadd.f32 0.0, %v3646
          %3648 = vdwg.mxu0
          %v3649 = vld [vmem:[%s4] sm:$0xf]
          %v3650 = vld [vmem:[%s4 + $0x4] sm:$0xf]
          %v3651 = vld [vmem:[%s4 + $0x8] sm:$0xf]
          %v3652 = vld [vmem:[%s4 + $0xc] sm:$0xf]
          %s3653 = scalar_lea.vmem %s4, 16
          %v3654 = vld [vmem:[%s3653] sm:$0xf]
          %v3655 = vld [vmem:[%s3653 + $0x4] sm:$0xf]
          %v3656 = vld [vmem:[%s3653 + $0x8] sm:$0xf]
          %v3657 = vld [vmem:[%s3653 + $0xc] sm:$0xf]
          %v3658 = vpack.c.bf16 %v3582, %v3578
          %v3659 = vpack.c.bf16 %v3584, %v3580
          %v3660 = vpack.c.bf16 %v3635, %v3631
          %v3661 = vpack.c.bf16 %v3637, %v3633
          %v3662 = vpack.c.bf16 %v3592, %v3588
          %v3663 = vpack.c.bf16 %v3594, %v3590
          %v3664 = vpack.c.bf16 %v3645, %v3641
          %v3665 = vpack.c.bf16 %v3647, %v3643
          %v3670 = vunpack.c.l.b16 %v3654
          %v3671 = vunpack.c.l.b16 %v3655
          %v3672 = vunpack.c.l.b16 %v3656
          %v3673 = vunpack.c.l.b16 %v3657
          %v3674 = vpack.c.b16 %v3671, %v3670
          %v3675 = vpack.c.b16 %v3673, %v3672
          %v3677 = vsel %vm1359, %v3674, 0
          %v3680 = vsel %vm1359, %v3675, 0
          %3682 = vmatprep.subr.bf16.mxu0 0
          %3683 = vmatpush1.bf16.msra.mxu0 0
          %3684 = vmatprep.subr.bf16.mxu0 0
          %3685 = vmatpush1.bf16.msra.mxu0 0
          %3686 = vmatprep.subr.bf16.mxu0 0
          %3687 = vmatpush1.bf16.msra.mxu0 0
          %3688 = vmatprep.subr.bf16.mxu0 0
          %3689 = vmatpush1.bf16.msra.mxu0 0
          %3690 = vmatprep.subr.bf16.mxu0 0
          %3691 = vmatpush1.bf16.msra.mxu0 0
          %3692 = vmatprep.subr.bf16.mxu0 0
          %3693 = vmatpush1.bf16.msra.mxu0 0
          %3694 = vmatprep.subr.bf16.mxu0 %v3663
          %3695 = vmatpush1.bf16.msra.mxu0 %v3662
          %3696 = vmatprep.subr.bf16.mxu0 %v3659
          %3697 = vmatpush1.bf16.msra.mxu0 %v3658
          %3698 = vmatprep.subr.bf16.mxu0 0
          %3699 = vmatpush2.bf16.msra.mxu0 0
          %3700 = vmatprep.subr.bf16.mxu0 0
          %3701 = vmatpush2.bf16.msra.mxu0 0
          %3702 = vmatprep.subr.bf16.mxu0 0
          %3703 = vmatpush2.bf16.msra.mxu0 0
          %3704 = vmatprep.subr.bf16.mxu0 0
          %3705 = vmatpush2.bf16.msra.mxu0 0
          %3706 = vmatprep.subr.bf16.mxu0 0
          %3707 = vmatpush2.bf16.msra.mxu0 0
          %3708 = vmatprep.subr.bf16.mxu0 0
          %3709 = vmatpush2.bf16.msra.mxu0 0
          %3710 = vmatprep.subr.bf16.mxu0 0
          %3711 = vmatpush2.bf16.msra.mxu0 0
          %3712 = vmatprep.subr.bf16.mxu0 0
          %3713 = vmatpush2.bf16.msra.mxu0 0
          %3714 = vmatprep.mubr.bf16.mxu0 0
          %3715 = vmatmul.mubr.bf16.gmra.mxu0 %v3677
          %v3716 = vpop.f32.mrf.mxu0
          %v3717 = vadd.f32 0.0, %v3716
          %v3718 = vpop.f32.mrf.mxu0
          %v3719 = vadd.f32 0.0, %v3718
          %v3720 = vpop.f32.mrf.mxu0
          %v3721 = vadd.f32 0.0, %v3720
          %v3722 = vpop.f32.mrf.mxu0
          %v3723 = vadd.f32 0.0, %v3722
          %3724 = vmatprep.mubr.bf16.mxu0 0
          %3725 = vmatmul.mubr.bf16.gmra.mxu0 %v3680
          %v3726 = vpop.f32.mrf.mxu0
          %v3727 = vadd.f32 0.0, %v3726
          %v3728 = vpop.f32.mrf.mxu0
          %v3729 = vadd.f32 0.0, %v3728
          %v3730 = vpop.f32.mrf.mxu0
          %v3731 = vadd.f32 0.0, %v3730
          %v3732 = vpop.f32.mrf.mxu0
          %v3733 = vadd.f32 0.0, %v3732
          %3734 = vdwg.mxu0
          %3735 = vmatprep.subr.bf16.mxu0 0
          %3736 = vmatpush1.bf16.msra.mxu0 0
          %3737 = vmatprep.subr.bf16.mxu0 0
          %3738 = vmatpush1.bf16.msra.mxu0 0
          %3739 = vmatprep.subr.bf16.mxu0 0
          %3740 = vmatpush1.bf16.msra.mxu0 0
          %3741 = vmatprep.subr.bf16.mxu0 0
          %3742 = vmatpush1.bf16.msra.mxu0 0
          %3743 = vmatprep.subr.bf16.mxu0 0
          %3744 = vmatpush1.bf16.msra.mxu0 0
          %3745 = vmatprep.subr.bf16.mxu0 0
          %3746 = vmatpush1.bf16.msra.mxu0 0
          %3747 = vmatprep.subr.bf16.mxu0 %v3665
          %3748 = vmatpush1.bf16.msra.mxu0 %v3664
          %3749 = vmatprep.subr.bf16.mxu0 %v3661
          %3750 = vmatpush1.bf16.msra.mxu0 %v3660
          %3751 = vmatprep.subr.bf16.mxu0 0
          %3752 = vmatpush2.bf16.msra.mxu0 0
          %3753 = vmatprep.subr.bf16.mxu0 0
          %3754 = vmatpush2.bf16.msra.mxu0 0
          %3755 = vmatprep.subr.bf16.mxu0 0
          %3756 = vmatpush2.bf16.msra.mxu0 0
          %3757 = vmatprep.subr.bf16.mxu0 0
          %3758 = vmatpush2.bf16.msra.mxu0 0
          %3759 = vmatprep.subr.bf16.mxu0 0
          %3760 = vmatpush2.bf16.msra.mxu0 0
          %3761 = vmatprep.subr.bf16.mxu0 0
          %3762 = vmatpush2.bf16.msra.mxu0 0
          %3763 = vmatprep.subr.bf16.mxu0 0
          %3764 = vmatpush2.bf16.msra.mxu0 0
          %3765 = vmatprep.subr.bf16.mxu0 0
          %3766 = vmatpush2.bf16.msra.mxu0 0
          %3767 = vmatprep.mubr.bf16.mxu0 0
          %3768 = vmatmul.mubr.bf16.gmra.mxu0 %v3677
          %v3769 = vpop.f32.mrf.mxu0
          %v3770 = vadd.f32 0.0, %v3769
          %v3771 = vpop.f32.mrf.mxu0
          %v3772 = vadd.f32 0.0, %v3771
          %v3773 = vpop.f32.mrf.mxu0
          %v3774 = vadd.f32 0.0, %v3773
          %v3775 = vpop.f32.mrf.mxu0
          %v3776 = vadd.f32 0.0, %v3775
          %3777 = vmatprep.mubr.bf16.mxu0 0
          %3778 = vmatmul.mubr.bf16.gmra.mxu0 %v3680
          %v3779 = vpop.f32.mrf.mxu0
          %v3780 = vadd.f32 0.0, %v3779
          %v3781 = vpop.f32.mrf.mxu0
          %v3782 = vadd.f32 0.0, %v3781
          %v3783 = vpop.f32.mrf.mxu0
          %v3784 = vadd.f32 0.0, %v3783
          %v3785 = vpop.f32.mrf.mxu0
          %v3786 = vadd.f32 0.0, %v3785
          %3787 = vdwg.mxu0
          %v3792 = vunpack.c.l.b16 %v3649
          %v3793 = vunpack.c.l.b16 %v3650
          %v3794 = vunpack.c.l.b16 %v3651
          %v3795 = vunpack.c.l.b16 %v3652
          %v3796 = vpack.c.b16 %v3793, %v3792
          %v3797 = vpack.c.b16 %v3795, %v3794
          %v3799 = vsel %vm1359, %v3796, 0
          %v3802 = vsel %vm1359, %v3797, 0
          %3804 = vmatprep.subr.bf16.mxu0 0
          %3805 = vmatpush1.bf16.msra.mxu0 0
          %3806 = vmatprep.subr.bf16.mxu0 0
          %3807 = vmatpush1.bf16.msra.mxu0 0
          %3808 = vmatprep.subr.bf16.mxu0 0
          %3809 = vmatpush1.bf16.msra.mxu0 0
          %3810 = vmatprep.subr.bf16.mxu0 0
          %3811 = vmatpush1.bf16.msra.mxu0 0
          %3812 = vmatprep.subr.bf16.mxu0 0
          %3813 = vmatpush1.bf16.msra.mxu0 0
          %3814 = vmatprep.subr.bf16.mxu0 0
          %3815 = vmatpush1.bf16.msra.mxu0 0
          %3816 = vmatprep.subr.bf16.mxu0 %v1334
          %3817 = vmatpush1.bf16.msra.mxu0 %v1333
          %3818 = vmatprep.subr.bf16.mxu0 %v1330
          %3819 = vmatpush1.bf16.msra.mxu0 %v1329
          %3820 = vmatprep.subr.bf16.mxu0 0
          %3821 = vmatpush2.bf16.msra.mxu0 0
          %3822 = vmatprep.subr.bf16.mxu0 0
          %3823 = vmatpush2.bf16.msra.mxu0 0
          %3824 = vmatprep.subr.bf16.mxu0 0
          %3825 = vmatpush2.bf16.msra.mxu0 0
          %3826 = vmatprep.subr.bf16.mxu0 0
          %3827 = vmatpush2.bf16.msra.mxu0 0
          %3828 = vmatprep.subr.bf16.mxu0 0
          %3829 = vmatpush2.bf16.msra.mxu0 0
          %3830 = vmatprep.subr.bf16.mxu0 0
          %3831 = vmatpush2.bf16.msra.mxu0 0
          %3832 = vmatprep.subr.bf16.mxu0 0
          %3833 = vmatpush2.bf16.msra.mxu0 0
          %3834 = vmatprep.subr.bf16.mxu0 0
          %3835 = vmatpush2.bf16.msra.mxu0 0
          %3836 = vmatprep.mubr.bf16.mxu0 0
          %3837 = vmatmul.mubr.bf16.gmra.mxu0 %v3799
          %v3838 = vpop.f32.mrf.mxu0
          %v3839 = vadd.f32 %v3717, %v3838
          %v3840 = vpop.f32.mrf.mxu0
          %v3841 = vadd.f32 %v3719, %v3840
          %v3842 = vpop.f32.mrf.mxu0
          %v3843 = vadd.f32 %v3721, %v3842
          %v3844 = vpop.f32.mrf.mxu0
          %v3845 = vadd.f32 %v3723, %v3844
          %3846 = vmatprep.mubr.bf16.mxu0 0
          %3847 = vmatmul.mubr.bf16.gmra.mxu0 %v3802
          %v3848 = vpop.f32.mrf.mxu0
          %v3849 = vadd.f32 %v3727, %v3848
          %v3850 = vpop.f32.mrf.mxu0
          %v3851 = vadd.f32 %v3729, %v3850
          %v3852 = vpop.f32.mrf.mxu0
          %v3853 = vadd.f32 %v3731, %v3852
          %v3854 = vpop.f32.mrf.mxu0
          %v3855 = vadd.f32 %v3733, %v3854
          %3856 = vdwg.mxu0
          %3857 = vmatprep.subr.bf16.mxu0 0
          %3858 = vmatpush1.bf16.msra.mxu0 0
          %3859 = vmatprep.subr.bf16.mxu0 0
          %3860 = vmatpush1.bf16.msra.mxu0 0
          %3861 = vmatprep.subr.bf16.mxu0 0
          %3862 = vmatpush1.bf16.msra.mxu0 0
          %3863 = vmatprep.subr.bf16.mxu0 0
          %3864 = vmatpush1.bf16.msra.mxu0 0
          %3865 = vmatprep.subr.bf16.mxu0 0
          %3866 = vmatpush1.bf16.msra.mxu0 0
          %3867 = vmatprep.subr.bf16.mxu0 0
          %3868 = vmatpush1.bf16.msra.mxu0 0
          %3869 = vmatprep.subr.bf16.mxu0 %v1336
          %3870 = vmatpush1.bf16.msra.mxu0 %v1335
          %3871 = vmatprep.subr.bf16.mxu0 %v1332
          %3872 = vmatpush1.bf16.msra.mxu0 %v1331
          %3873 = vmatprep.subr.bf16.mxu0 0
          %3874 = vmatpush2.bf16.msra.mxu0 0
          %3875 = vmatprep.subr.bf16.mxu0 0
          %3876 = vmatpush2.bf16.msra.mxu0 0
          %3877 = vmatprep.subr.bf16.mxu0 0
          %3878 = vmatpush2.bf16.msra.mxu0 0
          %3879 = vmatprep.subr.bf16.mxu0 0
          %3880 = vmatpush2.bf16.msra.mxu0 0
          %3881 = vmatprep.subr.bf16.mxu0 0
          %3882 = vmatpush2.bf16.msra.mxu0 0
          %3883 = vmatprep.subr.bf16.mxu0 0
          %3884 = vmatpush2.bf16.msra.mxu0 0
          %3885 = vmatprep.subr.bf16.mxu0 0
          %3886 = vmatpush2.bf16.msra.mxu0 0
          %3887 = vmatprep.subr.bf16.mxu0 0
          %3888 = vmatpush2.bf16.msra.mxu0 0
          %3889 = vmatprep.mubr.bf16.mxu0 0
          %3890 = vmatmul.mubr.bf16.gmra.mxu0 %v3799
          %v3891 = vpop.f32.mrf.mxu0
          %v3892 = vadd.f32 %v3770, %v3891
          %v3893 = vpop.f32.mrf.mxu0
          %v3894 = vadd.f32 %v3772, %v3893
          %v3895 = vpop.f32.mrf.mxu0
          %v3896 = vadd.f32 %v3774, %v3895
          %v3897 = vpop.f32.mrf.mxu0
          %v3898 = vadd.f32 %v3776, %v3897
          %3899 = vmatprep.mubr.bf16.mxu0 0
          %3900 = vmatmul.mubr.bf16.gmra.mxu0 %v3802
          %v3901 = vpop.f32.mrf.mxu0
          %v3902 = vadd.f32 %v3780, %v3901
          %v3903 = vpop.f32.mrf.mxu0
          %v3904 = vadd.f32 %v3782, %v3903
          %v3905 = vpop.f32.mrf.mxu0
          %v3906 = vadd.f32 %v3784, %v3905
          %v3907 = vpop.f32.mrf.mxu0
          %v3908 = vadd.f32 %v3786, %v3907
          %3909 = vdwg.mxu0
          %v3910 = vld [vmem:[%s5] sm:$0xff]
          %v3911 = vld [vmem:[%s5 + $0x8] sm:$0xff]
          %v3912 = vld [vmem:[%s5 + $0x10] sm:$0xff]
          %v3913 = vld [vmem:[%s5 + $0x18] sm:$0xff]
          %3915 = vset.pattern.permute.xlu0 0
          %3916 = vperm.xlu0 %3915, %v3910
          %v3917 = vpop.permute.xlu0 %3916
          %3920 = vset.pattern.permute.xlu0 0
          %3921 = vperm.xlu0 %3920, %v3911
          %v3922 = vpop.permute.xlu0 %3921
          %3925 = vset.pattern.permute.xlu0 0
          %3926 = vperm.xlu0 %3925, %v3912
          %v3927 = vpop.permute.xlu0 %3926
          %3930 = vset.pattern.permute.xlu0 0
          %3931 = vperm.xlu0 %3930, %v3913
          %v3932 = vpop.permute.xlu0 %3931
          %v3934 = vadd.f32 %v3839, %v3917
          %v3935 = vadd.f32 %v3841, %v3917
          %v3936 = vadd.f32 %v3892, %v3917
          %v3937 = vadd.f32 %v3894, %v3917
          %v3938 = vadd.f32 %v3843, %v3922
          %v3939 = vadd.f32 %v3845, %v3922
          %v3940 = vadd.f32 %v3896, %v3922
          %v3941 = vadd.f32 %v3898, %v3922
          %v3942 = vadd.f32 %v3849, %v3927
          %v3943 = vadd.f32 %v3851, %v3927
          %v3944 = vadd.f32 %v3902, %v3927
          %v3945 = vadd.f32 %v3904, %v3927
          %v3946 = vadd.f32 %v3853, %v3932
          %v3947 = vadd.f32 %v3855, %v3932
          %v3948 = vadd.f32 %v3906, %v3932
          %v3949 = vadd.f32 %v3908, %v3932
          %v3950 = vmax.f32 %v3934, 0.0
          %v3951 = vmax.f32 %v3935, 0.0
          %v3952 = vmax.f32 %v3936, 0.0
          %v3953 = vmax.f32 %v3937, 0.0
          %v3954 = vmax.f32 %v3938, 0.0
          %v3955 = vmax.f32 %v3939, 0.0
          %v3956 = vmax.f32 %v3940, 0.0
          %v3957 = vmax.f32 %v3941, 0.0
          %v3958 = vmax.f32 %v3942, 0.0
          %v3959 = vmax.f32 %v3943, 0.0
          %v3960 = vmax.f32 %v3944, 0.0
          %v3961 = vmax.f32 %v3945, 0.0
          %v3962 = vmax.f32 %v3946, 0.0
          %v3963 = vmax.f32 %v3947, 0.0
          %v3964 = vmax.f32 %v3948, 0.0
          %v3965 = vmax.f32 %v3949, 0.0
          %v3966 = vsub.f32 %v3950, %v3952
          %v3967 = vsub.f32 %v3951, %v3953
          %v3968 = vsub.f32 %v3954, %v3956
          %v3969 = vsub.f32 %v3955, %v3957
          %v3970 = vsub.f32 %v3958, %v3960
          %v3971 = vsub.f32 %v3959, %v3961
          %v3972 = vsub.f32 %v3962, %v3964
          %v3973 = vsub.f32 %v3963, %v3965
          %v3974 = vand.u32 2147483647, %v3966
          %v3975 = vand.u32 2147483647, %v3967
          %v3976 = vand.u32 2147483647, %v3968
          %v3977 = vand.u32 2147483647, %v3969
          %v3978 = vand.u32 2147483647, %v3970
          %v3979 = vand.u32 2147483647, %v3971
          %v3980 = vand.u32 2147483647, %v3972
          %v3981 = vand.u32 2147483647, %v3973
          %v3982 = vpack.c.bf16 %v3976, %v3974
          %v3983 = vpack.c.bf16 %v3977, %v3975
          %v3984 = vpack.c.bf16 %v3980, %v3978
          %v3985 = vpack.c.bf16 %v3981, %v3979
          %v3986 = vld [vmem:[%s6] sm:$0xf]
          %v3987 = vld [vmem:[%s7] sm:$0xff]
          %3989 = vset.pattern.permute.xlu0 0
          %3990 = vperm.xlu0 %3989, %v3987
          %v3991 = vpop.permute.xlu0 %3990
          %v3994 = vsel %vm1359, %v3986, 0
          %3996 = vmatprep.subr.bf16.mxu0 0
          %3997 = vmatpush1.bf16.msra.mxu0 0
          %3998 = vmatprep.subr.bf16.mxu0 0
          %3999 = vmatpush1.bf16.msra.mxu0 0
          %4000 = vmatprep.subr.bf16.mxu0 0
          %4001 = vmatpush1.bf16.msra.mxu0 0
          %4002 = vmatprep.subr.bf16.mxu0 0
          %4003 = vmatpush1.bf16.msra.mxu0 0
          %4004 = vmatprep.subr.bf16.mxu0 0
          %4005 = vmatpush1.bf16.msra.mxu0 0
          %4006 = vmatprep.subr.bf16.mxu0 0
          %4007 = vmatpush1.bf16.msra.mxu0 0
          %4008 = vmatprep.subr.bf16.mxu0 %v3985
          %4009 = vmatpush1.bf16.msra.mxu0 %v3984
          %4010 = vmatprep.subr.bf16.mxu0 %v3983
          %4011 = vmatpush1.bf16.msra.mxu0 %v3982
          %4012 = vmatprep.subr.bf16.mxu0 0
          %4013 = vmatpush2.bf16.msra.mxu0 0
          %4014 = vmatprep.subr.bf16.mxu0 0
          %4015 = vmatpush2.bf16.msra.mxu0 0
          %4016 = vmatprep.subr.bf16.mxu0 0
          %4017 = vmatpush2.bf16.msra.mxu0 0
          %4018 = vmatprep.subr.bf16.mxu0 0
          %4019 = vmatpush2.bf16.msra.mxu0 0
          %4020 = vmatprep.subr.bf16.mxu0 0
          %4021 = vmatpush2.bf16.msra.mxu0 0
          %4022 = vmatprep.subr.bf16.mxu0 0
          %4023 = vmatpush2.bf16.msra.mxu0 0
          %4024 = vmatprep.subr.bf16.mxu0 0
          %4025 = vmatpush2.bf16.msra.mxu0 0
          %4026 = vmatprep.subr.bf16.mxu0 0
          %4027 = vmatpush2.bf16.msra.mxu0 0
          %4028 = vmatprep.mubr.bf16.mxu0 0
          %4029 = vmatmul.mubr.bf16.gmra.mxu0 %v3994
          %v4030 = vpop.f32.mrf.mxu0
          %v4031 = vadd.f32 %v3991, %v4030
          %v4032 = vpop.f32.mrf.mxu0
          %v4033 = vadd.f32 %v3991, %v4032
          %v4034 = vpop.f32.mrf.mxu0
          %v4035 = vpop.f32.mrf.mxu0
          %4036 = vdwg.mxu0
          %v4037 = vmax.f32 %v4031, 0.0
          %v4038 = vmax.f32 %v4033, 0.0
          %v4039 = vld [vmem:[%s8] sm:$0x3]
          %v4040 = vpack.c.bf16 %v4037, %v4037
          %v4041 = vpack.c.bf16 %v4038, %v4038
          %v4042 = vld [vmem:[%s9] sm:$0x7]
          %4044 = vset.pattern.permute.xlu0 0
          %4045 = vperm.xlu0 %4044, %v4042
          %v4046 = vpop.permute.xlu0 %4045
          %vm4048 = vcmask 64512
          %v4050 = vsel %vm4048, %v4039, 0
          %vm4052 = vcmask 1043456
          %v4054 = vsel %vm4052, %v4040, 0
          %v4057 = vsel %vm4052, %v4041, 0
          %4059 = vmatprep.subr.bf16.mxu0 0
          %4060 = vmatpush1.bf16.msra.mxu0 0
          %4061 = vmatprep.subr.bf16.mxu0 0
          %4062 = vmatpush1.bf16.msra.mxu0 0
          %4063 = vmatprep.subr.bf16.mxu0 0
          %4064 = vmatpush1.bf16.msra.mxu0 0
          %4065 = vmatprep.subr.bf16.mxu0 0
          %4066 = vmatpush1.bf16.msra.mxu0 0
          %4067 = vmatprep.subr.bf16.mxu0 0
          %4068 = vmatpush1.bf16.msra.mxu0 0
          %4069 = vmatprep.subr.bf16.mxu0 0
          %4070 = vmatpush1.bf16.msra.mxu0 0
          %4071 = vmatprep.subr.bf16.mxu0 0
          %4072 = vmatpush1.bf16.msra.mxu0 0
          %4073 = vmatprep.subr.bf16.mxu0 %v4057
          %4074 = vmatpush1.bf16.msra.mxu0 %v4054
          %4075 = vmatprep.subr.bf16.mxu0 0
          %4076 = vmatpush2.bf16.msra.mxu0 0
          %4077 = vmatprep.subr.bf16.mxu0 0
          %4078 = vmatpush2.bf16.msra.mxu0 0
          %4079 = vmatprep.subr.bf16.mxu0 0
          %4080 = vmatpush2.bf16.msra.mxu0 0
          %4081 = vmatprep.subr.bf16.mxu0 0
          %4082 = vmatpush2.bf16.msra.mxu0 0
          %4083 = vmatprep.subr.bf16.mxu0 0
          %4084 = vmatpush2.bf16.msra.mxu0 0
          %4085 = vmatprep.subr.bf16.mxu0 0
          %4086 = vmatpush2.bf16.msra.mxu0 0
          %4087 = vmatprep.subr.bf16.mxu0 0
          %4088 = vmatpush2.bf16.msra.mxu0 0
          %4089 = vmatprep.subr.bf16.mxu0 0
          %4090 = vmatpush2.bf16.msra.mxu0 0
          %4091 = vmatprep.mubr.bf16.mxu0 0
          %4092 = vmatmul.mubr.bf16.gmra.mxu0 %v4050
          %v4093 = vpop.f32.mrf.mxu0
          %v4094 = vadd.f32 %v4046, %v4093
          %v4095 = vpop.f32.mrf.mxu0
          %v4096 = vadd.f32 %v4046, %v4095
          %v4097 = vpop.f32.mrf.mxu0
          %v4098 = vpop.f32.mrf.mxu0
          %4099 = vdwg.mxu0
          %v4100 = vpack.c.bf16 %v4094, %v4094
          %v4101 = vpack.c.bf16 %v4096, %v4096
          %v4104 = vcombine.low %v4100, %v4101
          %v4106 = vunpack.c.l.s4 1983009808
          %v4107 = vunpack.c.0.s8 %v4106
          %v4108 = vlaneseq
          %v4109 = vshrl.u32 %v4108, 7
          %v4110 = vsub.s32 %v4107, %v4109
          %v4111 = vrot.slane %v4104, %v4110
          %vm4113 = vcmask 1041408
          %vm4114 = vsmask.f32 1280
          %vm4115 = vmand %vm4113, %vm4114
          %vm4116 = vcmask 1043458
          %vm4117 = vsmask.f32 3328
          %vm4118 = vmand %vm4116, %vm4117
          %vm4119 = vmor %vm4118, %vm4115
          %v4120 = vld [vmem:[#allocation2] sm:$0xf]
          %v4121 = vsel %vm4119, %v4111, %v4120
          %4122 = vst [vmem:[#allocation2] sm:$0xf] %v4121
        $region91: #{change_detection_forward.1} parent=82 // pred_fallthru
          _
        %v4123 = vld [vmem:[#allocation2] sm:$0xf]
        %v4124 = vld [vmem:[%s899] sm:$0xff]
        %v4125 = vld [vmem:[%s899 + $0x8] sm:$0xff]
        %v4126 = vld [vmem:[%s899 + $0x10] sm:$0xff]
        %v4127 = vld [vmem:[%s899 + $0x18] sm:$0xff]
        %v4128 = vld [vmem:[%s899 + $0x20] sm:$0xff]
        %v4129 = vld [vmem:[%s899 + $0x28] sm:$0xff]
        %v4130 = vld [vmem:[%s899 + $0x30] sm:$0xff]
        %v4131 = vld [vmem:[%s899 + $0x38] sm:$0xff]
        %v4132 = vld [vmem:[%s899 + $0x40] sm:$0xff]
        %v4133 = vld [vmem:[%s899 + $0x48] sm:$0xff]
        %v4134 = vld [vmem:[%s899 + $0x50] sm:$0xff]
        %v4135 = vld [vmem:[%s899 + $0x58] sm:$0xff]
        %v4136 = vld [vmem:[%s899 + $0x60] sm:$0xff]
        %v4137 = vld [vmem:[%s899 + $0x68] sm:$0xff]
        %v4138 = vld [vmem:[%s899 + $0x70] sm:$0xff]
        %v4139 = vld [vmem:[%s899 + $0x78] sm:$0xff]
        %v4140 = vld [vmem:[%s899 + $0x80] sm:$0xff]
        %v4141 = vld [vmem:[%s899 + $0x88] sm:$0xff]
        %v4142 = vld [vmem:[%s899 + $0x90] sm:$0xff]
        %v4143 = vld [vmem:[%s899 + $0x98] sm:$0xff]
        %v4144 = vld [vmem:[%s899 + $0xa0] sm:$0xff]
        %v4145 = vld [vmem:[%s899 + $0xa8] sm:$0xff]
        %v4146 = vld [vmem:[%s899 + $0xb0] sm:$0xff]
        %v4147 = vld [vmem:[%s899 + $0xb8] sm:$0xff]
        %v4148 = vld [vmem:[%s899 + $0xc0] sm:$0xff]
        %v4149 = vld [vmem:[%s899 + $0xc8] sm:$0xff]
        %v4150 = vld [vmem:[%s899 + $0xd0] sm:$0xff]
        %v4151 = vld [vmem:[%s899 + $0xd8] sm:$0xff]
        %v4152 = vld [vmem:[%s899 + $0xe0] sm:$0xff]
        %v4153 = vld [vmem:[%s899 + $0xe8] sm:$0xff]
        %v4154 = vld [vmem:[%s899 + $0xf0] sm:$0xff]
        %v4155 = vld [vmem:[%s899 + $0xf8] sm:$0xff]
        %v4156 = vld [vmem:[%s899 + $0x100] sm:$0xff]
        %v4157 = vld [vmem:[%s899 + $0x108] sm:$0xff]
        %v4158 = vld [vmem:[%s899 + $0x110] sm:$0xff]
        %v4159 = vld [vmem:[%s899 + $0x118] sm:$0xff]
        %v4160 = vld [vmem:[%s899 + $0x120] sm:$0xff]
        %v4161 = vld [vmem:[%s899 + $0x128] sm:$0xff]
        %v4162 = vld [vmem:[%s899 + $0x130] sm:$0xff]
        %v4163 = vld [vmem:[%s899 + $0x138] sm:$0xff]
        %v4164 = vld [vmem:[%s899 + $0x140] sm:$0xff]
        %v4165 = vld [vmem:[%s899 + $0x148] sm:$0xff]
        %v4166 = vld [vmem:[%s899 + $0x150] sm:$0xff]
        %v4167 = vld [vmem:[%s899 + $0x158] sm:$0xff]
        %v4168 = vld [vmem:[%s899 + $0x160] sm:$0xff]
        %v4169 = vld [vmem:[%s899 + $0x168] sm:$0xff]
        %v4170 = vld [vmem:[%s899 + $0x170] sm:$0xff]
        %v4171 = vld [vmem:[%s899 + $0x178] sm:$0xff]
        %v4172 = vld [vmem:[%s899 + $0x180] sm:$0xff]
        %v4173 = vld [vmem:[%s899 + $0x188] sm:$0xff]
        %v4174 = vld [vmem:[%s899 + $0x190] sm:$0xff]
        %v4175 = vld [vmem:[%s899 + $0x198] sm:$0xff]
        %v4176 = vld [vmem:[%s899 + $0x1a0] sm:$0xff]
        %v4177 = vld [vmem:[%s899 + $0x1a8] sm:$0xff]
        %v4178 = vld [vmem:[%s899 + $0x1b0] sm:$0xff]
        %v4179 = vld [vmem:[%s899 + $0x1b8] sm:$0xff]
        %v4180 = vld [vmem:[%s899 + $0x1c0] sm:$0xff]
        %v4181 = vld [vmem:[%s899 + $0x1c8] sm:$0xff]
        %v4182 = vld [vmem:[%s899 + $0x1d0] sm:$0xff]
        %v4183 = vld [vmem:[%s899 + $0x1d8] sm:$0xff]
        %v4184 = vld [vmem:[%s899 + $0x1e0] sm:$0xff]
        %v4185 = vld [vmem:[%s899 + $0x1e8] sm:$0xff]
        %v4186 = vld [vmem:[%s899 + $0x1f0] sm:$0xff]
        %v4187 = vld [vmem:[%s899 + $0x1f8] sm:$0xff]
        %v4188 = vld [vmem:[%s899 + $0x200] sm:$0xff]
        %v4189 = vld [vmem:[%s899 + $0x208] sm:$0xff]
        %v4190 = vld [vmem:[%s899 + $0x210] sm:$0xff]
        %v4191 = vld [vmem:[%s899 + $0x218] sm:$0xff]
        %v4192 = vld [vmem:[%s899 + $0x220] sm:$0xff]
        %v4193 = vld [vmem:[%s899 + $0x228] sm:$0xff]
        %v4194 = vld [vmem:[%s899 + $0x230] sm:$0xff]
        %v4195 = vld [vmem:[%s899 + $0x238] sm:$0xff]
        %v4196 = vld [vmem:[%s899 + $0x240] sm:$0xff]
        %v4197 = vld [vmem:[%s899 + $0x248] sm:$0xff]
        %v4198 = vld [vmem:[%s899 + $0x250] sm:$0xff]
        %v4199 = vld [vmem:[%s899 + $0x258] sm:$0xff]
        %v4200 = vld [vmem:[%s899 + $0x260] sm:$0xff]
        %v4201 = vld [vmem:[%s899 + $0x268] sm:$0xff]
        %v4202 = vld [vmem:[%s899 + $0x270] sm:$0xff]
        %v4203 = vld [vmem:[%s899 + $0x278] sm:$0xff]
        %v4204 = vld [vmem:[%s899 + $0x280] sm:$0xff]
        %v4205 = vld [vmem:[%s899 + $0x288] sm:$0xff]
        %v4206 = vld [vmem:[%s899 + $0x290] sm:$0xff]
        %v4207 = vld [vmem:[%s899 + $0x298] sm:$0xff]
        %v4208 = vld [vmem:[%s899 + $0x2a0] sm:$0xff]
        %v4209 = vld [vmem:[%s899 + $0x2a8] sm:$0xff]
        %v4210 = vld [vmem:[%s899 + $0x2b0] sm:$0xff]
        %v4211 = vld [vmem:[%s899 + $0x2b8] sm:$0xff]
        %v4212 = vld [vmem:[%s899 + $0x2c0] sm:$0xff]
        %v4213 = vld [vmem:[%s899 + $0x2c8] sm:$0xff]
        %v4214 = vld [vmem:[%s899 + $0x2d0] sm:$0xff]
        %v4215 = vld [vmem:[%s899 + $0x2d8] sm:$0xff]
        %v4216 = vld [vmem:[%s899 + $0x2e0] sm:$0xff]
        %v4217 = vld [vmem:[%s899 + $0x2e8] sm:$0xff]
        %v4218 = vld [vmem:[%s899 + $0x2f0] sm:$0xff]
        %v4219 = vld [vmem:[%s899 + $0x2f8] sm:$0xff]
        %v4220 = vld [vmem:[%s899 + $0x300] sm:$0xff]
        %v4221 = vld [vmem:[%s899 + $0x308] sm:$0xff]
        %v4222 = vld [vmem:[%s899 + $0x310] sm:$0xff]
        %v4223 = vld [vmem:[%s899 + $0x318] sm:$0xff]
        %v4224 = vld [vmem:[%s899 + $0x320] sm:$0xff]
        %v4225 = vld [vmem:[%s899 + $0x328] sm:$0xff]
        %v4226 = vld [vmem:[%s899 + $0x330] sm:$0xff]
        %v4227 = vld [vmem:[%s899 + $0x338] sm:$0xff]
        %v4228 = vld [vmem:[%s899 + $0x340] sm:$0xff]
        %v4229 = vld [vmem:[%s899 + $0x348] sm:$0xff]
        %v4230 = vld [vmem:[%s899 + $0x350] sm:$0xff]
        %v4231 = vld [vmem:[%s899 + $0x358] sm:$0xff]
        %v4232 = vld [vmem:[%s899 + $0x360] sm:$0xff]
        %v4233 = vld [vmem:[%s899 + $0x368] sm:$0xff]
        %v4234 = vld [vmem:[%s899 + $0x370] sm:$0xff]
        %v4235 = vld [vmem:[%s899 + $0x378] sm:$0xff]
        %v4236 = vld [vmem:[%s899 + $0x380] sm:$0xff]
        %v4237 = vld [vmem:[%s899 + $0x388] sm:$0xff]
        %v4238 = vld [vmem:[%s899 + $0x390] sm:$0xff]
        %v4239 = vld [vmem:[%s899 + $0x398] sm:$0xff]
        %v4240 = vld [vmem:[%s899 + $0x3a0] sm:$0xff]
        %v4241 = vld [vmem:[%s899 + $0x3a8] sm:$0xff]
        %v4242 = vld [vmem:[%s899 + $0x3b0] sm:$0xff]
        %v4243 = vld [vmem:[%s899 + $0x3b8] sm:$0xff]
        %v4244 = vld [vmem:[%s899 + $0x3c0] sm:$0xff]
        %v4245 = vld [vmem:[%s899 + $0x3c8] sm:$0xff]
        %v4246 = vld [vmem:[%s899 + $0x3d0] sm:$0xff]
        %v4247 = vld [vmem:[%s899 + $0x3d8] sm:$0xff]
        %v4248 = vld [vmem:[%s899 + $0x3e0] sm:$0xff]
        %v4249 = vld [vmem:[%s899 + $0x3e8] sm:$0xff]
        %v4250 = vld [vmem:[%s899 + $0x3f0] sm:$0xff]
        %v4251 = vld [vmem:[%s899 + $0x3f8] sm:$0xff]
        %v4252 = vld [vmem:[%s899 + $0x400] sm:$0xff]
        %v4253 = vld [vmem:[%s899 + $0x408] sm:$0xff]
        %v4254 = vld [vmem:[%s899 + $0x410] sm:$0xff]
        %v4255 = vld [vmem:[%s899 + $0x418] sm:$0xff]
        %v4256 = vld [vmem:[%s899 + $0x420] sm:$0xff]
        %v4257 = vld [vmem:[%s899 + $0x428] sm:$0xff]
        %v4258 = vld [vmem:[%s899 + $0x430] sm:$0xff]
        %v4259 = vld [vmem:[%s899 + $0x438] sm:$0xff]
        %v4260 = vld [vmem:[%s899 + $0x440] sm:$0xff]
        %v4261 = vld [vmem:[%s899 + $0x448] sm:$0xff]
        %v4262 = vld [vmem:[%s899 + $0x450] sm:$0xff]
        %v4263 = vld [vmem:[%s899 + $0x458] sm:$0xff]
        %v4264 = vld [vmem:[%s899 + $0x460] sm:$0xff]
        %v4265 = vld [vmem:[%s899 + $0x468] sm:$0xff]
        %v4266 = vld [vmem:[%s899 + $0x470] sm:$0xff]
        %v4267 = vld [vmem:[%s899 + $0x478] sm:$0xff]
        %v4268 = vld [vmem:[%s899 + $0x480] sm:$0xff]
        %v4269 = vld [vmem:[%s899 + $0x488] sm:$0xff]
        %v4270 = vld [vmem:[%s899 + $0x490] sm:$0xff]
        %v4271 = vld [vmem:[%s899 + $0x498] sm:$0xff]
        %v4272 = vld [vmem:[%s899 + $0x4a0] sm:$0xff]
        %v4273 = vld [vmem:[%s899 + $0x4a8] sm:$0xff]
        %v4274 = vld [vmem:[%s899 + $0x4b0] sm:$0xff]
        %v4275 = vld [vmem:[%s899 + $0x4b8] sm:$0xff]
        %v4276 = vld [vmem:[%s899 + $0x4c0] sm:$0xff]
        %v4277 = vld [vmem:[%s899 + $0x4c8] sm:$0xff]
        %v4278 = vld [vmem:[%s899 + $0x4d0] sm:$0xff]
        %v4279 = vld [vmem:[%s899 + $0x4d8] sm:$0xff]
        %v4280 = vld [vmem:[%s899 + $0x4e0] sm:$0xff]
        %v4281 = vld [vmem:[%s899 + $0x4e8] sm:$0xff]
        %v4282 = vld [vmem:[%s899 + $0x4f0] sm:$0xff]
        %v4283 = vld [vmem:[%s899 + $0x4f8] sm:$0xff]
        %v4284 = vld [vmem:[%s899 + $0x500] sm:$0xff]
        %v4285 = vld [vmem:[%s899 + $0x508] sm:$0xff]
        %v4286 = vld [vmem:[%s899 + $0x510] sm:$0xff]
        %v4287 = vld [vmem:[%s899 + $0x518] sm:$0xff]
        %v4288 = vld [vmem:[%s899 + $0x520] sm:$0xff]
        %v4289 = vld [vmem:[%s899 + $0x528] sm:$0xff]
        %v4290 = vld [vmem:[%s899 + $0x530] sm:$0xff]
        %v4291 = vld [vmem:[%s899 + $0x538] sm:$0xff]
        %v4292 = vld [vmem:[%s899 + $0x540] sm:$0xff]
        %v4293 = vld [vmem:[%s899 + $0x548] sm:$0xff]
        %v4294 = vld [vmem:[%s899 + $0x550] sm:$0xff]
        %v4295 = vld [vmem:[%s899 + $0x558] sm:$0xff]
        %v4296 = vld [vmem:[%s899 + $0x560] sm:$0xff]
        %v4297 = vld [vmem:[%s899 + $0x568] sm:$0xff]
        %v4298 = vld [vmem:[%s899 + $0x570] sm:$0xff]
        %v4299 = vld [vmem:[%s899 + $0x578] sm:$0xff]
        %v4300 = vld [vmem:[%s899 + $0x580] sm:$0xff]
        %v4301 = vld [vmem:[%s899 + $0x588] sm:$0xff]
        %v4302 = vld [vmem:[%s899 + $0x590] sm:$0xff]
        %v4303 = vld [vmem:[%s899 + $0x598] sm:$0xff]
        %v4304 = vld [vmem:[%s899 + $0x5a0] sm:$0xff]
        %v4305 = vld [vmem:[%s899 + $0x5a8] sm:$0xff]
        %v4306 = vld [vmem:[%s899 + $0x5b0] sm:$0xff]
        %v4307 = vld [vmem:[%s899 + $0x5b8] sm:$0xff]
        %v4308 = vld [vmem:[%s899 + $0x5c0] sm:$0xff]
        %v4309 = vld [vmem:[%s899 + $0x5c8] sm:$0xff]
        %v4310 = vld [vmem:[%s899 + $0x5d0] sm:$0xff]
        %v4311 = vld [vmem:[%s899 + $0x5d8] sm:$0xff]
        %v4312 = vld [vmem:[%s899 + $0x5e0] sm:$0xff]
        %v4313 = vld [vmem:[%s899 + $0x5e8] sm:$0xff]
        %v4314 = vld [vmem:[%s899 + $0x5f0] sm:$0xff]
        %v4315 = vld [vmem:[%s899 + $0x5f8] sm:$0xff]
        %v4316 = vld [vmem:[%s899 + $0x600] sm:$0xff]
        %v4317 = vld [vmem:[%s899 + $0x608] sm:$0xff]
        %v4318 = vld [vmem:[%s899 + $0x610] sm:$0xff]
        %v4319 = vld [vmem:[%s899 + $0x618] sm:$0xff]
        %v4320 = vld [vmem:[%s899 + $0x620] sm:$0xff]
        %v4321 = vld [vmem:[%s899 + $0x628] sm:$0xff]
        %v4322 = vld [vmem:[%s899 + $0x630] sm:$0xff]
        %v4323 = vld [vmem:[%s899 + $0x638] sm:$0xff]
        %v4324 = vld [vmem:[%s899 + $0x640] sm:$0xff]
        %v4325 = vld [vmem:[%s899 + $0x648] sm:$0xff]
        %v4326 = vld [vmem:[%s899 + $0x650] sm:$0xff]
        %v4327 = vld [vmem:[%s899 + $0x658] sm:$0xff]
        %v4328 = vld [vmem:[%s899 + $0x660] sm:$0xff]
        %v4329 = vld [vmem:[%s899 + $0x668] sm:$0xff]
        %v4330 = vld [vmem:[%s899 + $0x670] sm:$0xff]
        %v4331 = vld [vmem:[%s899 + $0x678] sm:$0xff]
        %v4332 = vld [vmem:[%s899 + $0x680] sm:$0xff]
        %v4333 = vld [vmem:[%s899 + $0x688] sm:$0xff]
        %v4334 = vld [vmem:[%s899 + $0x690] sm:$0xff]
        %v4335 = vld [vmem:[%s899 + $0x698] sm:$0xff]
        %v4336 = vld [vmem:[%s899 + $0x6a0] sm:$0xff]
        %v4337 = vld [vmem:[%s899 + $0x6a8] sm:$0xff]
        %v4338 = vld [vmem:[%s899 + $0x6b0] sm:$0xff]
        %v4339 = vld [vmem:[%s899 + $0x6b8] sm:$0xff]
        %v4340 = vld [vmem:[%s899 + $0x6c0] sm:$0xff]
        %v4341 = vld [vmem:[%s899 + $0x6c8] sm:$0xff]
        %v4342 = vld [vmem:[%s899 + $0x6d0] sm:$0xff]
        %v4343 = vld [vmem:[%s899 + $0x6d8] sm:$0xff]
        %v4344 = vld [vmem:[%s899 + $0x6e0] sm:$0xff]
        %v4345 = vld [vmem:[%s899 + $0x6e8] sm:$0xff]
        %v4346 = vld [vmem:[%s899 + $0x6f0] sm:$0xff]
        %v4347 = vld [vmem:[%s899 + $0x6f8] sm:$0xff]
        %v4348 = vld [vmem:[%s899 + $0x700] sm:$0xff]
        %v4349 = vld [vmem:[%s899 + $0x708] sm:$0xff]
        %v4350 = vld [vmem:[%s899 + $0x710] sm:$0xff]
        %v4351 = vld [vmem:[%s899 + $0x718] sm:$0xff]
        %v4352 = vld [vmem:[%s899 + $0x720] sm:$0xff]
        %v4353 = vld [vmem:[%s899 + $0x728] sm:$0xff]
        %v4354 = vld [vmem:[%s899 + $0x730] sm:$0xff]
        %v4355 = vld [vmem:[%s899 + $0x738] sm:$0xff]
        %v4356 = vld [vmem:[%s899 + $0x740] sm:$0xff]
        %v4357 = vld [vmem:[%s899 + $0x748] sm:$0xff]
        %v4358 = vld [vmem:[%s899 + $0x750] sm:$0xff]
        %v4359 = vld [vmem:[%s899 + $0x758] sm:$0xff]
        %v4360 = vld [vmem:[%s899 + $0x760] sm:$0xff]
        %v4361 = vld [vmem:[%s899 + $0x768] sm:$0xff]
        %v4362 = vld [vmem:[%s899 + $0x770] sm:$0xff]
        %v4363 = vld [vmem:[%s899 + $0x778] sm:$0xff]
        %v4364 = vld [vmem:[%s899 + $0x780] sm:$0xff]
        %v4365 = vld [vmem:[%s899 + $0x788] sm:$0xff]
        %v4366 = vld [vmem:[%s899 + $0x790] sm:$0xff]
        %v4367 = vld [vmem:[%s899 + $0x798] sm:$0xff]
        %v4368 = vld [vmem:[%s899 + $0x7a0] sm:$0xff]
        %v4369 = vld [vmem:[%s899 + $0x7a8] sm:$0xff]
        %v4370 = vld [vmem:[%s899 + $0x7b0] sm:$0xff]
        %v4371 = vld [vmem:[%s899 + $0x7b8] sm:$0xff]
        %v4372 = vld [vmem:[%s899 + $0x7c0] sm:$0xff]
        %v4373 = vld [vmem:[%s899 + $0x7c8] sm:$0xff]
        %v4374 = vld [vmem:[%s899 + $0x7d0] sm:$0xff]
        %v4375 = vld [vmem:[%s899 + $0x7d8] sm:$0xff]
        %v4376 = vld [vmem:[%s899 + $0x7e0] sm:$0xff]
        %v4377 = vld [vmem:[%s899 + $0x7e8] sm:$0xff]
        %v4378 = vld [vmem:[%s899 + $0x7f0] sm:$0xff]
        %v4379 = vld [vmem:[%s899 + $0x7f8] sm:$0xff]
        %v4382 = vunpack.c.l.s4 1983009808
        %v4383 = vunpack.c.0.s8 %v4382
        %v4384 = vlaneseq
        %v4385 = vshrl.u32 %v4384, 7
        %v4386 = vsub.s32 %v4383, %v4385
        %v4387 = vrot.slane %v4123, %v4386
        %v4388 = vcombine.high %v4387, %v4387
        %v4647 = vunpack.c.l.b16 %v4124
        %v4648 = vunpack.c.h.b16 %v4124
        %v4649 = vunpack.c.l.b16 %v4125
        %v4650 = vunpack.c.h.b16 %v4125
        %v4651 = vunpack.c.l.b16 %v4126
        %v4652 = vunpack.c.h.b16 %v4126
        %v4653 = vunpack.c.l.b16 %v4127
        %v4654 = vunpack.c.h.b16 %v4127
        %v4655 = vunpack.c.l.b16 %v4128
        %v4656 = vunpack.c.h.b16 %v4128
        %v4657 = vunpack.c.l.b16 %v4129
        %v4658 = vunpack.c.h.b16 %v4129
        %v4659 = vunpack.c.l.b16 %v4130
        %v4660 = vunpack.c.h.b16 %v4130
        %v4661 = vunpack.c.l.b16 %v4131
        %v4662 = vunpack.c.h.b16 %v4131
        %v4663 = vunpack.c.l.b16 %v4132
        %v4664 = vunpack.c.h.b16 %v4132
        %v4665 = vunpack.c.l.b16 %v4133
        %v4666 = vunpack.c.h.b16 %v4133
        %v4667 = vunpack.c.l.b16 %v4134
        %v4668 = vunpack.c.h.b16 %v4134
        %v4669 = vunpack.c.l.b16 %v4135
        %v4670 = vunpack.c.h.b16 %v4135
        %v4671 = vunpack.c.l.b16 %v4136
        %v4672 = vunpack.c.h.b16 %v4136
        %v4673 = vunpack.c.l.b16 %v4137
        %v4674 = vunpack.c.h.b16 %v4137
        %v4675 = vunpack.c.l.b16 %v4138
        %v4676 = vunpack.c.h.b16 %v4138
        %v4677 = vunpack.c.l.b16 %v4139
        %v4678 = vunpack.c.h.b16 %v4139
        %v4679 = vunpack.c.l.b16 %v4140
        %v4680 = vunpack.c.h.b16 %v4140
        %v4681 = vunpack.c.l.b16 %v4141
        %v4682 = vunpack.c.h.b16 %v4141
        %v4683 = vunpack.c.l.b16 %v4142
        %v4684 = vunpack.c.h.b16 %v4142
        %v4685 = vunpack.c.l.b16 %v4143
        %v4686 = vunpack.c.h.b16 %v4143
        %v4687 = vunpack.c.l.b16 %v4144
        %v4688 = vunpack.c.h.b16 %v4144
        %v4689 = vunpack.c.l.b16 %v4145
        %v4690 = vunpack.c.h.b16 %v4145
        %v4691 = vunpack.c.l.b16 %v4146
        %v4692 = vunpack.c.h.b16 %v4146
        %v4693 = vunpack.c.l.b16 %v4147
        %v4694 = vunpack.c.h.b16 %v4147
        %v4695 = vunpack.c.l.b16 %v4148
        %v4696 = vunpack.c.h.b16 %v4148
        %v4697 = vunpack.c.l.b16 %v4149
        %v4698 = vunpack.c.h.b16 %v4149
        %v4699 = vunpack.c.l.b16 %v4150
        %v4700 = vunpack.c.h.b16 %v4150
        %v4701 = vunpack.c.l.b16 %v4151
        %v4702 = vunpack.c.h.b16 %v4151
        %v4703 = vunpack.c.l.b16 %v4152
        %v4704 = vunpack.c.h.b16 %v4152
        %v4705 = vunpack.c.l.b16 %v4153
        %v4706 = vunpack.c.h.b16 %v4153
        %v4707 = vunpack.c.l.b16 %v4154
        %v4708 = vunpack.c.h.b16 %v4154
        %v4709 = vunpack.c.l.b16 %v4155
        %v4710 = vunpack.c.h.b16 %v4155
        %v4711 = vunpack.c.l.b16 %v4156
        %v4712 = vunpack.c.h.b16 %v4156
        %v4713 = vunpack.c.l.b16 %v4157
        %v4714 = vunpack.c.h.b16 %v4157
        %v4715 = vunpack.c.l.b16 %v4158
        %v4716 = vunpack.c.h.b16 %v4158
        %v4717 = vunpack.c.l.b16 %v4159
        %v4718 = vunpack.c.h.b16 %v4159
        %v4719 = vunpack.c.l.b16 %v4160
        %v4720 = vunpack.c.h.b16 %v4160
        %v4721 = vunpack.c.l.b16 %v4161
        %v4722 = vunpack.c.h.b16 %v4161
        %v4723 = vunpack.c.l.b16 %v4162
        %v4724 = vunpack.c.h.b16 %v4162
        %v4725 = vunpack.c.l.b16 %v4163
        %v4726 = vunpack.c.h.b16 %v4163
        %v4727 = vunpack.c.l.b16 %v4164
        %v4728 = vunpack.c.h.b16 %v4164
        %v4729 = vunpack.c.l.b16 %v4165
        %v4730 = vunpack.c.h.b16 %v4165
        %v4731 = vunpack.c.l.b16 %v4166
        %v4732 = vunpack.c.h.b16 %v4166
        %v4733 = vunpack.c.l.b16 %v4167
        %v4734 = vunpack.c.h.b16 %v4167
        %v4735 = vunpack.c.l.b16 %v4168
        %v4736 = vunpack.c.h.b16 %v4168
        %v4737 = vunpack.c.l.b16 %v4169
        %v4738 = vunpack.c.h.b16 %v4169
        %v4739 = vunpack.c.l.b16 %v4170
        %v4740 = vunpack.c.h.b16 %v4170
        %v4741 = vunpack.c.l.b16 %v4171
        %v4742 = vunpack.c.h.b16 %v4171
        %v4743 = vunpack.c.l.b16 %v4172
        %v4744 = vunpack.c.h.b16 %v4172
        %v4745 = vunpack.c.l.b16 %v4173
        %v4746 = vunpack.c.h.b16 %v4173
        %v4747 = vunpack.c.l.b16 %v4174
        %v4748 = vunpack.c.h.b16 %v4174
        %v4749 = vunpack.c.l.b16 %v4175
        %v4750 = vunpack.c.h.b16 %v4175
        %v4751 = vunpack.c.l.b16 %v4176
        %v4752 = vunpack.c.h.b16 %v4176
        %v4753 = vunpack.c.l.b16 %v4177
        %v4754 = vunpack.c.h.b16 %v4177
        %v4755 = vunpack.c.l.b16 %v4178
        %v4756 = vunpack.c.h.b16 %v4178
        %v4757 = vunpack.c.l.b16 %v4179
        %v4758 = vunpack.c.h.b16 %v4179
        %v4759 = vunpack.c.l.b16 %v4180
        %v4760 = vunpack.c.h.b16 %v4180
        %v4761 = vunpack.c.l.b16 %v4181
        %v4762 = vunpack.c.h.b16 %v4181
        %v4763 = vunpack.c.l.b16 %v4182
        %v4764 = vunpack.c.h.b16 %v4182
        %v4765 = vunpack.c.l.b16 %v4183
        %v4766 = vunpack.c.h.b16 %v4183
        %v4767 = vunpack.c.l.b16 %v4184
        %v4768 = vunpack.c.h.b16 %v4184
        %v4769 = vunpack.c.l.b16 %v4185
        %v4770 = vunpack.c.h.b16 %v4185
        %v4771 = vunpack.c.l.b16 %v4186
        %v4772 = vunpack.c.h.b16 %v4186
        %v4773 = vunpack.c.l.b16 %v4187
        %v4774 = vunpack.c.h.b16 %v4187
        %v4775 = vunpack.c.l.b16 %v4188
        %v4776 = vunpack.c.h.b16 %v4188
        %v4777 = vunpack.c.l.b16 %v4189
        %v4778 = vunpack.c.h.b16 %v4189
        %v4779 = vunpack.c.l.b16 %v4190
        %v4780 = vunpack.c.h.b16 %v4190
        %v4781 = vunpack.c.l.b16 %v4191
        %v4782 = vunpack.c.h.b16 %v4191
        %v4783 = vunpack.c.l.b16 %v4192
        %v4784 = vunpack.c.h.b16 %v4192
        %v4785 = vunpack.c.l.b16 %v4193
        %v4786 = vunpack.c.h.b16 %v4193
        %v4787 = vunpack.c.l.b16 %v4194
        %v4788 = vunpack.c.h.b16 %v4194
        %v4789 = vunpack.c.l.b16 %v4195
        %v4790 = vunpack.c.h.b16 %v4195
        %v4791 = vunpack.c.l.b16 %v4196
        %v4792 = vunpack.c.h.b16 %v4196
        %v4793 = vunpack.c.l.b16 %v4197
        %v4794 = vunpack.c.h.b16 %v4197
        %v4795 = vunpack.c.l.b16 %v4198
        %v4796 = vunpack.c.h.b16 %v4198
        %v4797 = vunpack.c.l.b16 %v4199
        %v4798 = vunpack.c.h.b16 %v4199
        %v4799 = vunpack.c.l.b16 %v4200
        %v4800 = vunpack.c.h.b16 %v4200
        %v4801 = vunpack.c.l.b16 %v4201
        %v4802 = vunpack.c.h.b16 %v4201
        %v4803 = vunpack.c.l.b16 %v4202
        %v4804 = vunpack.c.h.b16 %v4202
        %v4805 = vunpack.c.l.b16 %v4203
        %v4806 = vunpack.c.h.b16 %v4203
        %v4807 = vunpack.c.l.b16 %v4204
        %v4808 = vunpack.c.h.b16 %v4204
        %v4809 = vunpack.c.l.b16 %v4205
        %v4810 = vunpack.c.h.b16 %v4205
        %v4811 = vunpack.c.l.b16 %v4206
        %v4812 = vunpack.c.h.b16 %v4206
        %v4813 = vunpack.c.l.b16 %v4207
        %v4814 = vunpack.c.h.b16 %v4207
        %v4815 = vunpack.c.l.b16 %v4208
        %v4816 = vunpack.c.h.b16 %v4208
        %v4817 = vunpack.c.l.b16 %v4209
        %v4818 = vunpack.c.h.b16 %v4209
        %v4819 = vunpack.c.l.b16 %v4210
        %v4820 = vunpack.c.h.b16 %v4210
        %v4821 = vunpack.c.l.b16 %v4211
        %v4822 = vunpack.c.h.b16 %v4211
        %v4823 = vunpack.c.l.b16 %v4212
        %v4824 = vunpack.c.h.b16 %v4212
        %v4825 = vunpack.c.l.b16 %v4213
        %v4826 = vunpack.c.h.b16 %v4213
        %v4827 = vunpack.c.l.b16 %v4214
        %v4828 = vunpack.c.h.b16 %v4214
        %v4829 = vunpack.c.l.b16 %v4215
        %v4830 = vunpack.c.h.b16 %v4215
        %v4831 = vunpack.c.l.b16 %v4216
        %v4832 = vunpack.c.h.b16 %v4216
        %v4833 = vunpack.c.l.b16 %v4217
        %v4834 = vunpack.c.h.b16 %v4217
        %v4835 = vunpack.c.l.b16 %v4218
        %v4836 = vunpack.c.h.b16 %v4218
        %v4837 = vunpack.c.l.b16 %v4219
        %v4838 = vunpack.c.h.b16 %v4219
        %v4839 = vunpack.c.l.b16 %v4220
        %v4840 = vunpack.c.h.b16 %v4220
        %v4841 = vunpack.c.l.b16 %v4221
        %v4842 = vunpack.c.h.b16 %v4221
        %v4843 = vunpack.c.l.b16 %v4222
        %v4844 = vunpack.c.h.b16 %v4222
        %v4845 = vunpack.c.l.b16 %v4223
        %v4846 = vunpack.c.h.b16 %v4223
        %v4847 = vunpack.c.l.b16 %v4224
        %v4848 = vunpack.c.h.b16 %v4224
        %v4849 = vunpack.c.l.b16 %v4225
        %v4850 = vunpack.c.h.b16 %v4225
        %v4851 = vunpack.c.l.b16 %v4226
        %v4852 = vunpack.c.h.b16 %v4226
        %v4853 = vunpack.c.l.b16 %v4227
        %v4854 = vunpack.c.h.b16 %v4227
        %v4855 = vunpack.c.l.b16 %v4228
        %v4856 = vunpack.c.h.b16 %v4228
        %v4857 = vunpack.c.l.b16 %v4229
        %v4858 = vunpack.c.h.b16 %v4229
        %v4859 = vunpack.c.l.b16 %v4230
        %v4860 = vunpack.c.h.b16 %v4230
        %v4861 = vunpack.c.l.b16 %v4231
        %v4862 = vunpack.c.h.b16 %v4231
        %v4863 = vunpack.c.l.b16 %v4232
        %v4864 = vunpack.c.h.b16 %v4232
        %v4865 = vunpack.c.l.b16 %v4233
        %v4866 = vunpack.c.h.b16 %v4233
        %v4867 = vunpack.c.l.b16 %v4234
        %v4868 = vunpack.c.h.b16 %v4234
        %v4869 = vunpack.c.l.b16 %v4235
        %v4870 = vunpack.c.h.b16 %v4235
        %v4871 = vunpack.c.l.b16 %v4236
        %v4872 = vunpack.c.h.b16 %v4236
        %v4873 = vunpack.c.l.b16 %v4237
        %v4874 = vunpack.c.h.b16 %v4237
        %v4875 = vunpack.c.l.b16 %v4238
        %v4876 = vunpack.c.h.b16 %v4238
        %v4877 = vunpack.c.l.b16 %v4239
        %v4878 = vunpack.c.h.b16 %v4239
        %v4879 = vunpack.c.l.b16 %v4240
        %v4880 = vunpack.c.h.b16 %v4240
        %v4881 = vunpack.c.l.b16 %v4241
        %v4882 = vunpack.c.h.b16 %v4241
        %v4883 = vunpack.c.l.b16 %v4242
        %v4884 = vunpack.c.h.b16 %v4242
        %v4885 = vunpack.c.l.b16 %v4243
        %v4886 = vunpack.c.h.b16 %v4243
        %v4887 = vunpack.c.l.b16 %v4244
        %v4888 = vunpack.c.h.b16 %v4244
        %v4889 = vunpack.c.l.b16 %v4245
        %v4890 = vunpack.c.h.b16 %v4245
        %v4891 = vunpack.c.l.b16 %v4246
        %v4892 = vunpack.c.h.b16 %v4246
        %v4893 = vunpack.c.l.b16 %v4247
        %v4894 = vunpack.c.h.b16 %v4247
        %v4895 = vunpack.c.l.b16 %v4248
        %v4896 = vunpack.c.h.b16 %v4248
        %v4897 = vunpack.c.l.b16 %v4249
        %v4898 = vunpack.c.h.b16 %v4249
        %v4899 = vunpack.c.l.b16 %v4250
        %v4900 = vunpack.c.h.b16 %v4250
        %v4901 = vunpack.c.l.b16 %v4251
        %v4902 = vunpack.c.h.b16 %v4251
        %v4903 = vunpack.c.l.b16 %v4252
        %v4904 = vunpack.c.h.b16 %v4252
        %v4905 = vunpack.c.l.b16 %v4253
        %v4906 = vunpack.c.h.b16 %v4253
        %v4907 = vunpack.c.l.b16 %v4254
        %v4908 = vunpack.c.h.b16 %v4254
        %v4909 = vunpack.c.l.b16 %v4255
        %v4910 = vunpack.c.h.b16 %v4255
        %v4911 = vunpack.c.l.b16 %v4256
        %v4912 = vunpack.c.h.b16 %v4256
        %v4913 = vunpack.c.l.b16 %v4257
        %v4914 = vunpack.c.h.b16 %v4257
        %v4915 = vunpack.c.l.b16 %v4258
        %v4916 = vunpack.c.h.b16 %v4258
        %v4917 = vunpack.c.l.b16 %v4259
        %v4918 = vunpack.c.h.b16 %v4259
        %v4919 = vunpack.c.l.b16 %v4260
        %v4920 = vunpack.c.h.b16 %v4260
        %v4921 = vunpack.c.l.b16 %v4261
        %v4922 = vunpack.c.h.b16 %v4261
        %v4923 = vunpack.c.l.b16 %v4262
        %v4924 = vunpack.c.h.b16 %v4262
        %v4925 = vunpack.c.l.b16 %v4263
        %v4926 = vunpack.c.h.b16 %v4263
        %v4927 = vunpack.c.l.b16 %v4264
        %v4928 = vunpack.c.h.b16 %v4264
        %v4929 = vunpack.c.l.b16 %v4265
        %v4930 = vunpack.c.h.b16 %v4265
        %v4931 = vunpack.c.l.b16 %v4266
        %v4932 = vunpack.c.h.b16 %v4266
        %v4933 = vunpack.c.l.b16 %v4267
        %v4934 = vunpack.c.h.b16 %v4267
        %v4935 = vunpack.c.l.b16 %v4268
        %v4936 = vunpack.c.h.b16 %v4268
        %v4937 = vunpack.c.l.b16 %v4269
        %v4938 = vunpack.c.h.b16 %v4269
        %v4939 = vunpack.c.l.b16 %v4270
        %v4940 = vunpack.c.h.b16 %v4270
        %v4941 = vunpack.c.l.b16 %v4271
        %v4942 = vunpack.c.h.b16 %v4271
        %v4943 = vunpack.c.l.b16 %v4272
        %v4944 = vunpack.c.h.b16 %v4272
        %v4945 = vunpack.c.l.b16 %v4273
        %v4946 = vunpack.c.h.b16 %v4273
        %v4947 = vunpack.c.l.b16 %v4274
        %v4948 = vunpack.c.h.b16 %v4274
        %v4949 = vunpack.c.l.b16 %v4275
        %v4950 = vunpack.c.h.b16 %v4275
        %v4951 = vunpack.c.l.b16 %v4276
        %v4952 = vunpack.c.h.b16 %v4276
        %v4953 = vunpack.c.l.b16 %v4277
        %v4954 = vunpack.c.h.b16 %v4277
        %v4955 = vunpack.c.l.b16 %v4278
        %v4956 = vunpack.c.h.b16 %v4278
        %v4957 = vunpack.c.l.b16 %v4279
        %v4958 = vunpack.c.h.b16 %v4279
        %v4959 = vunpack.c.l.b16 %v4280
        %v4960 = vunpack.c.h.b16 %v4280
        %v4961 = vunpack.c.l.b16 %v4281
        %v4962 = vunpack.c.h.b16 %v4281
        %v4963 = vunpack.c.l.b16 %v4282
        %v4964 = vunpack.c.h.b16 %v4282
        %v4965 = vunpack.c.l.b16 %v4283
        %v4966 = vunpack.c.h.b16 %v4283
        %v4967 = vunpack.c.l.b16 %v4284
        %v4968 = vunpack.c.h.b16 %v4284
        %v4969 = vunpack.c.l.b16 %v4285
        %v4970 = vunpack.c.h.b16 %v4285
        %v4971 = vunpack.c.l.b16 %v4286
        %v4972 = vunpack.c.h.b16 %v4286
        %v4973 = vunpack.c.l.b16 %v4287
        %v4974 = vunpack.c.h.b16 %v4287
        %v4975 = vunpack.c.l.b16 %v4288
        %v4976 = vunpack.c.h.b16 %v4288
        %v4977 = vunpack.c.l.b16 %v4289
        %v4978 = vunpack.c.h.b16 %v4289
        %v4979 = vunpack.c.l.b16 %v4290
        %v4980 = vunpack.c.h.b16 %v4290
        %v4981 = vunpack.c.l.b16 %v4291
        %v4982 = vunpack.c.h.b16 %v4291
        %v4983 = vunpack.c.l.b16 %v4292
        %v4984 = vunpack.c.h.b16 %v4292
        %v4985 = vunpack.c.l.b16 %v4293
        %v4986 = vunpack.c.h.b16 %v4293
        %v4987 = vunpack.c.l.b16 %v4294
        %v4988 = vunpack.c.h.b16 %v4294
        %v4989 = vunpack.c.l.b16 %v4295
        %v4990 = vunpack.c.h.b16 %v4295
        %v4991 = vunpack.c.l.b16 %v4296
        %v4992 = vunpack.c.h.b16 %v4296
        %v4993 = vunpack.c.l.b16 %v4297
        %v4994 = vunpack.c.h.b16 %v4297
        %v4995 = vunpack.c.l.b16 %v4298
        %v4996 = vunpack.c.h.b16 %v4298
        %v4997 = vunpack.c.l.b16 %v4299
        %v4998 = vunpack.c.h.b16 %v4299
        %v4999 = vunpack.c.l.b16 %v4300
        %v5000 = vunpack.c.h.b16 %v4300
        %v5001 = vunpack.c.l.b16 %v4301
        %v5002 = vunpack.c.h.b16 %v4301
        %v5003 = vunpack.c.l.b16 %v4302
        %v5004 = vunpack.c.h.b16 %v4302
        %v5005 = vunpack.c.l.b16 %v4303
        %v5006 = vunpack.c.h.b16 %v4303
        %v5007 = vunpack.c.l.b16 %v4304
        %v5008 = vunpack.c.h.b16 %v4304
        %v5009 = vunpack.c.l.b16 %v4305
        %v5010 = vunpack.c.h.b16 %v4305
        %v5011 = vunpack.c.l.b16 %v4306
        %v5012 = vunpack.c.h.b16 %v4306
        %v5013 = vunpack.c.l.b16 %v4307
        %v5014 = vunpack.c.h.b16 %v4307
        %v5015 = vunpack.c.l.b16 %v4308
        %v5016 = vunpack.c.h.b16 %v4308
        %v5017 = vunpack.c.l.b16 %v4309
        %v5018 = vunpack.c.h.b16 %v4309
        %v5019 = vunpack.c.l.b16 %v4310
        %v5020 = vunpack.c.h.b16 %v4310
        %v5021 = vunpack.c.l.b16 %v4311
        %v5022 = vunpack.c.h.b16 %v4311
        %v5023 = vunpack.c.l.b16 %v4312
        %v5024 = vunpack.c.h.b16 %v4312
        %v5025 = vunpack.c.l.b16 %v4313
        %v5026 = vunpack.c.h.b16 %v4313
        %v5027 = vunpack.c.l.b16 %v4314
        %v5028 = vunpack.c.h.b16 %v4314
        %v5029 = vunpack.c.l.b16 %v4315
        %v5030 = vunpack.c.h.b16 %v4315
        %v5031 = vunpack.c.l.b16 %v4316
        %v5032 = vunpack.c.h.b16 %v4316
        %v5033 = vunpack.c.l.b16 %v4317
        %v5034 = vunpack.c.h.b16 %v4317
        %v5035 = vunpack.c.l.b16 %v4318
        %v5036 = vunpack.c.h.b16 %v4318
        %v5037 = vunpack.c.l.b16 %v4319
        %v5038 = vunpack.c.h.b16 %v4319
        %v5039 = vunpack.c.l.b16 %v4320
        %v5040 = vunpack.c.h.b16 %v4320
        %v5041 = vunpack.c.l.b16 %v4321
        %v5042 = vunpack.c.h.b16 %v4321
        %v5043 = vunpack.c.l.b16 %v4322
        %v5044 = vunpack.c.h.b16 %v4322
        %v5045 = vunpack.c.l.b16 %v4323
        %v5046 = vunpack.c.h.b16 %v4323
        %v5047 = vunpack.c.l.b16 %v4324
        %v5048 = vunpack.c.h.b16 %v4324
        %v5049 = vunpack.c.l.b16 %v4325
        %v5050 = vunpack.c.h.b16 %v4325
        %v5051 = vunpack.c.l.b16 %v4326
        %v5052 = vunpack.c.h.b16 %v4326
        %v5053 = vunpack.c.l.b16 %v4327
        %v5054 = vunpack.c.h.b16 %v4327
        %v5055 = vunpack.c.l.b16 %v4328
        %v5056 = vunpack.c.h.b16 %v4328
        %v5057 = vunpack.c.l.b16 %v4329
        %v5058 = vunpack.c.h.b16 %v4329
        %v5059 = vunpack.c.l.b16 %v4330
        %v5060 = vunpack.c.h.b16 %v4330
        %v5061 = vunpack.c.l.b16 %v4331
        %v5062 = vunpack.c.h.b16 %v4331
        %v5063 = vunpack.c.l.b16 %v4332
        %v5064 = vunpack.c.h.b16 %v4332
        %v5065 = vunpack.c.l.b16 %v4333
        %v5066 = vunpack.c.h.b16 %v4333
        %v5067 = vunpack.c.l.b16 %v4334
        %v5068 = vunpack.c.h.b16 %v4334
        %v5069 = vunpack.c.l.b16 %v4335
        %v5070 = vunpack.c.h.b16 %v4335
        %v5071 = vunpack.c.l.b16 %v4336
        %v5072 = vunpack.c.h.b16 %v4336
        %v5073 = vunpack.c.l.b16 %v4337
        %v5074 = vunpack.c.h.b16 %v4337
        %v5075 = vunpack.c.l.b16 %v4338
        %v5076 = vunpack.c.h.b16 %v4338
        %v5077 = vunpack.c.l.b16 %v4339
        %v5078 = vunpack.c.h.b16 %v4339
        %v5079 = vunpack.c.l.b16 %v4340
        %v5080 = vunpack.c.h.b16 %v4340
        %v5081 = vunpack.c.l.b16 %v4341
        %v5082 = vunpack.c.h.b16 %v4341
        %v5083 = vunpack.c.l.b16 %v4342
        %v5084 = vunpack.c.h.b16 %v4342
        %v5085 = vunpack.c.l.b16 %v4343
        %v5086 = vunpack.c.h.b16 %v4343
        %v5087 = vunpack.c.l.b16 %v4344
        %v5088 = vunpack.c.h.b16 %v4344
        %v5089 = vunpack.c.l.b16 %v4345
        %v5090 = vunpack.c.h.b16 %v4345
        %v5091 = vunpack.c.l.b16 %v4346
        %v5092 = vunpack.c.h.b16 %v4346
        %v5093 = vunpack.c.l.b16 %v4347
        %v5094 = vunpack.c.h.b16 %v4347
        %v5095 = vunpack.c.l.b16 %v4348
        %v5096 = vunpack.c.h.b16 %v4348
        %v5097 = vunpack.c.l.b16 %v4349
        %v5098 = vunpack.c.h.b16 %v4349
        %v5099 = vunpack.c.l.b16 %v4350
        %v5100 = vunpack.c.h.b16 %v4350
        %v5101 = vunpack.c.l.b16 %v4351
        %v5102 = vunpack.c.h.b16 %v4351
        %v5103 = vunpack.c.l.b16 %v4352
        %v5104 = vunpack.c.h.b16 %v4352
        %v5105 = vunpack.c.l.b16 %v4353
        %v5106 = vunpack.c.h.b16 %v4353
        %v5107 = vunpack.c.l.b16 %v4354
        %v5108 = vunpack.c.h.b16 %v4354
        %v5109 = vunpack.c.l.b16 %v4355
        %v5110 = vunpack.c.h.b16 %v4355
        %v5111 = vunpack.c.l.b16 %v4356
        %v5112 = vunpack.c.h.b16 %v4356
        %v5113 = vunpack.c.l.b16 %v4357
        %v5114 = vunpack.c.h.b16 %v4357
        %v5115 = vunpack.c.l.b16 %v4358
        %v5116 = vunpack.c.h.b16 %v4358
        %v5117 = vunpack.c.l.b16 %v4359
        %v5118 = vunpack.c.h.b16 %v4359
        %v5119 = vunpack.c.l.b16 %v4360
        %v5120 = vunpack.c.h.b16 %v4360
        %v5121 = vunpack.c.l.b16 %v4361
        %v5122 = vunpack.c.h.b16 %v4361
        %v5123 = vunpack.c.l.b16 %v4362
        %v5124 = vunpack.c.h.b16 %v4362
        %v5125 = vunpack.c.l.b16 %v4363
        %v5126 = vunpack.c.h.b16 %v4363
        %v5127 = vunpack.c.l.b16 %v4364
        %v5128 = vunpack.c.h.b16 %v4364
        %v5129 = vunpack.c.l.b16 %v4365
        %v5130 = vunpack.c.h.b16 %v4365
        %v5131 = vunpack.c.l.b16 %v4366
        %v5132 = vunpack.c.h.b16 %v4366
        %v5133 = vunpack.c.l.b16 %v4367
        %v5134 = vunpack.c.h.b16 %v4367
        %v5135 = vunpack.c.l.b16 %v4368
        %v5136 = vunpack.c.h.b16 %v4368
        %v5137 = vunpack.c.l.b16 %v4369
        %v5138 = vunpack.c.h.b16 %v4369
        %v5139 = vunpack.c.l.b16 %v4370
        %v5140 = vunpack.c.h.b16 %v4370
        %v5141 = vunpack.c.l.b16 %v4371
        %v5142 = vunpack.c.h.b16 %v4371
        %v5143 = vunpack.c.l.b16 %v4372
        %v5144 = vunpack.c.h.b16 %v4372
        %v5145 = vunpack.c.l.b16 %v4373
        %v5146 = vunpack.c.h.b16 %v4373
        %v5147 = vunpack.c.l.b16 %v4374
        %v5148 = vunpack.c.h.b16 %v4374
        %v5149 = vunpack.c.l.b16 %v4375
        %v5150 = vunpack.c.h.b16 %v4375
        %v5151 = vunpack.c.l.b16 %v4376
        %v5152 = vunpack.c.h.b16 %v4376
        %v5153 = vunpack.c.l.b16 %v4377
        %v5154 = vunpack.c.h.b16 %v4377
        %v5155 = vunpack.c.l.b16 %v4378
        %v5156 = vunpack.c.h.b16 %v4378
        %v5157 = vunpack.c.l.b16 %v4379
        %v5158 = vunpack.c.h.b16 %v4379
        %v5159 = vpack.c.b16 %v4663, %v4647
        %v5160 = vpack.c.b16 %v4664, %v4648
        %v5161 = vpack.c.b16 %v4665, %v4649
        %v5162 = vpack.c.b16 %v4666, %v4650
        %v5163 = vpack.c.b16 %v4667, %v4651
        %v5164 = vpack.c.b16 %v4668, %v4652
        %v5165 = vpack.c.b16 %v4669, %v4653
        %v5166 = vpack.c.b16 %v4670, %v4654
        %v5167 = vpack.c.b16 %v4671, %v4655
        %v5168 = vpack.c.b16 %v4672, %v4656
        %v5169 = vpack.c.b16 %v4673, %v4657
        %v5170 = vpack.c.b16 %v4674, %v4658
        %v5171 = vpack.c.b16 %v4675, %v4659
        %v5172 = vpack.c.b16 %v4676, %v4660
        %v5173 = vpack.c.b16 %v4677, %v4661
        %v5174 = vpack.c.b16 %v4678, %v4662
        %v5175 = vpack.c.b16 %v4695, %v4679
        %v5176 = vpack.c.b16 %v4696, %v4680
        %v5177 = vpack.c.b16 %v4697, %v4681
        %v5178 = vpack.c.b16 %v4698, %v4682
        %v5179 = vpack.c.b16 %v4699, %v4683
        %v5180 = vpack.c.b16 %v4700, %v4684
        %v5181 = vpack.c.b16 %v4701, %v4685
        %v5182 = vpack.c.b16 %v4702, %v4686
        %v5183 = vpack.c.b16 %v4703, %v4687
        %v5184 = vpack.c.b16 %v4704, %v4688
        %v5185 = vpack.c.b16 %v4705, %v4689
        %v5186 = vpack.c.b16 %v4706, %v4690
        %v5187 = vpack.c.b16 %v4707, %v4691
        %v5188 = vpack.c.b16 %v4708, %v4692
        %v5189 = vpack.c.b16 %v4709, %v4693
        %v5190 = vpack.c.b16 %v4710, %v4694
        %v5191 = vpack.c.b16 %v4727, %v4711
        %v5192 = vpack.c.b16 %v4728, %v4712
        %v5193 = vpack.c.b16 %v4729, %v4713
        %v5194 = vpack.c.b16 %v4730, %v4714
        %v5195 = vpack.c.b16 %v4731, %v4715
        %v5196 = vpack.c.b16 %v4732, %v4716
        %v5197 = vpack.c.b16 %v4733, %v4717
        %v5198 = vpack.c.b16 %v4734, %v4718
        %v5199 = vpack.c.b16 %v4735, %v4719
        %v5200 = vpack.c.b16 %v4736, %v4720
        %v5201 = vpack.c.b16 %v4737, %v4721
        %v5202 = vpack.c.b16 %v4738, %v4722
        %v5203 = vpack.c.b16 %v4739, %v4723
        %v5204 = vpack.c.b16 %v4740, %v4724
        %v5205 = vpack.c.b16 %v4741, %v4725
        %v5206 = vpack.c.b16 %v4742, %v4726
        %v5207 = vpack.c.b16 %v4759, %v4743
        %v5208 = vpack.c.b16 %v4760, %v4744
        %v5209 = vpack.c.b16 %v4761, %v4745
        %v5210 = vpack.c.b16 %v4762, %v4746
        %v5211 = vpack.c.b16 %v4763, %v4747
        %v5212 = vpack.c.b16 %v4764, %v4748
        %v5213 = vpack.c.b16 %v4765, %v4749
        %v5214 = vpack.c.b16 %v4766, %v4750
        %v5215 = vpack.c.b16 %v4767, %v4751
        %v5216 = vpack.c.b16 %v4768, %v4752
        %v5217 = vpack.c.b16 %v4769, %v4753
        %v5218 = vpack.c.b16 %v4770, %v4754
        %v5219 = vpack.c.b16 %v4771, %v4755
        %v5220 = vpack.c.b16 %v4772, %v4756
        %v5221 = vpack.c.b16 %v4773, %v4757
        %v5222 = vpack.c.b16 %v4774, %v4758
        %v5223 = vpack.c.b16 %v4791, %v4775
        %v5224 = vpack.c.b16 %v4792, %v4776
        %v5225 = vpack.c.b16 %v4793, %v4777
        %v5226 = vpack.c.b16 %v4794, %v4778
        %v5227 = vpack.c.b16 %v4795, %v4779
        %v5228 = vpack.c.b16 %v4796, %v4780
        %v5229 = vpack.c.b16 %v4797, %v4781
        %v5230 = vpack.c.b16 %v4798, %v4782
        %v5231 = vpack.c.b16 %v4799, %v4783
        %v5232 = vpack.c.b16 %v4800, %v4784
        %v5233 = vpack.c.b16 %v4801, %v4785
        %v5234 = vpack.c.b16 %v4802, %v4786
        %v5235 = vpack.c.b16 %v4803, %v4787
        %v5236 = vpack.c.b16 %v4804, %v4788
        %v5237 = vpack.c.b16 %v4805, %v4789
        %v5238 = vpack.c.b16 %v4806, %v4790
        %v5239 = vpack.c.b16 %v4823, %v4807
        %v5240 = vpack.c.b16 %v4824, %v4808
        %v5241 = vpack.c.b16 %v4825, %v4809
        %v5242 = vpack.c.b16 %v4826, %v4810
        %v5243 = vpack.c.b16 %v4827, %v4811
        %v5244 = vpack.c.b16 %v4828, %v4812
        %v5245 = vpack.c.b16 %v4829, %v4813
        %v5246 = vpack.c.b16 %v4830, %v4814
        %v5247 = vpack.c.b16 %v4831, %v4815
        %v5248 = vpack.c.b16 %v4832, %v4816
        %v5249 = vpack.c.b16 %v4833, %v4817
        %v5250 = vpack.c.b16 %v4834, %v4818
        %v5251 = vpack.c.b16 %v4835, %v4819
        %v5252 = vpack.c.b16 %v4836, %v4820
        %v5253 = vpack.c.b16 %v4837, %v4821
        %v5254 = vpack.c.b16 %v4838, %v4822
        %v5255 = vpack.c.b16 %v4855, %v4839
        %v5256 = vpack.c.b16 %v4856, %v4840
        %v5257 = vpack.c.b16 %v4857, %v4841
        %v5258 = vpack.c.b16 %v4858, %v4842
        %v5259 = vpack.c.b16 %v4859, %v4843
        %v5260 = vpack.c.b16 %v4860, %v4844
        %v5261 = vpack.c.b16 %v4861, %v4845
        %v5262 = vpack.c.b16 %v4862, %v4846
        %v5263 = vpack.c.b16 %v4863, %v4847
        %v5264 = vpack.c.b16 %v4864, %v4848
        %v5265 = vpack.c.b16 %v4865, %v4849
        %v5266 = vpack.c.b16 %v4866, %v4850
        %v5267 = vpack.c.b16 %v4867, %v4851
        %v5268 = vpack.c.b16 %v4868, %v4852
        %v5269 = vpack.c.b16 %v4869, %v4853
        %v5270 = vpack.c.b16 %v4870, %v4854
        %v5271 = vpack.c.b16 %v4887, %v4871
        %v5272 = vpack.c.b16 %v4888, %v4872
        %v5273 = vpack.c.b16 %v4889, %v4873
        %v5274 = vpack.c.b16 %v4890, %v4874
        %v5275 = vpack.c.b16 %v4891, %v4875
        %v5276 = vpack.c.b16 %v4892, %v4876
        %v5277 = vpack.c.b16 %v4893, %v4877
        %v5278 = vpack.c.b16 %v4894, %v4878
        %v5279 = vpack.c.b16 %v4895, %v4879
        %v5280 = vpack.c.b16 %v4896, %v4880
        %v5281 = vpack.c.b16 %v4897, %v4881
        %v5282 = vpack.c.b16 %v4898, %v4882
        %v5283 = vpack.c.b16 %v4899, %v4883
        %v5284 = vpack.c.b16 %v4900, %v4884
        %v5285 = vpack.c.b16 %v4901, %v4885
        %v5286 = vpack.c.b16 %v4902, %v4886
        %v5287 = vpack.c.b16 %v4919, %v4903
        %v5288 = vpack.c.b16 %v4920, %v4904
        %v5289 = vpack.c.b16 %v4921, %v4905
        %v5290 = vpack.c.b16 %v4922, %v4906
        %v5291 = vpack.c.b16 %v4923, %v4907
        %v5292 = vpack.c.b16 %v4924, %v4908
        %v5293 = vpack.c.b16 %v4925, %v4909
        %v5294 = vpack.c.b16 %v4926, %v4910
        %v5295 = vpack.c.b16 %v4927, %v4911
        %v5296 = vpack.c.b16 %v4928, %v4912
        %v5297 = vpack.c.b16 %v4929, %v4913
        %v5298 = vpack.c.b16 %v4930, %v4914
        %v5299 = vpack.c.b16 %v4931, %v4915
        %v5300 = vpack.c.b16 %v4932, %v4916
        %v5301 = vpack.c.b16 %v4933, %v4917
        %v5302 = vpack.c.b16 %v4934, %v4918
        %v5303 = vpack.c.b16 %v4951, %v4935
        %v5304 = vpack.c.b16 %v4952, %v4936
        %v5305 = vpack.c.b16 %v4953, %v4937
        %v5306 = vpack.c.b16 %v4954, %v4938
        %v5307 = vpack.c.b16 %v4955, %v4939
        %v5308 = vpack.c.b16 %v4956, %v4940
        %v5309 = vpack.c.b16 %v4957, %v4941
        %v5310 = vpack.c.b16 %v4958, %v4942
        %v5311 = vpack.c.b16 %v4959, %v4943
        %v5312 = vpack.c.b16 %v4960, %v4944
        %v5313 = vpack.c.b16 %v4961, %v4945
        %v5314 = vpack.c.b16 %v4962, %v4946
        %v5315 = vpack.c.b16 %v4963, %v4947
        %v5316 = vpack.c.b16 %v4964, %v4948
        %v5317 = vpack.c.b16 %v4965, %v4949
        %v5318 = vpack.c.b16 %v4966, %v4950
        %v5319 = vpack.c.b16 %v4983, %v4967
        %v5320 = vpack.c.b16 %v4984, %v4968
        %v5321 = vpack.c.b16 %v4985, %v4969
        %v5322 = vpack.c.b16 %v4986, %v4970
        %v5323 = vpack.c.b16 %v4987, %v4971
        %v5324 = vpack.c.b16 %v4988, %v4972
        %v5325 = vpack.c.b16 %v4989, %v4973
        %v5326 = vpack.c.b16 %v4990, %v4974
        %v5327 = vpack.c.b16 %v4991, %v4975
        %v5328 = vpack.c.b16 %v4992, %v4976
        %v5329 = vpack.c.b16 %v4993, %v4977
        %v5330 = vpack.c.b16 %v4994, %v4978
        %v5331 = vpack.c.b16 %v4995, %v4979
        %v5332 = vpack.c.b16 %v4996, %v4980
        %v5333 = vpack.c.b16 %v4997, %v4981
        %v5334 = vpack.c.b16 %v4998, %v4982
        %v5335 = vpack.c.b16 %v5015, %v4999
        %v5336 = vpack.c.b16 %v5016, %v5000
        %v5337 = vpack.c.b16 %v5017, %v5001
        %v5338 = vpack.c.b16 %v5018, %v5002
        %v5339 = vpack.c.b16 %v5019, %v5003
        %v5340 = vpack.c.b16 %v5020, %v5004
        %v5341 = vpack.c.b16 %v5021, %v5005
        %v5342 = vpack.c.b16 %v5022, %v5006
        %v5343 = vpack.c.b16 %v5023, %v5007
        %v5344 = vpack.c.b16 %v5024, %v5008
        %v5345 = vpack.c.b16 %v5025, %v5009
        %v5346 = vpack.c.b16 %v5026, %v5010
        %v5347 = vpack.c.b16 %v5027, %v5011
        %v5348 = vpack.c.b16 %v5028, %v5012
        %v5349 = vpack.c.b16 %v5029, %v5013
        %v5350 = vpack.c.b16 %v5030, %v5014
        %v5351 = vpack.c.b16 %v5047, %v5031
        %v5352 = vpack.c.b16 %v5048, %v5032
        %v5353 = vpack.c.b16 %v5049, %v5033
        %v5354 = vpack.c.b16 %v5050, %v5034
        %v5355 = vpack.c.b16 %v5051, %v5035
        %v5356 = vpack.c.b16 %v5052, %v5036
        %v5357 = vpack.c.b16 %v5053, %v5037
        %v5358 = vpack.c.b16 %v5054, %v5038
        %v5359 = vpack.c.b16 %v5055, %v5039
        %v5360 = vpack.c.b16 %v5056, %v5040
        %v5361 = vpack.c.b16 %v5057, %v5041
        %v5362 = vpack.c.b16 %v5058, %v5042
        %v5363 = vpack.c.b16 %v5059, %v5043
        %v5364 = vpack.c.b16 %v5060, %v5044
        %v5365 = vpack.c.b16 %v5061, %v5045
        %v5366 = vpack.c.b16 %v5062, %v5046
        %v5367 = vpack.c.b16 %v5079, %v5063
        %v5368 = vpack.c.b16 %v5080, %v5064
        %v5369 = vpack.c.b16 %v5081, %v5065
        %v5370 = vpack.c.b16 %v5082, %v5066
        %v5371 = vpack.c.b16 %v5083, %v5067
        %v5372 = vpack.c.b16 %v5084, %v5068
        %v5373 = vpack.c.b16 %v5085, %v5069
        %v5374 = vpack.c.b16 %v5086, %v5070
        %v5375 = vpack.c.b16 %v5087, %v5071
        %v5376 = vpack.c.b16 %v5088, %v5072
        %v5377 = vpack.c.b16 %v5089, %v5073
        %v5378 = vpack.c.b16 %v5090, %v5074
        %v5379 = vpack.c.b16 %v5091, %v5075
        %v5380 = vpack.c.b16 %v5092, %v5076
        %v5381 = vpack.c.b16 %v5093, %v5077
        %v5382 = vpack.c.b16 %v5094, %v5078
        %v5383 = vpack.c.b16 %v5111, %v5095
        %v5384 = vpack.c.b16 %v5112, %v5096
        %v5385 = vpack.c.b16 %v5113, %v5097
        %v5386 = vpack.c.b16 %v5114, %v5098
        %v5387 = vpack.c.b16 %v5115, %v5099
        %v5388 = vpack.c.b16 %v5116, %v5100
        %v5389 = vpack.c.b16 %v5117, %v5101
        %v5390 = vpack.c.b16 %v5118, %v5102
        %v5391 = vpack.c.b16 %v5119, %v5103
        %v5392 = vpack.c.b16 %v5120, %v5104
        %v5393 = vpack.c.b16 %v5121, %v5105
        %v5394 = vpack.c.b16 %v5122, %v5106
        %v5395 = vpack.c.b16 %v5123, %v5107
        %v5396 = vpack.c.b16 %v5124, %v5108
        %v5397 = vpack.c.b16 %v5125, %v5109
        %v5398 = vpack.c.b16 %v5126, %v5110
        %v5399 = vpack.c.b16 %v5143, %v5127
        %v5400 = vpack.c.b16 %v5144, %v5128
        %v5401 = vpack.c.b16 %v5145, %v5129
        %v5402 = vpack.c.b16 %v5146, %v5130
        %v5403 = vpack.c.b16 %v5147, %v5131
        %v5404 = vpack.c.b16 %v5148, %v5132
        %v5405 = vpack.c.b16 %v5149, %v5133
        %v5406 = vpack.c.b16 %v5150, %v5134
        %v5407 = vpack.c.b16 %v5151, %v5135
        %v5408 = vpack.c.b16 %v5152, %v5136
        %v5409 = vpack.c.b16 %v5153, %v5137
        %v5410 = vpack.c.b16 %v5154, %v5138
        %v5411 = vpack.c.b16 %v5155, %v5139
        %v5412 = vpack.c.b16 %v5156, %v5140
        %v5413 = vpack.c.b16 %v5157, %v5141
        %v5414 = vpack.c.b16 %v5158, %v5142
        %5671 = vmatprep.subr.bf16.mxu0 %v5272
        %5672 = vmatpush1.bf16.msra.mxu0 %v5271
        %5673 = vmatprep.subr.bf16.mxu0 %v5256
        %5674 = vmatpush1.bf16.msra.mxu0 %v5255
        %5675 = vmatprep.subr.bf16.mxu0 %v5240
        %5676 = vmatpush1.bf16.msra.mxu0 %v5239
        %5677 = vmatprep.subr.bf16.mxu0 %v5224
        %5678 = vmatpush1.bf16.msra.mxu0 %v5223
        %5679 = vmatprep.subr.bf16.mxu0 %v5208
        %5680 = vmatpush1.bf16.msra.mxu0 %v5207
        %5681 = vmatprep.subr.bf16.mxu0 %v5192
        %5682 = vmatpush1.bf16.msra.mxu0 %v5191
        %5683 = vmatprep.subr.bf16.mxu0 %v5176
        %5684 = vmatpush1.bf16.msra.mxu0 %v5175
        %5685 = vmatprep.subr.bf16.mxu0 %v5160
        %5686 = vmatpush1.bf16.msra.mxu0 %v5159
        %5687 = vmatprep.subr.bf16.mxu0 %v5400
        %5688 = vmatpush2.bf16.msra.mxu0 %v5399
        %5689 = vmatprep.subr.bf16.mxu0 %v5384
        %5690 = vmatpush2.bf16.msra.mxu0 %v5383
        %5691 = vmatprep.subr.bf16.mxu0 %v5368
        %5692 = vmatpush2.bf16.msra.mxu0 %v5367
        %5693 = vmatprep.subr.bf16.mxu0 %v5352
        %5694 = vmatpush2.bf16.msra.mxu0 %v5351
        %5695 = vmatprep.subr.bf16.mxu0 %v5336
        %5696 = vmatpush2.bf16.msra.mxu0 %v5335
        %5697 = vmatprep.subr.bf16.mxu0 %v5320
        %5698 = vmatpush2.bf16.msra.mxu0 %v5319
        %5699 = vmatprep.subr.bf16.mxu0 %v5304
        %5700 = vmatpush2.bf16.msra.mxu0 %v5303
        %5701 = vmatprep.subr.bf16.mxu0 %v5288
        %5702 = vmatpush2.bf16.msra.mxu0 %v5287
        %5703 = vmatprep.mubr.bf16.mxu0 %v4388
        %5704 = vmatmul.mubr.bf16.gmra.mxu0 %v4387
        %v5705 = vpop.f32.mrf.mxu0
        %v5706 = vadd.f32 0.0, %v5705
        %v5707 = vpop.f32.mrf.mxu0
        %v5708 = vadd.f32 0.0, %v5707
        %v5709 = vpop.f32.mrf.mxu0
        %v5710 = vpop.f32.mrf.mxu0
        %5711 = vdwg.mxu0
        %5712 = vmatprep.subr.bf16.mxu0 %v5274
        %5713 = vmatpush1.bf16.msra.mxu0 %v5273
        %5714 = vmatprep.subr.bf16.mxu0 %v5258
        %5715 = vmatpush1.bf16.msra.mxu0 %v5257
        %5716 = vmatprep.subr.bf16.mxu0 %v5242
        %5717 = vmatpush1.bf16.msra.mxu0 %v5241
        %5718 = vmatprep.subr.bf16.mxu0 %v5226
        %5719 = vmatpush1.bf16.msra.mxu0 %v5225
        %5720 = vmatprep.subr.bf16.mxu0 %v5210
        %5721 = vmatpush1.bf16.msra.mxu0 %v5209
        %5722 = vmatprep.subr.bf16.mxu0 %v5194
        %5723 = vmatpush1.bf16.msra.mxu0 %v5193
        %5724 = vmatprep.subr.bf16.mxu0 %v5178
        %5725 = vmatpush1.bf16.msra.mxu0 %v5177
        %5726 = vmatprep.subr.bf16.mxu0 %v5162
        %5727 = vmatpush1.bf16.msra.mxu0 %v5161
        %5728 = vmatprep.subr.bf16.mxu0 %v5402
        %5729 = vmatpush2.bf16.msra.mxu0 %v5401
        %5730 = vmatprep.subr.bf16.mxu0 %v5386
        %5731 = vmatpush2.bf16.msra.mxu0 %v5385
        %5732 = vmatprep.subr.bf16.mxu0 %v5370
        %5733 = vmatpush2.bf16.msra.mxu0 %v5369
        %5734 = vmatprep.subr.bf16.mxu0 %v5354
        %5735 = vmatpush2.bf16.msra.mxu0 %v5353
        %5736 = vmatprep.subr.bf16.mxu0 %v5338
        %5737 = vmatpush2.bf16.msra.mxu0 %v5337
        %5738 = vmatprep.subr.bf16.mxu0 %v5322
        %5739 = vmatpush2.bf16.msra.mxu0 %v5321
        %5740 = vmatprep.subr.bf16.mxu0 %v5306
        %5741 = vmatpush2.bf16.msra.mxu0 %v5305
        %5742 = vmatprep.subr.bf16.mxu0 %v5290
        %5743 = vmatpush2.bf16.msra.mxu0 %v5289
        %5744 = vmatprep.mubr.bf16.mxu0 %v4388
        %5745 = vmatmul.mubr.bf16.gmra.mxu0 %v4387
        %v5746 = vpop.f32.mrf.mxu0
        %v5747 = vadd.f32 0.0, %v5746
        %v5748 = vpop.f32.mrf.mxu0
        %v5749 = vadd.f32 0.0, %v5748
        %v5750 = vpop.f32.mrf.mxu0
        %v5751 = vpop.f32.mrf.mxu0
        %5752 = vdwg.mxu0
        %5753 = vmatprep.subr.bf16.mxu0 %v5276
        %5754 = vmatpush1.bf16.msra.mxu0 %v5275
        %5755 = vmatprep.subr.bf16.mxu0 %v5260
        %5756 = vmatpush1.bf16.msra.mxu0 %v5259
        %5757 = vmatprep.subr.bf16.mxu0 %v5244
        %5758 = vmatpush1.bf16.msra.mxu0 %v5243
        %5759 = vmatprep.subr.bf16.mxu0 %v5228
        %5760 = vmatpush1.bf16.msra.mxu0 %v5227
        %5761 = vmatprep.subr.bf16.mxu0 %v5212
        %5762 = vmatpush1.bf16.msra.mxu0 %v5211
        %5763 = vmatprep.subr.bf16.mxu0 %v5196
        %5764 = vmatpush1.bf16.msra.mxu0 %v5195
        %5765 = vmatprep.subr.bf16.mxu0 %v5180
        %5766 = vmatpush1.bf16.msra.mxu0 %v5179
        %5767 = vmatprep.subr.bf16.mxu0 %v5164
        %5768 = vmatpush1.bf16.msra.mxu0 %v5163
        %5769 = vmatprep.subr.bf16.mxu0 %v5404
        %5770 = vmatpush2.bf16.msra.mxu0 %v5403
        %5771 = vmatprep.subr.bf16.mxu0 %v5388
        %5772 = vmatpush2.bf16.msra.mxu0 %v5387
        %5773 = vmatprep.subr.bf16.mxu0 %v5372
        %5774 = vmatpush2.bf16.msra.mxu0 %v5371
        %5775 = vmatprep.subr.bf16.mxu0 %v5356
        %5776 = vmatpush2.bf16.msra.mxu0 %v5355
        %5777 = vmatprep.subr.bf16.mxu0 %v5340
        %5778 = vmatpush2.bf16.msra.mxu0 %v5339
        %5779 = vmatprep.subr.bf16.mxu0 %v5324
        %5780 = vmatpush2.bf16.msra.mxu0 %v5323
        %5781 = vmatprep.subr.bf16.mxu0 %v5308
        %5782 = vmatpush2.bf16.msra.mxu0 %v5307
        %5783 = vmatprep.subr.bf16.mxu0 %v5292
        %5784 = vmatpush2.bf16.msra.mxu0 %v5291
        %5785 = vmatprep.mubr.bf16.mxu0 %v4388
        %5786 = vmatmul.mubr.bf16.gmra.mxu0 %v4387
        %v5787 = vpop.f32.mrf.mxu0
        %v5788 = vadd.f32 0.0, %v5787
        %v5789 = vpop.f32.mrf.mxu0
        %v5790 = vadd.f32 0.0, %v5789
        %v5791 = vpop.f32.mrf.mxu0
        %v5792 = vpop.f32.mrf.mxu0
        %5793 = vdwg.mxu0
        %5794 = vmatprep.subr.bf16.mxu0 %v5278
        %5795 = vmatpush1.bf16.msra.mxu0 %v5277
        %5796 = vmatprep.subr.bf16.mxu0 %v5262
        %5797 = vmatpush1.bf16.msra.mxu0 %v5261
        %5798 = vmatprep.subr.bf16.mxu0 %v5246
        %5799 = vmatpush1.bf16.msra.mxu0 %v5245
        %5800 = vmatprep.subr.bf16.mxu0 %v5230
        %5801 = vmatpush1.bf16.msra.mxu0 %v5229
        %5802 = vmatprep.subr.bf16.mxu0 %v5214
        %5803 = vmatpush1.bf16.msra.mxu0 %v5213
        %5804 = vmatprep.subr.bf16.mxu0 %v5198
        %5805 = vmatpush1.bf16.msra.mxu0 %v5197
        %5806 = vmatprep.subr.bf16.mxu0 %v5182
        %5807 = vmatpush1.bf16.msra.mxu0 %v5181
        %5808 = vmatprep.subr.bf16.mxu0 %v5166
        %5809 = vmatpush1.bf16.msra.mxu0 %v5165
        %5810 = vmatprep.subr.bf16.mxu0 %v5406
        %5811 = vmatpush2.bf16.msra.mxu0 %v5405
        %5812 = vmatprep.subr.bf16.mxu0 %v5390
        %5813 = vmatpush2.bf16.msra.mxu0 %v5389
        %5814 = vmatprep.subr.bf16.mxu0 %v5374
        %5815 = vmatpush2.bf16.msra.mxu0 %v5373
        %5816 = vmatprep.subr.bf16.mxu0 %v5358
        %5817 = vmatpush2.bf16.msra.mxu0 %v5357
        %5818 = vmatprep.subr.bf16.mxu0 %v5342
        %5819 = vmatpush2.bf16.msra.mxu0 %v5341
        %5820 = vmatprep.subr.bf16.mxu0 %v5326
        %5821 = vmatpush2.bf16.msra.mxu0 %v5325
        %5822 = vmatprep.subr.bf16.mxu0 %v5310
        %5823 = vmatpush2.bf16.msra.mxu0 %v5309
        %5824 = vmatprep.subr.bf16.mxu0 %v5294
        %5825 = vmatpush2.bf16.msra.mxu0 %v5293
        %5826 = vmatprep.mubr.bf16.mxu0 %v4388
        %5827 = vmatmul.mubr.bf16.gmra.mxu0 %v4387
        %v5828 = vpop.f32.mrf.mxu0
        %v5829 = vadd.f32 0.0, %v5828
        %v5830 = vpop.f32.mrf.mxu0
        %v5831 = vadd.f32 0.0, %v5830
        %v5832 = vpop.f32.mrf.mxu0
        %v5833 = vpop.f32.mrf.mxu0
        %5834 = vdwg.mxu0
        %5835 = vmatprep.subr.bf16.mxu0 %v5280
        %5836 = vmatpush1.bf16.msra.mxu0 %v5279
        %5837 = vmatprep.subr.bf16.mxu0 %v5264
        %5838 = vmatpush1.bf16.msra.mxu0 %v5263
        %5839 = vmatprep.subr.bf16.mxu0 %v5248
        %5840 = vmatpush1.bf16.msra.mxu0 %v5247
        %5841 = vmatprep.subr.bf16.mxu0 %v5232
        %5842 = vmatpush1.bf16.msra.mxu0 %v5231
        %5843 = vmatprep.subr.bf16.mxu0 %v5216
        %5844 = vmatpush1.bf16.msra.mxu0 %v5215
        %5845 = vmatprep.subr.bf16.mxu0 %v5200
        %5846 = vmatpush1.bf16.msra.mxu0 %v5199
        %5847 = vmatprep.subr.bf16.mxu0 %v5184
        %5848 = vmatpush1.bf16.msra.mxu0 %v5183
        %5849 = vmatprep.subr.bf16.mxu0 %v5168
        %5850 = vmatpush1.bf16.msra.mxu0 %v5167
        %5851 = vmatprep.subr.bf16.mxu0 %v5408
        %5852 = vmatpush2.bf16.msra.mxu0 %v5407
        %5853 = vmatprep.subr.bf16.mxu0 %v5392
        %5854 = vmatpush2.bf16.msra.mxu0 %v5391
        %5855 = vmatprep.subr.bf16.mxu0 %v5376
        %5856 = vmatpush2.bf16.msra.mxu0 %v5375
        %5857 = vmatprep.subr.bf16.mxu0 %v5360
        %5858 = vmatpush2.bf16.msra.mxu0 %v5359
        %5859 = vmatprep.subr.bf16.mxu0 %v5344
        %5860 = vmatpush2.bf16.msra.mxu0 %v5343
        %5861 = vmatprep.subr.bf16.mxu0 %v5328
        %5862 = vmatpush2.bf16.msra.mxu0 %v5327
        %5863 = vmatprep.subr.bf16.mxu0 %v5312
        %5864 = vmatpush2.bf16.msra.mxu0 %v5311
        %5865 = vmatprep.subr.bf16.mxu0 %v5296
        %5866 = vmatpush2.bf16.msra.mxu0 %v5295
        %5867 = vmatprep.mubr.bf16.mxu0 %v4388
        %5868 = vmatmul.mubr.bf16.gmra.mxu0 %v4387
        %v5869 = vpop.f32.mrf.mxu0
        %v5870 = vadd.f32 0.0, %v5869
        %v5871 = vpop.f32.mrf.mxu0
        %v5872 = vadd.f32 0.0, %v5871
        %v5873 = vpop.f32.mrf.mxu0
        %v5874 = vpop.f32.mrf.mxu0
        %5875 = vdwg.mxu0
        %5876 = vmatprep.subr.bf16.mxu0 %v5282
        %5877 = vmatpush1.bf16.msra.mxu0 %v5281
        %5878 = vmatprep.subr.bf16.mxu0 %v5266
        %5879 = vmatpush1.bf16.msra.mxu0 %v5265
        %5880 = vmatprep.subr.bf16.mxu0 %v5250
        %5881 = vmatpush1.bf16.msra.mxu0 %v5249
        %5882 = vmatprep.subr.bf16.mxu0 %v5234
        %5883 = vmatpush1.bf16.msra.mxu0 %v5233
        %5884 = vmatprep.subr.bf16.mxu0 %v5218
        %5885 = vmatpush1.bf16.msra.mxu0 %v5217
        %5886 = vmatprep.subr.bf16.mxu0 %v5202
        %5887 = vmatpush1.bf16.msra.mxu0 %v5201
        %5888 = vmatprep.subr.bf16.mxu0 %v5186
        %5889 = vmatpush1.bf16.msra.mxu0 %v5185
        %5890 = vmatprep.subr.bf16.mxu0 %v5170
        %5891 = vmatpush1.bf16.msra.mxu0 %v5169
        %5892 = vmatprep.subr.bf16.mxu0 %v5410
        %5893 = vmatpush2.bf16.msra.mxu0 %v5409
        %5894 = vmatprep.subr.bf16.mxu0 %v5394
        %5895 = vmatpush2.bf16.msra.mxu0 %v5393
        %5896 = vmatprep.subr.bf16.mxu0 %v5378
        %5897 = vmatpush2.bf16.msra.mxu0 %v5377
        %5898 = vmatprep.subr.bf16.mxu0 %v5362
        %5899 = vmatpush2.bf16.msra.mxu0 %v5361
        %5900 = vmatprep.subr.bf16.mxu0 %v5346
        %5901 = vmatpush2.bf16.msra.mxu0 %v5345
        %5902 = vmatprep.subr.bf16.mxu0 %v5330
        %5903 = vmatpush2.bf16.msra.mxu0 %v5329
        %5904 = vmatprep.subr.bf16.mxu0 %v5314
        %5905 = vmatpush2.bf16.msra.mxu0 %v5313
        %5906 = vmatprep.subr.bf16.mxu0 %v5298
        %5907 = vmatpush2.bf16.msra.mxu0 %v5297
        %5908 = vmatprep.mubr.bf16.mxu0 %v4388
        %5909 = vmatmul.mubr.bf16.gmra.mxu0 %v4387
        %v5910 = vpop.f32.mrf.mxu0
        %v5911 = vadd.f32 0.0, %v5910
        %v5912 = vpop.f32.mrf.mxu0
        %v5913 = vadd.f32 0.0, %v5912
        %v5914 = vpop.f32.mrf.mxu0
        %v5915 = vpop.f32.mrf.mxu0
        %5916 = vdwg.mxu0
        %5917 = vmatprep.subr.bf16.mxu0 %v5284
        %5918 = vmatpush1.bf16.msra.mxu0 %v5283
        %5919 = vmatprep.subr.bf16.mxu0 %v5268
        %5920 = vmatpush1.bf16.msra.mxu0 %v5267
        %5921 = vmatprep.subr.bf16.mxu0 %v5252
        %5922 = vmatpush1.bf16.msra.mxu0 %v5251
        %5923 = vmatprep.subr.bf16.mxu0 %v5236
        %5924 = vmatpush1.bf16.msra.mxu0 %v5235
        %5925 = vmatprep.subr.bf16.mxu0 %v5220
        %5926 = vmatpush1.bf16.msra.mxu0 %v5219
        %5927 = vmatprep.subr.bf16.mxu0 %v5204
        %5928 = vmatpush1.bf16.msra.mxu0 %v5203
        %5929 = vmatprep.subr.bf16.mxu0 %v5188
        %5930 = vmatpush1.bf16.msra.mxu0 %v5187
        %5931 = vmatprep.subr.bf16.mxu0 %v5172
        %5932 = vmatpush1.bf16.msra.mxu0 %v5171
        %5933 = vmatprep.subr.bf16.mxu0 %v5412
        %5934 = vmatpush2.bf16.msra.mxu0 %v5411
        %5935 = vmatprep.subr.bf16.mxu0 %v5396
        %5936 = vmatpush2.bf16.msra.mxu0 %v5395
        %5937 = vmatprep.subr.bf16.mxu0 %v5380
        %5938 = vmatpush2.bf16.msra.mxu0 %v5379
        %5939 = vmatprep.subr.bf16.mxu0 %v5364
        %5940 = vmatpush2.bf16.msra.mxu0 %v5363
        %5941 = vmatprep.subr.bf16.mxu0 %v5348
        %5942 = vmatpush2.bf16.msra.mxu0 %v5347
        %5943 = vmatprep.subr.bf16.mxu0 %v5332
        %5944 = vmatpush2.bf16.msra.mxu0 %v5331
        %5945 = vmatprep.subr.bf16.mxu0 %v5316
        %5946 = vmatpush2.bf16.msra.mxu0 %v5315
        %5947 = vmatprep.subr.bf16.mxu0 %v5300
        %5948 = vmatpush2.bf16.msra.mxu0 %v5299
        %5949 = vmatprep.mubr.bf16.mxu0 %v4388
        %5950 = vmatmul.mubr.bf16.gmra.mxu0 %v4387
        %v5951 = vpop.f32.mrf.mxu0
        %v5952 = vadd.f32 0.0, %v5951
        %v5953 = vpop.f32.mrf.mxu0
        %v5954 = vadd.f32 0.0, %v5953
        %v5955 = vpop.f32.mrf.mxu0
        %v5956 = vpop.f32.mrf.mxu0
        %5957 = vdwg.mxu0
        %5958 = vmatprep.subr.bf16.mxu0 %v5286
        %5959 = vmatpush1.bf16.msra.mxu0 %v5285
        %5960 = vmatprep.subr.bf16.mxu0 %v5270
        %5961 = vmatpush1.bf16.msra.mxu0 %v5269
        %5962 = vmatprep.subr.bf16.mxu0 %v5254
        %5963 = vmatpush1.bf16.msra.mxu0 %v5253
        %5964 = vmatprep.subr.bf16.mxu0 %v5238
        %5965 = vmatpush1.bf16.msra.mxu0 %v5237
        %5966 = vmatprep.subr.bf16.mxu0 %v5222
        %5967 = vmatpush1.bf16.msra.mxu0 %v5221
        %5968 = vmatprep.subr.bf16.mxu0 %v5206
        %5969 = vmatpush1.bf16.msra.mxu0 %v5205
        %5970 = vmatprep.subr.bf16.mxu0 %v5190
        %5971 = vmatpush1.bf16.msra.mxu0 %v5189
        %5972 = vmatprep.subr.bf16.mxu0 %v5174
        %5973 = vmatpush1.bf16.msra.mxu0 %v5173
        %5974 = vmatprep.subr.bf16.mxu0 %v5414
        %5975 = vmatpush2.bf16.msra.mxu0 %v5413
        %5976 = vmatprep.subr.bf16.mxu0 %v5398
        %5977 = vmatpush2.bf16.msra.mxu0 %v5397
        %5978 = vmatprep.subr.bf16.mxu0 %v5382
        %5979 = vmatpush2.bf16.msra.mxu0 %v5381
        %5980 = vmatprep.subr.bf16.mxu0 %v5366
        %5981 = vmatpush2.bf16.msra.mxu0 %v5365
        %5982 = vmatprep.subr.bf16.mxu0 %v5350
        %5983 = vmatpush2.bf16.msra.mxu0 %v5349
        %5984 = vmatprep.subr.bf16.mxu0 %v5334
        %5985 = vmatpush2.bf16.msra.mxu0 %v5333
        %5986 = vmatprep.subr.bf16.mxu0 %v5318
        %5987 = vmatpush2.bf16.msra.mxu0 %v5317
        %5988 = vmatprep.subr.bf16.mxu0 %v5302
        %5989 = vmatpush2.bf16.msra.mxu0 %v5301
        %5990 = vmatprep.mubr.bf16.mxu0 %v4388
        %5991 = vmatmul.mubr.bf16.gmra.mxu0 %v4387
        %v5992 = vpop.f32.mrf.mxu0
        %v5993 = vadd.f32 0.0, %v5992
        %v5994 = vpop.f32.mrf.mxu0
        %v5995 = vadd.f32 0.0, %v5994
        %v5996 = vpop.f32.mrf.mxu0
        %v5997 = vpop.f32.mrf.mxu0
        %5998 = vdwg.mxu0
        %v6015 = vcombine.low %v5706, %v5708
        %v6016 = vcombine.low %v5747, %v5749
        %v6017 = vcombine.low %v5788, %v5790
        %v6018 = vcombine.low %v5829, %v5831
        %v6019 = vcombine.low %v5870, %v5872
        %v6020 = vcombine.low %v5911, %v5913
        %v6021 = vcombine.low %v5952, %v5954
        %v6022 = vcombine.low %v5993, %v5995
        %6031 = vst [vmem:[%s959] sm:$0x77] %v6015
        %6032 = vst [vmem:[%s959 + $0x8] sm:$0x77] %v6016
        %6033 = vst [vmem:[%s959 + $0x10] sm:$0x77] %v6017
        %6034 = vst [vmem:[%s959 + $0x18] sm:$0x77] %v6018
        %6035 = vst [vmem:[%s959 + $0x20] sm:$0x77] %v6019
        %6036 = vst [vmem:[%s959 + $0x28] sm:$0x77] %v6020
        %6037 = vst [vmem:[%s959 + $0x30] sm:$0x77] %v6021
        %6038 = vst [vmem:[%s959 + $0x38] sm:$0x77] %v6022
        %s6039 = smul.u32 16, %s27
        %p6040 = scmp.lt.s32.totalorder %s26, 1
        %s6041 = scalar_select %p6040, %s26, 1
        %p6042 = scmp.lt.s32.totalorder %s6039, 31
        %s6043 = scalar_select %p6042, %s6039, 31
        %s6044 = smul.addr %s6041, 32
        %s6045 = sadd.s32 %s6043, %s6044
        %s6046 = smul.addr %s6045, 4
        %s6047 = scalar_lea.vmem %s11, %s6046
        // Predicated region
        $region92: #{change_detection_forward.1} parent=82 // pred_check
          %p6048 = pneg %p295
        $region93: #{change_detection_forward.1} parent=82 // pred_check_branch
          %6050 = sbr.rel (%p6048) target = $region95
        $region94: #{change_detection_forward.1} parent=82 // pred_region
          %s6051 = smul.u32 16, %s27
        $region95: #{change_detection_forward.1} parent=82 // pred_fallthru
          _
      $region83: #{change_detection_forward.1} parent=5 // pred_fallthru
        _
      %p6052 = scmp.le.s32.totalorder 2, %s17
      // Predicated region
      $region96: #{change_detection_forward.1} parent=5 // pred_check
        %p6053 = pneg %p6052
      $region97: #{change_detection_forward.1} parent=5 // pred_check_branch
        %6055 = sbr.rel (%p6053) target = $region99
      $region98: #{change_detection_forward.1} parent=5 // pred_region
        %s6056 = ssub.s32 %s17, 2
        // Predicated region
        $region100: #{change_detection_forward.1} parent=98 // pred_check
          %p6057 = pneg %p301
        $region101: #{change_detection_forward.1} parent=98 // pred_check_branch
          %6059 = sbr.rel (%p6057) target = $region103
        $region102: #{change_detection_forward.1} parent=98 // pred_region
          %s6060 = smul.u32 16, %s29
          %p6061 = scmp.lt.s32.totalorder %s28, 1
          %s6062 = scalar_select %p6061, %s28, 1
          %p6063 = scmp.lt.s32.totalorder %s6060, 31
          %s6064 = scalar_select %p6063, %s6060, 31
          %s6065 = smul.addr %s6062, 32
          %s6066 = sadd.s32 %s6064, %s6065
          %s6067 = smul.addr %s6066, 4
          %s6068 = scalar_lea.vmem %s11, %s6067
        $region103: #{change_detection_forward.1} parent=98 // pred_fallthru
          _
      $region99: #{change_detection_forward.1} parent=5 // pred_fallthru
        _
    $region6: #{change_detection_forward.1} parent=1 // loop_footer
      %s21 = sadd.s32 1, %s17
    $region7: #{change_detection_forward.1} parent=1 // loop_footer_branch
      %16 = sbr.rel target = $region3
    $region8: #{change_detection_forward.1} parent=1 // loop_exit
      _

</llo_original>
